<compile_context>
chip_gen: v7x
topology: tpu7x:2x2x1
jax: 0.10.0
libtpu: 0.0.40
codegen_flags: <defaults>
</compile_context>

<pallas_src>
import functools

import numpy as np
import jax
import jax.numpy as jnp
from jax import lax
from jax.experimental import pallas as pl
from jax.experimental.pallas import tpu as pltpu


# ---------------------------------------------------------------------------
# Kernel
# ---------------------------------------------------------------------------
def _sre_block_kernel(x_ref, w1_ref, w2_ref, b1_ref, b2_ref, m_ref, o_ref,
                      *, H, W, K):
    """One grid step = Nb images, layout (Nb, C, flat_padded_spatial).

    With P = K//2, Wp = W + 2P, Hp = H + 2P, marg = P + 1 (margin rows per
    nesting level so flat tap shifts never leave the allocation):

      x_ref  : (Nb, C, L0) f32   zero-padded input, L0 = (Hp + 4*marg) * Wp;
                                 also the residual identity source
      w1_ref : (C, K*K*C)  f32   conv1 weight (BN1 scale folded); column
                                 k = (kh*K + kw)*C + ci holds w[kh,kw,ci,:]
      w2_ref : (C, K*K*C)  f32   conv2 weight (BN2 scale folded)
      b1_ref : (C, 1)      f32   BN1 bias
      b2_ref : (C, 1)      f32   BN2 bias
      m_ref  : (1, L1)     f32   1.0 exactly at real-data pixels of frame1,
                                 L1 = (Hp + 2*marg) * Wp
      o_ref  : (Nb, C, Mp) f32   output on the logical padded frame,
                                 Mp = Hp * Wp (wrapper strips the border)
    """
    Nb, C, _ = x_ref.shape
    P = K // 2
    Wp = W + 2 * P
    Hp = H + 2 * P
    Mp = Hp * Wp
    marg = P + 1
    F = marg * Wp                        # offset of the nested frame
    L1 = (Hp + 2 * marg) * Wp

    x = x_ref[...]                       # (Nb, C, L0)
    w1 = w1_ref[...]                     # (C, K*K*C)
    w2 = w2_ref[...]

    def conv(src, w, out_len):
        # Direct VPU conv: out[n, :, m] += w[:, t*C+ci] * src[n, ci, F+m+d_t].
        # Each tap is one static lane-shifted slice; channel mixing is C
        # broadcast multiply-adds per tap (K*K*C = 36 total per conv).
        acc = jnp.zeros((Nb, C, out_len), jnp.float32)
        for kh in range(K):
            for kw in range(K):
                s = F + (kh - P) * Wp + (kw - P)       # static flat shift
                tap = src[:, :, s:s + out_len]          # (Nb, C, out_len)
                k0 = (kh * K + kw) * C
                for ci in range(C):
                    acc = acc + (w[:, k0 + ci:k0 + ci + 1]   # (C, 1)
                                 * tap[:, ci:ci + 1, :])     # (Nb, 1, out_len)
        return acc

    # conv1 -> bn1 (scale folded into w1) -> relu; then zero everything that is
    # not a real data pixel so conv2 sees correct zero padding in its reads.
    y1 = jnp.maximum(conv(x, w1, L1) + b1_ref[...], 0.0) * m_ref[...]
    # conv2 -> bn2 -> + identity -> relu, on the logical padded frame.
    y2 = conv(y1, w2, Mp) + b2_ref[...]
    identity = x[:, :, 2 * F:2 * F + Mp]
    o_ref[...] = jnp.maximum(y2 + identity, 0.0).astype(o_ref.dtype)


# ---------------------------------------------------------------------------
# Wrapper
# ---------------------------------------------------------------------------
def sre_basic_block(x_nchw, w1_hwio, w2_hwio, s1, b1, s2, b2,
                    *, images_per_step=None):
    """SREBasicBlock forward (eval-mode BN as per-channel scale/bias).

    x_nchw: (N, C, H, W) float32.  stride == 1, downsample is None
    (inplanes == planes).  Returns (N, C, H, W) float32.
    """
    N, C, H, W = x_nchw.shape
    K = w1_hwio.shape[0]
    assert K % 2 == 1, "odd kernel size expected (padding = K // 2)"
    assert w1_hwio.shape == (K, K, C, C) and w2_hwio.shape == (K, K, C, C), \
        "residual path requires inplanes == planes (downsample=None)"

    P = K // 2
    Wp, Hp = W + 2 * P, H + 2 * P
    Mp = Hp * Wp
    marg = P + 1                               # margin rows per nesting level
    L1 = (Hp + 2 * marg) * Wp                  # frame conv1 is evaluated on
    L0 = (Hp + 4 * marg) * Wp                  # input frame fed to the kernel

    # --- grid / per-step sub-batch --------------------------------------
    if images_per_step is None:
        # >= 2 "parallel" grid steps (when N allows) keeps both v7x TCs busy;
        # otherwise collapse to one step to amortize per-step overhead.
        images_per_step = N if (N < 2 or N % 2 != 0) else N // 2
        while images_per_step > 8 and images_per_step % 2 == 0:
            images_per_step //= 2              # keep register/VMEM pressure modest
    assert N % images_per_step == 0
    steps = N // images_per_step

    # --- parameters ------------------------------------------------------
    def fold(w_hwio, scale):
        # BN scale folded into the conv weight, laid out (Cout, K*K*Cin) with
        # column order k = (kh*K + kw)*Cin + ci (matches the kernel tap loop).
        w = w_hwio.astype(jnp.float32) * scale.astype(jnp.float32)[None, None, None, :]
        return jnp.transpose(w, (3, 0, 1, 2)).reshape(C, K * K * C)

    w1_f = fold(w1_hwio, s1)
    w2_f = fold(w2_hwio, s2)
    b1c = b1.reshape(C, 1).astype(jnp.float32)
    b2c = b2.reshape(C, 1).astype(jnp.float32)

    # Interior mask over frame1: 1.0 exactly at real-data pixels (host constant).
    H1 = Hp + 2 * marg
    rr = np.arange(H1).reshape(H1, 1)
    cc = np.arange(Wp).reshape(1, Wp)
    interior = ((rr >= marg + P) & (rr < marg + P + H) &
                (cc >= P) & (cc < P + W)).astype(np.float32)
    mask = jnp.asarray(interior.reshape(1, L1))

    # One zero-pad in HBM: "SAME" border (P) plus 2*marg margin rows, flattened.
    pad_r = 2 * marg + P
    x_big = jnp.pad(x_nchw.astype(jnp.float32),
                    ((0, 0), (0, 0), (pad_r, pad_r), (P, P))).reshape(N, C, L0)

    kernel = functools.partial(_sre_block_kernel, H=H, W=W, K=K)
    cost = pl.CostEstimate(
        flops=int(2 * 2 * C * C * K * K * L1 * N),       # two convs, MAC = 2 flops
        transcendentals=0,
        bytes_accessed=int(4 * N * C * (L0 + Mp) + 4 * 2 * C * C * K * K))

    out_pad = pl.pallas_call(
        kernel,
        out_shape=jax.ShapeDtypeStruct((N, C, Mp), jnp.float32),
        grid_spec=pltpu.PrefetchScalarGridSpec(
            num_scalar_prefetch=0,
            grid=(steps,),
            in_specs=[
                pl.BlockSpec((images_per_step, C, L0), lambda n: (n, 0, 0)),  # x
                pl.BlockSpec((C, K * K * C), lambda n: (0, 0)),               # w1
                pl.BlockSpec((C, K * K * C), lambda n: (0, 0)),               # w2
                pl.BlockSpec((C, 1), lambda n: (0, 0)),                       # bn1 bias
                pl.BlockSpec((C, 1), lambda n: (0, 0)),                       # bn2 bias
                pl.BlockSpec((1, L1), lambda n: (0, 0)),                      # interior mask
            ],
            out_specs=pl.BlockSpec((images_per_step, C, Mp), lambda n: (n, 0, 0)),
        ),
        compiler_params=pltpu.CompilerParams(
            dimension_semantics=("parallel",)),
        cost_estimate=cost,
    )(x_big, w1_f, w2_f, b1c, b2c, mask)

    # Strip the padded border: logical frame -> (N, C, H, W).
    return out_pad.reshape(N, C, Hp, Wp)[:, :, P:P + H, P:P + W]


# ---------------------------------------------------------------------------
# Deterministic synthetic parameters + pure-JAX reference
# ---------------------------------------------------------------------------
def make_sre_weight(key, k, cin, cout):
    """SRE-style kernel: taps on the same concentric square ring share a value."""
    n_rings = k // 2 + 1
    ring_params = 0.1 * jax.random.normal(key, (n_rings, cin, cout), jnp.float32)
    c = k // 2
    rows = []
    for kh in range(k):
        cols = []
        for kw in range(k):
            ring = max(abs(kh - c), abs(kw - c))
            cols.append(ring_params[ring])
        rows.append(jnp.stack(cols, axis=0))
    return jnp.stack(rows, axis=0)        # (k, k, cin, cout)  HWIO


def make_bn_params(key, c, eps=1e-5):
    """Eval-mode BatchNorm folded into per-channel scale & bias."""
    k1, k2, k3, k4 = jax.random.split(key, 4)
    gamma = 1.0 + 0.1 * jax.random.normal(k1, (c,), jnp.float32)
    beta = 0.1 * jax.random.normal(k2, (c,), jnp.float32)
    mean = 0.1 * jax.random.normal(k3, (c,), jnp.float32)
    var = jnp.abs(1.0 + 0.1 * jax.random.normal(k4, (c,), jnp.float32))
    scale = gamma / jnp.sqrt(var + eps)
    bias = beta - mean * scale
    return scale, bias


def reference_forward(x_nchw, w1, w2, s1, b1, s2, b2):
    """Pure-JAX/XLA reference, f32 with HIGHEST conv precision."""
    dn = ("NCHW", "HWIO", "NCHW")
    w1f = w1 * s1[None, None, None, :]
    w2f = w2 * s2[None, None, None, :]
    y = lax.conv_general_dilated(x_nchw, w1f, (1, 1), "SAME",
                                 dimension_numbers=dn,
                                 precision=lax.Precision.HIGHEST)
    y = jnp.maximum(y + b1.reshape(1, -1, 1, 1), 0.0)
    y = lax.conv_general_dilated(y, w2f, (1, 1), "SAME",
                                 dimension_numbers=dn,
                                 precision=lax.Precision.HIGHEST)
    return jnp.maximum(y + b2.reshape(1, -1, 1, 1) + x_nchw, 0.0)


if __name__ == "__main__":
    key = jax.random.PRNGKey(0)
    kx, kw1, kw2, kb1, kb2 = jax.random.split(key, 5)

    N, C, H, W = 4, 4, 16, 16        # inplanes == planes == 4, stride == 1
    K = 3                            # sre_conv_size

    x = jax.random.normal(kx, (N, C, H, W), jnp.float32)
    w1 = make_sre_weight(kw1, K, C, C)
    w2 = make_sre_weight(kw2, K, C, C)
    s1, b1 = make_bn_params(kb1, C)
    s2, b2 = make_bn_params(kb2, C)

    out = sre_basic_block(x, w1, w2, s1, b1, s2, b2)   # grid=(2,), 2 images/step
    out = jax.block_until_ready(out)

    ref = reference_forward(x, w1, w2, s1, b1, s2, b2)
    assert out.shape == (N, C, H, W)
    err = float(jnp.max(jnp.abs(out - ref)))
    assert jnp.allclose(out, ref, atol=1e-3, rtol=1e-3), err

    print("KERNEL_OK")
</pallas_src>

<mosaic_0001>
module attributes {stable_mosaic.version = 11 : i64} {
  func.func @_sre_block_kernel(%arg0: i32, %arg1: memref<2x4x468xf32, #tpu.memory_space<vmem>>, %arg2: memref<4x36xf32, #tpu.memory_space<vmem>>, %arg3: memref<4x36xf32, #tpu.memory_space<vmem>>, %arg4: memref<4x1xf32, #tpu.memory_space<vmem>>, %arg5: memref<4x1xf32, #tpu.memory_space<vmem>>, %arg6: memref<1x396xf32, #tpu.memory_space<vmem>>, %arg7: memref<2x4x324xf32, #tpu.memory_space<vmem>>) attributes {dimension_semantics = [#tpu.dimension_semantics<parallel>], iteration_bounds = array<i64: 2>, scalar_prefetch = 0 : i64, scratch_operands = 0 : i64, tpu.core_type = #tpu.core_type<tc>, window_params = [{transform_indices = @transform_0, window_bounds = array<i64: 2, 4, 468>}, {pipeline_mode = #tpu.pipeline_mode<synchronous>, transform_indices = @transform_1, window_bounds = array<i64: 4, 36>}, {pipeline_mode = #tpu.pipeline_mode<synchronous>, transform_indices = @transform_2, window_bounds = array<i64: 4, 36>}, {pipeline_mode = #tpu.pipeline_mode<synchronous>, transform_indices = @transform_3, window_bounds = array<i64: 4, 1>}, {pipeline_mode = #tpu.pipeline_mode<synchronous>, transform_indices = @transform_4, window_bounds = array<i64: 4, 1>}, {pipeline_mode = #tpu.pipeline_mode<synchronous>, transform_indices = @transform_5, window_bounds = array<i64: 1, 396>}, {transform_indices = @transform_6, window_bounds = array<i64: 2, 4, 324>}]} {
    %c0 = arith.constant 0 : index
    %c0_0 = arith.constant 0 : index
    %c0_1 = arith.constant 0 : index
    %0 = vector.load %arg1[%c0, %c0_0, %c0_1] : memref<2x4x468xf32, #tpu.memory_space<vmem>>, vector<2x4x468xf32>
    %c0_2 = arith.constant 0 : index
    %c0_3 = arith.constant 0 : index
    %1 = vector.load %arg2[%c0_2, %c0_3] : memref<4x36xf32, #tpu.memory_space<vmem>>, vector<4x36xf32>
    %c0_4 = arith.constant 0 : index
    %c0_5 = arith.constant 0 : index
    %2 = vector.load %arg3[%c0_4, %c0_5] : memref<4x36xf32, #tpu.memory_space<vmem>>, vector<4x36xf32>
    %cst = arith.constant 0.000000e+00 : f32
    %3 = vector.broadcast %cst : f32 to vector<2x4x396xf32>
    %4 = vector.extract_strided_slice %0 {offsets = [0, 0, 17], sizes = [2, 4, 396], strides = [1, 1, 1]} : vector<2x4x468xf32> to vector<2x4x396xf32>
    %5 = vector.extract_strided_slice %1 {offsets = [0, 0], sizes = [4, 1], strides = [1, 1]} : vector<4x36xf32> to vector<4x1xf32>
    %6 = vector.extract_strided_slice %4 {offsets = [0, 0, 0], sizes = [2, 1, 396], strides = [1, 1, 1]} : vector<2x4x396xf32> to vector<2x1x396xf32>
    %7 = vector.shape_cast %5 : vector<4x1xf32> to vector<1x4x1xf32>
    %8 = vector.broadcast %7 : vector<1x4x1xf32> to vector<2x4x396xf32>
    %9 = vector.broadcast %6 : vector<2x1x396xf32> to vector<2x4x396xf32>
    %10 = arith.mulf %8, %9 : vector<2x4x396xf32>
    %11 = arith.addf %3, %10 : vector<2x4x396xf32>
    %12 = vector.extract_strided_slice %1 {offsets = [0, 1], sizes = [4, 1], strides = [1, 1]} : vector<4x36xf32> to vector<4x1xf32>
    %13 = vector.extract_strided_slice %4 {offsets = [0, 1, 0], sizes = [2, 1, 396], strides = [1, 1, 1]} : vector<2x4x396xf32> to vector<2x1x396xf32>
    %14 = vector.shape_cast %12 : vector<4x1xf32> to vector<1x4x1xf32>
    %15 = vector.broadcast %14 : vector<1x4x1xf32> to vector<2x4x396xf32>
    %16 = vector.broadcast %13 : vector<2x1x396xf32> to vector<2x4x396xf32>
    %17 = arith.mulf %15, %16 : vector<2x4x396xf32>
    %18 = arith.addf %11, %17 : vector<2x4x396xf32>
    %19 = vector.extract_strided_slice %1 {offsets = [0, 2], sizes = [4, 1], strides = [1, 1]} : vector<4x36xf32> to vector<4x1xf32>
    %20 = vector.extract_strided_slice %4 {offsets = [0, 2, 0], sizes = [2, 1, 396], strides = [1, 1, 1]} : vector<2x4x396xf32> to vector<2x1x396xf32>
    %21 = vector.shape_cast %19 : vector<4x1xf32> to vector<1x4x1xf32>
    %22 = vector.broadcast %21 : vector<1x4x1xf32> to vector<2x4x396xf32>
    %23 = vector.broadcast %20 : vector<2x1x396xf32> to vector<2x4x396xf32>
    %24 = arith.mulf %22, %23 : vector<2x4x396xf32>
    %25 = arith.addf %18, %24 : vector<2x4x396xf32>
    %26 = vector.extract_strided_slice %1 {offsets = [0, 3], sizes = [4, 1], strides = [1, 1]} : vector<4x36xf32> to vector<4x1xf32>
    %27 = vector.extract_strided_slice %4 {offsets = [0, 3, 0], sizes = [2, 1, 396], strides = [1, 1, 1]} : vector<2x4x396xf32> to vector<2x1x396xf32>
    %28 = vector.shape_cast %26 : vector<4x1xf32> to vector<1x4x1xf32>
    %29 = vector.broadcast %28 : vector<1x4x1xf32> to vector<2x4x396xf32>
    %30 = vector.broadcast %27 : vector<2x1x396xf32> to vector<2x4x396xf32>
    %31 = arith.mulf %29, %30 : vector<2x4x396xf32>
    %32 = arith.addf %25, %31 : vector<2x4x396xf32>
    %33 = vector.extract_strided_slice %0 {offsets = [0, 0, 18], sizes = [2, 4, 396], strides = [1, 1, 1]} : vector<2x4x468xf32> to vector<2x4x396xf32>
    %34 = vector.extract_strided_slice %1 {offsets = [0, 4], sizes = [4, 1], strides = [1, 1]} : vector<4x36xf32> to vector<4x1xf32>
    %35 = vector.extract_strided_slice %33 {offsets = [0, 0, 0], sizes = [2, 1, 396], strides = [1, 1, 1]} : vector<2x4x396xf32> to vector<2x1x396xf32>
    %36 = vector.shape_cast %34 : vector<4x1xf32> to vector<1x4x1xf32>
    %37 = vector.broadcast %36 : vector<1x4x1xf32> to vector<2x4x396xf32>
    %38 = vector.broadcast %35 : vector<2x1x396xf32> to vector<2x4x396xf32>
    %39 = arith.mulf %37, %38 : vector<2x4x396xf32>
    %40 = arith.addf %32, %39 : vector<2x4x396xf32>
    %41 = vector.extract_strided_slice %1 {offsets = [0, 5], sizes = [4, 1], strides = [1, 1]} : vector<4x36xf32> to vector<4x1xf32>
    %42 = vector.extract_strided_slice %33 {offsets = [0, 1, 0], sizes = [2, 1, 396], strides = [1, 1, 1]} : vector<2x4x396xf32> to vector<2x1x396xf32>
    %43 = vector.shape_cast %41 : vector<4x1xf32> to vector<1x4x1xf32>
    %44 = vector.broadcast %43 : vector<1x4x1xf32> to vector<2x4x396xf32>
    %45 = vector.broadcast %42 : vector<2x1x396xf32> to vector<2x4x396xf32>
    %46 = arith.mulf %44, %45 : vector<2x4x396xf32>
    %47 = arith.addf %40, %46 : vector<2x4x396xf32>
    %48 = vector.extract_strided_slice %1 {offsets = [0, 6], sizes = [4, 1], strides = [1, 1]} : vector<4x36xf32> to vector<4x1xf32>
    %49 = vector.extract_strided_slice %33 {offsets = [0, 2, 0], sizes = [2, 1, 396], strides = [1, 1, 1]} : vector<2x4x396xf32> to vector<2x1x396xf32>
    %50 = vector.shape_cast %48 : vector<4x1xf32> to vector<1x4x1xf32>
    %51 = vector.broadcast %50 : vector<1x4x1xf32> to vector<2x4x396xf32>
    %52 = vector.broadcast %49 : vector<2x1x396xf32> to vector<2x4x396xf32>
    %53 = arith.mulf %51, %52 : vector<2x4x396xf32>
    %54 = arith.addf %47, %53 : vector<2x4x396xf32>
    %55 = vector.extract_strided_slice %1 {offsets = [0, 7], sizes = [4, 1], strides = [1, 1]} : vector<4x36xf32> to vector<4x1xf32>
    %56 = vector.extract_strided_slice %33 {offsets = [0, 3, 0], sizes = [2, 1, 396], strides = [1, 1, 1]} : vector<2x4x396xf32> to vector<2x1x396xf32>
    %57 = vector.shape_cast %55 : vector<4x1xf32> to vector<1x4x1xf32>
    %58 = vector.broadcast %57 : vector<1x4x1xf32> to vector<2x4x396xf32>
    %59 = vector.broadcast %56 : vector<2x1x396xf32> to vector<2x4x396xf32>
    %60 = arith.mulf %58, %59 : vector<2x4x396xf32>
    %61 = arith.addf %54, %60 : vector<2x4x396xf32>
    %62 = vector.extract_strided_slice %0 {offsets = [0, 0, 19], sizes = [2, 4, 396], strides = [1, 1, 1]} : vector<2x4x468xf32> to vector<2x4x396xf32>
    %63 = vector.extract_strided_slice %1 {offsets = [0, 8], sizes = [4, 1], strides = [1, 1]} : vector<4x36xf32> to vector<4x1xf32>
    %64 = vector.extract_strided_slice %62 {offsets = [0, 0, 0], sizes = [2, 1, 396], strides = [1, 1, 1]} : vector<2x4x396xf32> to vector<2x1x396xf32>
    %65 = vector.shape_cast %63 : vector<4x1xf32> to vector<1x4x1xf32>
    %66 = vector.broadcast %65 : vector<1x4x1xf32> to vector<2x4x396xf32>
    %67 = vector.broadcast %64 : vector<2x1x396xf32> to vector<2x4x396xf32>
    %68 = arith.mulf %66, %67 : vector<2x4x396xf32>
    %69 = arith.addf %61, %68 : vector<2x4x396xf32>
    %70 = vector.extract_strided_slice %1 {offsets = [0, 9], sizes = [4, 1], strides = [1, 1]} : vector<4x36xf32> to vector<4x1xf32>
    %71 = vector.extract_strided_slice %62 {offsets = [0, 1, 0], sizes = [2, 1, 396], strides = [1, 1, 1]} : vector<2x4x396xf32> to vector<2x1x396xf32>
    %72 = vector.shape_cast %70 : vector<4x1xf32> to vector<1x4x1xf32>
    %73 = vector.broadcast %72 : vector<1x4x1xf32> to vector<2x4x396xf32>
    %74 = vector.broadcast %71 : vector<2x1x396xf32> to vector<2x4x396xf32>
    %75 = arith.mulf %73, %74 : vector<2x4x396xf32>
    %76 = arith.addf %69, %75 : vector<2x4x396xf32>
    %77 = vector.extract_strided_slice %1 {offsets = [0, 10], sizes = [4, 1], strides = [1, 1]} : vector<4x36xf32> to vector<4x1xf32>
    %78 = vector.extract_strided_slice %62 {offsets = [0, 2, 0], sizes = [2, 1, 396], strides = [1, 1, 1]} : vector<2x4x396xf32> to vector<2x1x396xf32>
    %79 = vector.shape_cast %77 : vector<4x1xf32> to vector<1x4x1xf32>
    %80 = vector.broadcast %79 : vector<1x4x1xf32> to vector<2x4x396xf32>
    %81 = vector.broadcast %78 : vector<2x1x396xf32> to vector<2x4x396xf32>
    %82 = arith.mulf %80, %81 : vector<2x4x396xf32>
    %83 = arith.addf %76, %82 : vector<2x4x396xf32>
    %84 = vector.extract_strided_slice %1 {offsets = [0, 11], sizes = [4, 1], strides = [1, 1]} : vector<4x36xf32> to vector<4x1xf32>
    %85 = vector.extract_strided_slice %62 {offsets = [0, 3, 0], sizes = [2, 1, 396], strides = [1, 1, 1]} : vector<2x4x396xf32> to vector<2x1x396xf32>
    %86 = vector.shape_cast %84 : vector<4x1xf32> to vector<1x4x1xf32>
    %87 = vector.broadcast %86 : vector<1x4x1xf32> to vector<2x4x396xf32>
    %88 = vector.broadcast %85 : vector<2x1x396xf32> to vector<2x4x396xf32>
    %89 = arith.mulf %87, %88 : vector<2x4x396xf32>
    %90 = arith.addf %83, %89 : vector<2x4x396xf32>
    %91 = vector.extract_strided_slice %0 {offsets = [0, 0, 35], sizes = [2, 4, 396], strides = [1, 1, 1]} : vector<2x4x468xf32> to vector<2x4x396xf32>
    %92 = vector.extract_strided_slice %1 {offsets = [0, 12], sizes = [4, 1], strides = [1, 1]} : vector<4x36xf32> to vector<4x1xf32>
    %93 = vector.extract_strided_slice %91 {offsets = [0, 0, 0], sizes = [2, 1, 396], strides = [1, 1, 1]} : vector<2x4x396xf32> to vector<2x1x396xf32>
    %94 = vector.shape_cast %92 : vector<4x1xf32> to vector<1x4x1xf32>
    %95 = vector.broadcast %94 : vector<1x4x1xf32> to vector<2x4x396xf32>
    %96 = vector.broadcast %93 : vector<2x1x396xf32> to vector<2x4x396xf32>
    %97 = arith.mulf %95, %96 : vector<2x4x396xf32>
    %98 = arith.addf %90, %97 : vector<2x4x396xf32>
    %99 = vector.extract_strided_slice %1 {offsets = [0, 13], sizes = [4, 1], strides = [1, 1]} : vector<4x36xf32> to vector<4x1xf32>
    %100 = vector.extract_strided_slice %91 {offsets = [0, 1, 0], sizes = [2, 1, 396], strides = [1, 1, 1]} : vector<2x4x396xf32> to vector<2x1x396xf32>
    %101 = vector.shape_cast %99 : vector<4x1xf32> to vector<1x4x1xf32>
    %102 = vector.broadcast %101 : vector<1x4x1xf32> to vector<2x4x396xf32>
    %103 = vector.broadcast %100 : vector<2x1x396xf32> to vector<2x4x396xf32>
    %104 = arith.mulf %102, %103 : vector<2x4x396xf32>
    %105 = arith.addf %98, %104 : vector<2x4x396xf32>
    %106 = vector.extract_strided_slice %1 {offsets = [0, 14], sizes = [4, 1], strides = [1, 1]} : vector<4x36xf32> to vector<4x1xf32>
    %107 = vector.extract_strided_slice %91 {offsets = [0, 2, 0], sizes = [2, 1, 396], strides = [1, 1, 1]} : vector<2x4x396xf32> to vector<2x1x396xf32>
    %108 = vector.shape_cast %106 : vector<4x1xf32> to vector<1x4x1xf32>
    %109 = vector.broadcast %108 : vector<1x4x1xf32> to vector<2x4x396xf32>
    %110 = vector.broadcast %107 : vector<2x1x396xf32> to vector<2x4x396xf32>
    %111 = arith.mulf %109, %110 : vector<2x4x396xf32>
    %112 = arith.addf %105, %111 : vector<2x4x396xf32>
    %113 = vector.extract_strided_slice %1 {offsets = [0, 15], sizes = [4, 1], strides = [1, 1]} : vector<4x36xf32> to vector<4x1xf32>
    %114 = vector.extract_strided_slice %91 {offsets = [0, 3, 0], sizes = [2, 1, 396], strides = [1, 1, 1]} : vector<2x4x396xf32> to vector<2x1x396xf32>
    %115 = vector.shape_cast %113 : vector<4x1xf32> to vector<1x4x1xf32>
    %116 = vector.broadcast %115 : vector<1x4x1xf32> to vector<2x4x396xf32>
    %117 = vector.broadcast %114 : vector<2x1x396xf32> to vector<2x4x396xf32>
    %118 = arith.mulf %116, %117 : vector<2x4x396xf32>
    %119 = arith.addf %112, %118 : vector<2x4x396xf32>
    %120 = vector.extract_strided_slice %0 {offsets = [0, 0, 36], sizes = [2, 4, 396], strides = [1, 1, 1]} : vector<2x4x468xf32> to vector<2x4x396xf32>
    %121 = vector.extract_strided_slice %1 {offsets = [0, 16], sizes = [4, 1], strides = [1, 1]} : vector<4x36xf32> to vector<4x1xf32>
    %122 = vector.extract_strided_slice %120 {offsets = [0, 0, 0], sizes = [2, 1, 396], strides = [1, 1, 1]} : vector<2x4x396xf32> to vector<2x1x396xf32>
    %123 = vector.shape_cast %121 : vector<4x1xf32> to vector<1x4x1xf32>
    %124 = vector.broadcast %123 : vector<1x4x1xf32> to vector<2x4x396xf32>
    %125 = vector.broadcast %122 : vector<2x1x396xf32> to vector<2x4x396xf32>
    %126 = arith.mulf %124, %125 : vector<2x4x396xf32>
    %127 = arith.addf %119, %126 : vector<2x4x396xf32>
    %128 = vector.extract_strided_slice %1 {offsets = [0, 17], sizes = [4, 1], strides = [1, 1]} : vector<4x36xf32> to vector<4x1xf32>
    %129 = vector.extract_strided_slice %120 {offsets = [0, 1, 0], sizes = [2, 1, 396], strides = [1, 1, 1]} : vector<2x4x396xf32> to vector<2x1x396xf32>
    %130 = vector.shape_cast %128 : vector<4x1xf32> to vector<1x4x1xf32>
    %131 = vector.broadcast %130 : vector<1x4x1xf32> to vector<2x4x396xf32>
    %132 = vector.broadcast %129 : vector<2x1x396xf32> to vector<2x4x396xf32>
    %133 = arith.mulf %131, %132 : vector<2x4x396xf32>
    %134 = arith.addf %127, %133 : vector<2x4x396xf32>
    %135 = vector.extract_strided_slice %1 {offsets = [0, 18], sizes = [4, 1], strides = [1, 1]} : vector<4x36xf32> to vector<4x1xf32>
    %136 = vector.extract_strided_slice %120 {offsets = [0, 2, 0], sizes = [2, 1, 396], strides = [1, 1, 1]} : vector<2x4x396xf32> to vector<2x1x396xf32>
    %137 = vector.shape_cast %135 : vector<4x1xf32> to vector<1x4x1xf32>
    %138 = vector.broadcast %137 : vector<1x4x1xf32> to vector<2x4x396xf32>
    %139 = vector.broadcast %136 : vector<2x1x396xf32> to vector<2x4x396xf32>
    %140 = arith.mulf %138, %139 : vector<2x4x396xf32>
    %141 = arith.addf %134, %140 : vector<2x4x396xf32>
    %142 = vector.extract_strided_slice %1 {offsets = [0, 19], sizes = [4, 1], strides = [1, 1]} : vector<4x36xf32> to vector<4x1xf32>
    %143 = vector.extract_strided_slice %120 {offsets = [0, 3, 0], sizes = [2, 1, 396], strides = [1, 1, 1]} : vector<2x4x396xf32> to vector<2x1x396xf32>
    %144 = vector.shape_cast %142 : vector<4x1xf32> to vector<1x4x1xf32>
    %145 = vector.broadcast %144 : vector<1x4x1xf32> to vector<2x4x396xf32>
    %146 = vector.broadcast %143 : vector<2x1x396xf32> to vector<2x4x396xf32>
    %147 = arith.mulf %145, %146 : vector<2x4x396xf32>
    %148 = arith.addf %141, %147 : vector<2x4x396xf32>
    %149 = vector.extract_strided_slice %0 {offsets = [0, 0, 37], sizes = [2, 4, 396], strides = [1, 1, 1]} : vector<2x4x468xf32> to vector<2x4x396xf32>
    %150 = vector.extract_strided_slice %1 {offsets = [0, 20], sizes = [4, 1], strides = [1, 1]} : vector<4x36xf32> to vector<4x1xf32>
    %151 = vector.extract_strided_slice %149 {offsets = [0, 0, 0], sizes = [2, 1, 396], strides = [1, 1, 1]} : vector<2x4x396xf32> to vector<2x1x396xf32>
    %152 = vector.shape_cast %150 : vector<4x1xf32> to vector<1x4x1xf32>
    %153 = vector.broadcast %152 : vector<1x4x1xf32> to vector<2x4x396xf32>
    %154 = vector.broadcast %151 : vector<2x1x396xf32> to vector<2x4x396xf32>
    %155 = arith.mulf %153, %154 : vector<2x4x396xf32>
    %156 = arith.addf %148, %155 : vector<2x4x396xf32>
    %157 = vector.extract_strided_slice %1 {offsets = [0, 21], sizes = [4, 1], strides = [1, 1]} : vector<4x36xf32> to vector<4x1xf32>
    %158 = vector.extract_strided_slice %149 {offsets = [0, 1, 0], sizes = [2, 1, 396], strides = [1, 1, 1]} : vector<2x4x396xf32> to vector<2x1x396xf32>
    %159 = vector.shape_cast %157 : vector<4x1xf32> to vector<1x4x1xf32>
    %160 = vector.broadcast %159 : vector<1x4x1xf32> to vector<2x4x396xf32>
    %161 = vector.broadcast %158 : vector<2x1x396xf32> to vector<2x4x396xf32>
    %162 = arith.mulf %160, %161 : vector<2x4x396xf32>
    %163 = arith.addf %156, %162 : vector<2x4x396xf32>
    %164 = vector.extract_strided_slice %1 {offsets = [0, 22], sizes = [4, 1], strides = [1, 1]} : vector<4x36xf32> to vector<4x1xf32>
    %165 = vector.extract_strided_slice %149 {offsets = [0, 2, 0], sizes = [2, 1, 396], strides = [1, 1, 1]} : vector<2x4x396xf32> to vector<2x1x396xf32>
    %166 = vector.shape_cast %164 : vector<4x1xf32> to vector<1x4x1xf32>
    %167 = vector.broadcast %166 : vector<1x4x1xf32> to vector<2x4x396xf32>
    %168 = vector.broadcast %165 : vector<2x1x396xf32> to vector<2x4x396xf32>
    %169 = arith.mulf %167, %168 : vector<2x4x396xf32>
    %170 = arith.addf %163, %169 : vector<2x4x396xf32>
    %171 = vector.extract_strided_slice %1 {offsets = [0, 23], sizes = [4, 1], strides = [1, 1]} : vector<4x36xf32> to vector<4x1xf32>
    %172 = vector.extract_strided_slice %149 {offsets = [0, 3, 0], sizes = [2, 1, 396], strides = [1, 1, 1]} : vector<2x4x396xf32> to vector<2x1x396xf32>
    %173 = vector.shape_cast %171 : vector<4x1xf32> to vector<1x4x1xf32>
    %174 = vector.broadcast %173 : vector<1x4x1xf32> to vector<2x4x396xf32>
    %175 = vector.broadcast %172 : vector<2x1x396xf32> to vector<2x4x396xf32>
    %176 = arith.mulf %174, %175 : vector<2x4x396xf32>
    %177 = arith.addf %170, %176 : vector<2x4x396xf32>
    %178 = vector.extract_strided_slice %0 {offsets = [0, 0, 53], sizes = [2, 4, 396], strides = [1, 1, 1]} : vector<2x4x468xf32> to vector<2x4x396xf32>
    %179 = vector.extract_strided_slice %1 {offsets = [0, 24], sizes = [4, 1], strides = [1, 1]} : vector<4x36xf32> to vector<4x1xf32>
    %180 = vector.extract_strided_slice %178 {offsets = [0, 0, 0], sizes = [2, 1, 396], strides = [1, 1, 1]} : vector<2x4x396xf32> to vector<2x1x396xf32>
    %181 = vector.shape_cast %179 : vector<4x1xf32> to vector<1x4x1xf32>
    %182 = vector.broadcast %181 : vector<1x4x1xf32> to vector<2x4x396xf32>
    %183 = vector.broadcast %180 : vector<2x1x396xf32> to vector<2x4x396xf32>
    %184 = arith.mulf %182, %183 : vector<2x4x396xf32>
    %185 = arith.addf %177, %184 : vector<2x4x396xf32>
    %186 = vector.extract_strided_slice %1 {offsets = [0, 25], sizes = [4, 1], strides = [1, 1]} : vector<4x36xf32> to vector<4x1xf32>
    %187 = vector.extract_strided_slice %178 {offsets = [0, 1, 0], sizes = [2, 1, 396], strides = [1, 1, 1]} : vector<2x4x396xf32> to vector<2x1x396xf32>
    %188 = vector.shape_cast %186 : vector<4x1xf32> to vector<1x4x1xf32>
    %189 = vector.broadcast %188 : vector<1x4x1xf32> to vector<2x4x396xf32>
    %190 = vector.broadcast %187 : vector<2x1x396xf32> to vector<2x4x396xf32>
    %191 = arith.mulf %189, %190 : vector<2x4x396xf32>
    %192 = arith.addf %185, %191 : vector<2x4x396xf32>
    %193 = vector.extract_strided_slice %1 {offsets = [0, 26], sizes = [4, 1], strides = [1, 1]} : vector<4x36xf32> to vector<4x1xf32>
    %194 = vector.extract_strided_slice %178 {offsets = [0, 2, 0], sizes = [2, 1, 396], strides = [1, 1, 1]} : vector<2x4x396xf32> to vector<2x1x396xf32>
    %195 = vector.shape_cast %193 : vector<4x1xf32> to vector<1x4x1xf32>
    %196 = vector.broadcast %195 : vector<1x4x1xf32> to vector<2x4x396xf32>
    %197 = vector.broadcast %194 : vector<2x1x396xf32> to vector<2x4x396xf32>
    %198 = arith.mulf %196, %197 : vector<2x4x396xf32>
    %199 = arith.addf %192, %198 : vector<2x4x396xf32>
    %200 = vector.extract_strided_slice %1 {offsets = [0, 27], sizes = [4, 1], strides = [1, 1]} : vector<4x36xf32> to vector<4x1xf32>
    %201 = vector.extract_strided_slice %178 {offsets = [0, 3, 0], sizes = [2, 1, 396], strides = [1, 1, 1]} : vector<2x4x396xf32> to vector<2x1x396xf32>
    %202 = vector.shape_cast %200 : vector<4x1xf32> to vector<1x4x1xf32>
    %203 = vector.broadcast %202 : vector<1x4x1xf32> to vector<2x4x396xf32>
    %204 = vector.broadcast %201 : vector<2x1x396xf32> to vector<2x4x396xf32>
    %205 = arith.mulf %203, %204 : vector<2x4x396xf32>
    %206 = arith.addf %199, %205 : vector<2x4x396xf32>
    %207 = vector.extract_strided_slice %0 {offsets = [0, 0, 54], sizes = [2, 4, 396], strides = [1, 1, 1]} : vector<2x4x468xf32> to vector<2x4x396xf32>
    %208 = vector.extract_strided_slice %1 {offsets = [0, 28], sizes = [4, 1], strides = [1, 1]} : vector<4x36xf32> to vector<4x1xf32>
    %209 = vector.extract_strided_slice %207 {offsets = [0, 0, 0], sizes = [2, 1, 396], strides = [1, 1, 1]} : vector<2x4x396xf32> to vector<2x1x396xf32>
    %210 = vector.shape_cast %208 : vector<4x1xf32> to vector<1x4x1xf32>
    %211 = vector.broadcast %210 : vector<1x4x1xf32> to vector<2x4x396xf32>
    %212 = vector.broadcast %209 : vector<2x1x396xf32> to vector<2x4x396xf32>
    %213 = arith.mulf %211, %212 : vector<2x4x396xf32>
    %214 = arith.addf %206, %213 : vector<2x4x396xf32>
    %215 = vector.extract_strided_slice %1 {offsets = [0, 29], sizes = [4, 1], strides = [1, 1]} : vector<4x36xf32> to vector<4x1xf32>
    %216 = vector.extract_strided_slice %207 {offsets = [0, 1, 0], sizes = [2, 1, 396], strides = [1, 1, 1]} : vector<2x4x396xf32> to vector<2x1x396xf32>
    %217 = vector.shape_cast %215 : vector<4x1xf32> to vector<1x4x1xf32>
    %218 = vector.broadcast %217 : vector<1x4x1xf32> to vector<2x4x396xf32>
    %219 = vector.broadcast %216 : vector<2x1x396xf32> to vector<2x4x396xf32>
    %220 = arith.mulf %218, %219 : vector<2x4x396xf32>
    %221 = arith.addf %214, %220 : vector<2x4x396xf32>
    %222 = vector.extract_strided_slice %1 {offsets = [0, 30], sizes = [4, 1], strides = [1, 1]} : vector<4x36xf32> to vector<4x1xf32>
    %223 = vector.extract_strided_slice %207 {offsets = [0, 2, 0], sizes = [2, 1, 396], strides = [1, 1, 1]} : vector<2x4x396xf32> to vector<2x1x396xf32>
    %224 = vector.shape_cast %222 : vector<4x1xf32> to vector<1x4x1xf32>
    %225 = vector.broadcast %224 : vector<1x4x1xf32> to vector<2x4x396xf32>
    %226 = vector.broadcast %223 : vector<2x1x396xf32> to vector<2x4x396xf32>
    %227 = arith.mulf %225, %226 : vector<2x4x396xf32>
    %228 = arith.addf %221, %227 : vector<2x4x396xf32>
    %229 = vector.extract_strided_slice %1 {offsets = [0, 31], sizes = [4, 1], strides = [1, 1]} : vector<4x36xf32> to vector<4x1xf32>
    %230 = vector.extract_strided_slice %207 {offsets = [0, 3, 0], sizes = [2, 1, 396], strides = [1, 1, 1]} : vector<2x4x396xf32> to vector<2x1x396xf32>
    %231 = vector.shape_cast %229 : vector<4x1xf32> to vector<1x4x1xf32>
    %232 = vector.broadcast %231 : vector<1x4x1xf32> to vector<2x4x396xf32>
    %233 = vector.broadcast %230 : vector<2x1x396xf32> to vector<2x4x396xf32>
    %234 = arith.mulf %232, %233 : vector<2x4x396xf32>
    %235 = arith.addf %228, %234 : vector<2x4x396xf32>
    %236 = vector.extract_strided_slice %0 {offsets = [0, 0, 55], sizes = [2, 4, 396], strides = [1, 1, 1]} : vector<2x4x468xf32> to vector<2x4x396xf32>
    %237 = vector.extract_strided_slice %1 {offsets = [0, 32], sizes = [4, 1], strides = [1, 1]} : vector<4x36xf32> to vector<4x1xf32>
    %238 = vector.extract_strided_slice %236 {offsets = [0, 0, 0], sizes = [2, 1, 396], strides = [1, 1, 1]} : vector<2x4x396xf32> to vector<2x1x396xf32>
    %239 = vector.shape_cast %237 : vector<4x1xf32> to vector<1x4x1xf32>
    %240 = vector.broadcast %239 : vector<1x4x1xf32> to vector<2x4x396xf32>
    %241 = vector.broadcast %238 : vector<2x1x396xf32> to vector<2x4x396xf32>
    %242 = arith.mulf %240, %241 : vector<2x4x396xf32>
    %243 = arith.addf %235, %242 : vector<2x4x396xf32>
    %244 = vector.extract_strided_slice %1 {offsets = [0, 33], sizes = [4, 1], strides = [1, 1]} : vector<4x36xf32> to vector<4x1xf32>
    %245 = vector.extract_strided_slice %236 {offsets = [0, 1, 0], sizes = [2, 1, 396], strides = [1, 1, 1]} : vector<2x4x396xf32> to vector<2x1x396xf32>
    %246 = vector.shape_cast %244 : vector<4x1xf32> to vector<1x4x1xf32>
    %247 = vector.broadcast %246 : vector<1x4x1xf32> to vector<2x4x396xf32>
    %248 = vector.broadcast %245 : vector<2x1x396xf32> to vector<2x4x396xf32>
    %249 = arith.mulf %247, %248 : vector<2x4x396xf32>
    %250 = arith.addf %243, %249 : vector<2x4x396xf32>
    %251 = vector.extract_strided_slice %1 {offsets = [0, 34], sizes = [4, 1], strides = [1, 1]} : vector<4x36xf32> to vector<4x1xf32>
    %252 = vector.extract_strided_slice %236 {offsets = [0, 2, 0], sizes = [2, 1, 396], strides = [1, 1, 1]} : vector<2x4x396xf32> to vector<2x1x396xf32>
    %253 = vector.shape_cast %251 : vector<4x1xf32> to vector<1x4x1xf32>
    %254 = vector.broadcast %253 : vector<1x4x1xf32> to vector<2x4x396xf32>
    %255 = vector.broadcast %252 : vector<2x1x396xf32> to vector<2x4x396xf32>
    %256 = arith.mulf %254, %255 : vector<2x4x396xf32>
    %257 = arith.addf %250, %256 : vector<2x4x396xf32>
    %258 = vector.extract_strided_slice %1 {offsets = [0, 35], sizes = [4, 1], strides = [1, 1]} : vector<4x36xf32> to vector<4x1xf32>
    %259 = vector.extract_strided_slice %236 {offsets = [0, 3, 0], sizes = [2, 1, 396], strides = [1, 1, 1]} : vector<2x4x396xf32> to vector<2x1x396xf32>
    %260 = vector.shape_cast %258 : vector<4x1xf32> to vector<1x4x1xf32>
    %261 = vector.broadcast %260 : vector<1x4x1xf32> to vector<2x4x396xf32>
    %262 = vector.broadcast %259 : vector<2x1x396xf32> to vector<2x4x396xf32>
    %263 = arith.mulf %261, %262 : vector<2x4x396xf32>
    %264 = arith.addf %257, %263 : vector<2x4x396xf32>
    %c0_6 = arith.constant 0 : index
    %c0_7 = arith.constant 0 : index
    %265 = vector.load %arg4[%c0_6, %c0_7] : memref<4x1xf32, #tpu.memory_space<vmem>>, vector<4x1xf32>
    %266 = vector.shape_cast %265 : vector<4x1xf32> to vector<1x4x1xf32>
    %267 = vector.broadcast %266 : vector<1x4x1xf32> to vector<2x4x396xf32>
    %268 = arith.addf %264, %267 : vector<2x4x396xf32>
    %cst_8 = arith.constant 0.000000e+00 : f32
    %269 = vector.broadcast %cst_8 : f32 to vector<2x4x396xf32>
    %270 = arith.maximumf %268, %269 : vector<2x4x396xf32>
    %c0_9 = arith.constant 0 : index
    %c0_10 = arith.constant 0 : index
    %271 = vector.load %arg6[%c0_9, %c0_10] : memref<1x396xf32, #tpu.memory_space<vmem>>, vector<1x396xf32>
    %272 = vector.shape_cast %271 : vector<1x396xf32> to vector<1x1x396xf32>
    %273 = vector.broadcast %272 : vector<1x1x396xf32> to vector<2x4x396xf32>
    %274 = arith.mulf %270, %273 : vector<2x4x396xf32>
    %cst_11 = arith.constant 0.000000e+00 : f32
    %275 = vector.broadcast %cst_11 : f32 to vector<2x4x324xf32>
    %276 = vector.extract_strided_slice %274 {offsets = [0, 0, 17], sizes = [2, 4, 324], strides = [1, 1, 1]} : vector<2x4x396xf32> to vector<2x4x324xf32>
    %277 = vector.extract_strided_slice %2 {offsets = [0, 0], sizes = [4, 1], strides = [1, 1]} : vector<4x36xf32> to vector<4x1xf32>
    %278 = vector.extract_strided_slice %276 {offsets = [0, 0, 0], sizes = [2, 1, 324], strides = [1, 1, 1]} : vector<2x4x324xf32> to vector<2x1x324xf32>
    %279 = vector.shape_cast %277 : vector<4x1xf32> to vector<1x4x1xf32>
    %280 = vector.broadcast %279 : vector<1x4x1xf32> to vector<2x4x324xf32>
    %281 = vector.broadcast %278 : vector<2x1x324xf32> to vector<2x4x324xf32>
    %282 = arith.mulf %280, %281 : vector<2x4x324xf32>
    %283 = arith.addf %275, %282 : vector<2x4x324xf32>
    %284 = vector.extract_strided_slice %2 {offsets = [0, 1], sizes = [4, 1], strides = [1, 1]} : vector<4x36xf32> to vector<4x1xf32>
    %285 = vector.extract_strided_slice %276 {offsets = [0, 1, 0], sizes = [2, 1, 324], strides = [1, 1, 1]} : vector<2x4x324xf32> to vector<2x1x324xf32>
    %286 = vector.shape_cast %284 : vector<4x1xf32> to vector<1x4x1xf32>
    %287 = vector.broadcast %286 : vector<1x4x1xf32> to vector<2x4x324xf32>
    %288 = vector.broadcast %285 : vector<2x1x324xf32> to vector<2x4x324xf32>
    %289 = arith.mulf %287, %288 : vector<2x4x324xf32>
    %290 = arith.addf %283, %289 : vector<2x4x324xf32>
    %291 = vector.extract_strided_slice %2 {offsets = [0, 2], sizes = [4, 1], strides = [1, 1]} : vector<4x36xf32> to vector<4x1xf32>
    %292 = vector.extract_strided_slice %276 {offsets = [0, 2, 0], sizes = [2, 1, 324], strides = [1, 1, 1]} : vector<2x4x324xf32> to vector<2x1x324xf32>
    %293 = vector.shape_cast %291 : vector<4x1xf32> to vector<1x4x1xf32>
    %294 = vector.broadcast %293 : vector<1x4x1xf32> to vector<2x4x324xf32>
    %295 = vector.broadcast %292 : vector<2x1x324xf32> to vector<2x4x324xf32>
    %296 = arith.mulf %294, %295 : vector<2x4x324xf32>
    %297 = arith.addf %290, %296 : vector<2x4x324xf32>
    %298 = vector.extract_strided_slice %2 {offsets = [0, 3], sizes = [4, 1], strides = [1, 1]} : vector<4x36xf32> to vector<4x1xf32>
    %299 = vector.extract_strided_slice %276 {offsets = [0, 3, 0], sizes = [2, 1, 324], strides = [1, 1, 1]} : vector<2x4x324xf32> to vector<2x1x324xf32>
    %300 = vector.shape_cast %298 : vector<4x1xf32> to vector<1x4x1xf32>
    %301 = vector.broadcast %300 : vector<1x4x1xf32> to vector<2x4x324xf32>
    %302 = vector.broadcast %299 : vector<2x1x324xf32> to vector<2x4x324xf32>
    %303 = arith.mulf %301, %302 : vector<2x4x324xf32>
    %304 = arith.addf %297, %303 : vector<2x4x324xf32>
    %305 = vector.extract_strided_slice %274 {offsets = [0, 0, 18], sizes = [2, 4, 324], strides = [1, 1, 1]} : vector<2x4x396xf32> to vector<2x4x324xf32>
    %306 = vector.extract_strided_slice %2 {offsets = [0, 4], sizes = [4, 1], strides = [1, 1]} : vector<4x36xf32> to vector<4x1xf32>
    %307 = vector.extract_strided_slice %305 {offsets = [0, 0, 0], sizes = [2, 1, 324], strides = [1, 1, 1]} : vector<2x4x324xf32> to vector<2x1x324xf32>
    %308 = vector.shape_cast %306 : vector<4x1xf32> to vector<1x4x1xf32>
    %309 = vector.broadcast %308 : vector<1x4x1xf32> to vector<2x4x324xf32>
    %310 = vector.broadcast %307 : vector<2x1x324xf32> to vector<2x4x324xf32>
    %311 = arith.mulf %309, %310 : vector<2x4x324xf32>
    %312 = arith.addf %304, %311 : vector<2x4x324xf32>
    %313 = vector.extract_strided_slice %2 {offsets = [0, 5], sizes = [4, 1], strides = [1, 1]} : vector<4x36xf32> to vector<4x1xf32>
    %314 = vector.extract_strided_slice %305 {offsets = [0, 1, 0], sizes = [2, 1, 324], strides = [1, 1, 1]} : vector<2x4x324xf32> to vector<2x1x324xf32>
    %315 = vector.shape_cast %313 : vector<4x1xf32> to vector<1x4x1xf32>
    %316 = vector.broadcast %315 : vector<1x4x1xf32> to vector<2x4x324xf32>
    %317 = vector.broadcast %314 : vector<2x1x324xf32> to vector<2x4x324xf32>
    %318 = arith.mulf %316, %317 : vector<2x4x324xf32>
    %319 = arith.addf %312, %318 : vector<2x4x324xf32>
    %320 = vector.extract_strided_slice %2 {offsets = [0, 6], sizes = [4, 1], strides = [1, 1]} : vector<4x36xf32> to vector<4x1xf32>
    %321 = vector.extract_strided_slice %305 {offsets = [0, 2, 0], sizes = [2, 1, 324], strides = [1, 1, 1]} : vector<2x4x324xf32> to vector<2x1x324xf32>
    %322 = vector.shape_cast %320 : vector<4x1xf32> to vector<1x4x1xf32>
    %323 = vector.broadcast %322 : vector<1x4x1xf32> to vector<2x4x324xf32>
    %324 = vector.broadcast %321 : vector<2x1x324xf32> to vector<2x4x324xf32>
    %325 = arith.mulf %323, %324 : vector<2x4x324xf32>
    %326 = arith.addf %319, %325 : vector<2x4x324xf32>
    %327 = vector.extract_strided_slice %2 {offsets = [0, 7], sizes = [4, 1], strides = [1, 1]} : vector<4x36xf32> to vector<4x1xf32>
    %328 = vector.extract_strided_slice %305 {offsets = [0, 3, 0], sizes = [2, 1, 324], strides = [1, 1, 1]} : vector<2x4x324xf32> to vector<2x1x324xf32>
    %329 = vector.shape_cast %327 : vector<4x1xf32> to vector<1x4x1xf32>
    %330 = vector.broadcast %329 : vector<1x4x1xf32> to vector<2x4x324xf32>
    %331 = vector.broadcast %328 : vector<2x1x324xf32> to vector<2x4x324xf32>
    %332 = arith.mulf %330, %331 : vector<2x4x324xf32>
    %333 = arith.addf %326, %332 : vector<2x4x324xf32>
    %334 = vector.extract_strided_slice %274 {offsets = [0, 0, 19], sizes = [2, 4, 324], strides = [1, 1, 1]} : vector<2x4x396xf32> to vector<2x4x324xf32>
    %335 = vector.extract_strided_slice %2 {offsets = [0, 8], sizes = [4, 1], strides = [1, 1]} : vector<4x36xf32> to vector<4x1xf32>
    %336 = vector.extract_strided_slice %334 {offsets = [0, 0, 0], sizes = [2, 1, 324], strides = [1, 1, 1]} : vector<2x4x324xf32> to vector<2x1x324xf32>
    %337 = vector.shape_cast %335 : vector<4x1xf32> to vector<1x4x1xf32>
    %338 = vector.broadcast %337 : vector<1x4x1xf32> to vector<2x4x324xf32>
    %339 = vector.broadcast %336 : vector<2x1x324xf32> to vector<2x4x324xf32>
    %340 = arith.mulf %338, %339 : vector<2x4x324xf32>
    %341 = arith.addf %333, %340 : vector<2x4x324xf32>
    %342 = vector.extract_strided_slice %2 {offsets = [0, 9], sizes = [4, 1], strides = [1, 1]} : vector<4x36xf32> to vector<4x1xf32>
    %343 = vector.extract_strided_slice %334 {offsets = [0, 1, 0], sizes = [2, 1, 324], strides = [1, 1, 1]} : vector<2x4x324xf32> to vector<2x1x324xf32>
    %344 = vector.shape_cast %342 : vector<4x1xf32> to vector<1x4x1xf32>
    %345 = vector.broadcast %344 : vector<1x4x1xf32> to vector<2x4x324xf32>
    %346 = vector.broadcast %343 : vector<2x1x324xf32> to vector<2x4x324xf32>
    %347 = arith.mulf %345, %346 : vector<2x4x324xf32>
    %348 = arith.addf %341, %347 : vector<2x4x324xf32>
    %349 = vector.extract_strided_slice %2 {offsets = [0, 10], sizes = [4, 1], strides = [1, 1]} : vector<4x36xf32> to vector<4x1xf32>
    %350 = vector.extract_strided_slice %334 {offsets = [0, 2, 0], sizes = [2, 1, 324], strides = [1, 1, 1]} : vector<2x4x324xf32> to vector<2x1x324xf32>
    %351 = vector.shape_cast %349 : vector<4x1xf32> to vector<1x4x1xf32>
    %352 = vector.broadcast %351 : vector<1x4x1xf32> to vector<2x4x324xf32>
    %353 = vector.broadcast %350 : vector<2x1x324xf32> to vector<2x4x324xf32>
    %354 = arith.mulf %352, %353 : vector<2x4x324xf32>
    %355 = arith.addf %348, %354 : vector<2x4x324xf32>
    %356 = vector.extract_strided_slice %2 {offsets = [0, 11], sizes = [4, 1], strides = [1, 1]} : vector<4x36xf32> to vector<4x1xf32>
    %357 = vector.extract_strided_slice %334 {offsets = [0, 3, 0], sizes = [2, 1, 324], strides = [1, 1, 1]} : vector<2x4x324xf32> to vector<2x1x324xf32>
    %358 = vector.shape_cast %356 : vector<4x1xf32> to vector<1x4x1xf32>
    %359 = vector.broadcast %358 : vector<1x4x1xf32> to vector<2x4x324xf32>
    %360 = vector.broadcast %357 : vector<2x1x324xf32> to vector<2x4x324xf32>
    %361 = arith.mulf %359, %360 : vector<2x4x324xf32>
    %362 = arith.addf %355, %361 : vector<2x4x324xf32>
    %363 = vector.extract_strided_slice %274 {offsets = [0, 0, 35], sizes = [2, 4, 324], strides = [1, 1, 1]} : vector<2x4x396xf32> to vector<2x4x324xf32>
    %364 = vector.extract_strided_slice %2 {offsets = [0, 12], sizes = [4, 1], strides = [1, 1]} : vector<4x36xf32> to vector<4x1xf32>
    %365 = vector.extract_strided_slice %363 {offsets = [0, 0, 0], sizes = [2, 1, 324], strides = [1, 1, 1]} : vector<2x4x324xf32> to vector<2x1x324xf32>
    %366 = vector.shape_cast %364 : vector<4x1xf32> to vector<1x4x1xf32>
    %367 = vector.broadcast %366 : vector<1x4x1xf32> to vector<2x4x324xf32>
    %368 = vector.broadcast %365 : vector<2x1x324xf32> to vector<2x4x324xf32>
    %369 = arith.mulf %367, %368 : vector<2x4x324xf32>
    %370 = arith.addf %362, %369 : vector<2x4x324xf32>
    %371 = vector.extract_strided_slice %2 {offsets = [0, 13], sizes = [4, 1], strides = [1, 1]} : vector<4x36xf32> to vector<4x1xf32>
    %372 = vector.extract_strided_slice %363 {offsets = [0, 1, 0], sizes = [2, 1, 324], strides = [1, 1, 1]} : vector<2x4x324xf32> to vector<2x1x324xf32>
    %373 = vector.shape_cast %371 : vector<4x1xf32> to vector<1x4x1xf32>
    %374 = vector.broadcast %373 : vector<1x4x1xf32> to vector<2x4x324xf32>
    %375 = vector.broadcast %372 : vector<2x1x324xf32> to vector<2x4x324xf32>
    %376 = arith.mulf %374, %375 : vector<2x4x324xf32>
    %377 = arith.addf %370, %376 : vector<2x4x324xf32>
    %378 = vector.extract_strided_slice %2 {offsets = [0, 14], sizes = [4, 1], strides = [1, 1]} : vector<4x36xf32> to vector<4x1xf32>
    %379 = vector.extract_strided_slice %363 {offsets = [0, 2, 0], sizes = [2, 1, 324], strides = [1, 1, 1]} : vector<2x4x324xf32> to vector<2x1x324xf32>
    %380 = vector.shape_cast %378 : vector<4x1xf32> to vector<1x4x1xf32>
    %381 = vector.broadcast %380 : vector<1x4x1xf32> to vector<2x4x324xf32>
    %382 = vector.broadcast %379 : vector<2x1x324xf32> to vector<2x4x324xf32>
    %383 = arith.mulf %381, %382 : vector<2x4x324xf32>
    %384 = arith.addf %377, %383 : vector<2x4x324xf32>
    %385 = vector.extract_strided_slice %2 {offsets = [0, 15], sizes = [4, 1], strides = [1, 1]} : vector<4x36xf32> to vector<4x1xf32>
    %386 = vector.extract_strided_slice %363 {offsets = [0, 3, 0], sizes = [2, 1, 324], strides = [1, 1, 1]} : vector<2x4x324xf32> to vector<2x1x324xf32>
    %387 = vector.shape_cast %385 : vector<4x1xf32> to vector<1x4x1xf32>
    %388 = vector.broadcast %387 : vector<1x4x1xf32> to vector<2x4x324xf32>
    %389 = vector.broadcast %386 : vector<2x1x324xf32> to vector<2x4x324xf32>
    %390 = arith.mulf %388, %389 : vector<2x4x324xf32>
    %391 = arith.addf %384, %390 : vector<2x4x324xf32>
    %392 = vector.extract_strided_slice %274 {offsets = [0, 0, 36], sizes = [2, 4, 324], strides = [1, 1, 1]} : vector<2x4x396xf32> to vector<2x4x324xf32>
    %393 = vector.extract_strided_slice %2 {offsets = [0, 16], sizes = [4, 1], strides = [1, 1]} : vector<4x36xf32> to vector<4x1xf32>
    %394 = vector.extract_strided_slice %392 {offsets = [0, 0, 0], sizes = [2, 1, 324], strides = [1, 1, 1]} : vector<2x4x324xf32> to vector<2x1x324xf32>
    %395 = vector.shape_cast %393 : vector<4x1xf32> to vector<1x4x1xf32>
    %396 = vector.broadcast %395 : vector<1x4x1xf32> to vector<2x4x324xf32>
    %397 = vector.broadcast %394 : vector<2x1x324xf32> to vector<2x4x324xf32>
    %398 = arith.mulf %396, %397 : vector<2x4x324xf32>
    %399 = arith.addf %391, %398 : vector<2x4x324xf32>
    %400 = vector.extract_strided_slice %2 {offsets = [0, 17], sizes = [4, 1], strides = [1, 1]} : vector<4x36xf32> to vector<4x1xf32>
    %401 = vector.extract_strided_slice %392 {offsets = [0, 1, 0], sizes = [2, 1, 324], strides = [1, 1, 1]} : vector<2x4x324xf32> to vector<2x1x324xf32>
    %402 = vector.shape_cast %400 : vector<4x1xf32> to vector<1x4x1xf32>
    %403 = vector.broadcast %402 : vector<1x4x1xf32> to vector<2x4x324xf32>
    %404 = vector.broadcast %401 : vector<2x1x324xf32> to vector<2x4x324xf32>
    %405 = arith.mulf %403, %404 : vector<2x4x324xf32>
    %406 = arith.addf %399, %405 : vector<2x4x324xf32>
    %407 = vector.extract_strided_slice %2 {offsets = [0, 18], sizes = [4, 1], strides = [1, 1]} : vector<4x36xf32> to vector<4x1xf32>
    %408 = vector.extract_strided_slice %392 {offsets = [0, 2, 0], sizes = [2, 1, 324], strides = [1, 1, 1]} : vector<2x4x324xf32> to vector<2x1x324xf32>
    %409 = vector.shape_cast %407 : vector<4x1xf32> to vector<1x4x1xf32>
    %410 = vector.broadcast %409 : vector<1x4x1xf32> to vector<2x4x324xf32>
    %411 = vector.broadcast %408 : vector<2x1x324xf32> to vector<2x4x324xf32>
    %412 = arith.mulf %410, %411 : vector<2x4x324xf32>
    %413 = arith.addf %406, %412 : vector<2x4x324xf32>
    %414 = vector.extract_strided_slice %2 {offsets = [0, 19], sizes = [4, 1], strides = [1, 1]} : vector<4x36xf32> to vector<4x1xf32>
    %415 = vector.extract_strided_slice %392 {offsets = [0, 3, 0], sizes = [2, 1, 324], strides = [1, 1, 1]} : vector<2x4x324xf32> to vector<2x1x324xf32>
    %416 = vector.shape_cast %414 : vector<4x1xf32> to vector<1x4x1xf32>
    %417 = vector.broadcast %416 : vector<1x4x1xf32> to vector<2x4x324xf32>
    %418 = vector.broadcast %415 : vector<2x1x324xf32> to vector<2x4x324xf32>
    %419 = arith.mulf %417, %418 : vector<2x4x324xf32>
    %420 = arith.addf %413, %419 : vector<2x4x324xf32>
    %421 = vector.extract_strided_slice %274 {offsets = [0, 0, 37], sizes = [2, 4, 324], strides = [1, 1, 1]} : vector<2x4x396xf32> to vector<2x4x324xf32>
    %422 = vector.extract_strided_slice %2 {offsets = [0, 20], sizes = [4, 1], strides = [1, 1]} : vector<4x36xf32> to vector<4x1xf32>
    %423 = vector.extract_strided_slice %421 {offsets = [0, 0, 0], sizes = [2, 1, 324], strides = [1, 1, 1]} : vector<2x4x324xf32> to vector<2x1x324xf32>
    %424 = vector.shape_cast %422 : vector<4x1xf32> to vector<1x4x1xf32>
    %425 = vector.broadcast %424 : vector<1x4x1xf32> to vector<2x4x324xf32>
    %426 = vector.broadcast %423 : vector<2x1x324xf32> to vector<2x4x324xf32>
    %427 = arith.mulf %425, %426 : vector<2x4x324xf32>
    %428 = arith.addf %420, %427 : vector<2x4x324xf32>
    %429 = vector.extract_strided_slice %2 {offsets = [0, 21], sizes = [4, 1], strides = [1, 1]} : vector<4x36xf32> to vector<4x1xf32>
    %430 = vector.extract_strided_slice %421 {offsets = [0, 1, 0], sizes = [2, 1, 324], strides = [1, 1, 1]} : vector<2x4x324xf32> to vector<2x1x324xf32>
    %431 = vector.shape_cast %429 : vector<4x1xf32> to vector<1x4x1xf32>
    %432 = vector.broadcast %431 : vector<1x4x1xf32> to vector<2x4x324xf32>
    %433 = vector.broadcast %430 : vector<2x1x324xf32> to vector<2x4x324xf32>
    %434 = arith.mulf %432, %433 : vector<2x4x324xf32>
    %435 = arith.addf %428, %434 : vector<2x4x324xf32>
    %436 = vector.extract_strided_slice %2 {offsets = [0, 22], sizes = [4, 1], strides = [1, 1]} : vector<4x36xf32> to vector<4x1xf32>
    %437 = vector.extract_strided_slice %421 {offsets = [0, 2, 0], sizes = [2, 1, 324], strides = [1, 1, 1]} : vector<2x4x324xf32> to vector<2x1x324xf32>
    %438 = vector.shape_cast %436 : vector<4x1xf32> to vector<1x4x1xf32>
    %439 = vector.broadcast %438 : vector<1x4x1xf32> to vector<2x4x324xf32>
    %440 = vector.broadcast %437 : vector<2x1x324xf32> to vector<2x4x324xf32>
    %441 = arith.mulf %439, %440 : vector<2x4x324xf32>
    %442 = arith.addf %435, %441 : vector<2x4x324xf32>
    %443 = vector.extract_strided_slice %2 {offsets = [0, 23], sizes = [4, 1], strides = [1, 1]} : vector<4x36xf32> to vector<4x1xf32>
    %444 = vector.extract_strided_slice %421 {offsets = [0, 3, 0], sizes = [2, 1, 324], strides = [1, 1, 1]} : vector<2x4x324xf32> to vector<2x1x324xf32>
    %445 = vector.shape_cast %443 : vector<4x1xf32> to vector<1x4x1xf32>
    %446 = vector.broadcast %445 : vector<1x4x1xf32> to vector<2x4x324xf32>
    %447 = vector.broadcast %444 : vector<2x1x324xf32> to vector<2x4x324xf32>
    %448 = arith.mulf %446, %447 : vector<2x4x324xf32>
    %449 = arith.addf %442, %448 : vector<2x4x324xf32>
    %450 = vector.extract_strided_slice %274 {offsets = [0, 0, 53], sizes = [2, 4, 324], strides = [1, 1, 1]} : vector<2x4x396xf32> to vector<2x4x324xf32>
    %451 = vector.extract_strided_slice %2 {offsets = [0, 24], sizes = [4, 1], strides = [1, 1]} : vector<4x36xf32> to vector<4x1xf32>
    %452 = vector.extract_strided_slice %450 {offsets = [0, 0, 0], sizes = [2, 1, 324], strides = [1, 1, 1]} : vector<2x4x324xf32> to vector<2x1x324xf32>
    %453 = vector.shape_cast %451 : vector<4x1xf32> to vector<1x4x1xf32>
    %454 = vector.broadcast %453 : vector<1x4x1xf32> to vector<2x4x324xf32>
    %455 = vector.broadcast %452 : vector<2x1x324xf32> to vector<2x4x324xf32>
    %456 = arith.mulf %454, %455 : vector<2x4x324xf32>
    %457 = arith.addf %449, %456 : vector<2x4x324xf32>
    %458 = vector.extract_strided_slice %2 {offsets = [0, 25], sizes = [4, 1], strides = [1, 1]} : vector<4x36xf32> to vector<4x1xf32>
    %459 = vector.extract_strided_slice %450 {offsets = [0, 1, 0], sizes = [2, 1, 324], strides = [1, 1, 1]} : vector<2x4x324xf32> to vector<2x1x324xf32>
    %460 = vector.shape_cast %458 : vector<4x1xf32> to vector<1x4x1xf32>
    %461 = vector.broadcast %460 : vector<1x4x1xf32> to vector<2x4x324xf32>
    %462 = vector.broadcast %459 : vector<2x1x324xf32> to vector<2x4x324xf32>
    %463 = arith.mulf %461, %462 : vector<2x4x324xf32>
    %464 = arith.addf %457, %463 : vector<2x4x324xf32>
    %465 = vector.extract_strided_slice %2 {offsets = [0, 26], sizes = [4, 1], strides = [1, 1]} : vector<4x36xf32> to vector<4x1xf32>
    %466 = vector.extract_strided_slice %450 {offsets = [0, 2, 0], sizes = [2, 1, 324], strides = [1, 1, 1]} : vector<2x4x324xf32> to vector<2x1x324xf32>
    %467 = vector.shape_cast %465 : vector<4x1xf32> to vector<1x4x1xf32>
    %468 = vector.broadcast %467 : vector<1x4x1xf32> to vector<2x4x324xf32>
    %469 = vector.broadcast %466 : vector<2x1x324xf32> to vector<2x4x324xf32>
    %470 = arith.mulf %468, %469 : vector<2x4x324xf32>
    %471 = arith.addf %464, %470 : vector<2x4x324xf32>
    %472 = vector.extract_strided_slice %2 {offsets = [0, 27], sizes = [4, 1], strides = [1, 1]} : vector<4x36xf32> to vector<4x1xf32>
    %473 = vector.extract_strided_slice %450 {offsets = [0, 3, 0], sizes = [2, 1, 324], strides = [1, 1, 1]} : vector<2x4x324xf32> to vector<2x1x324xf32>
    %474 = vector.shape_cast %472 : vector<4x1xf32> to vector<1x4x1xf32>
    %475 = vector.broadcast %474 : vector<1x4x1xf32> to vector<2x4x324xf32>
    %476 = vector.broadcast %473 : vector<2x1x324xf32> to vector<2x4x324xf32>
    %477 = arith.mulf %475, %476 : vector<2x4x324xf32>
    %478 = arith.addf %471, %477 : vector<2x4x324xf32>
    %479 = vector.extract_strided_slice %274 {offsets = [0, 0, 54], sizes = [2, 4, 324], strides = [1, 1, 1]} : vector<2x4x396xf32> to vector<2x4x324xf32>
    %480 = vector.extract_strided_slice %2 {offsets = [0, 28], sizes = [4, 1], strides = [1, 1]} : vector<4x36xf32> to vector<4x1xf32>
    %481 = vector.extract_strided_slice %479 {offsets = [0, 0, 0], sizes = [2, 1, 324], strides = [1, 1, 1]} : vector<2x4x324xf32> to vector<2x1x324xf32>
    %482 = vector.shape_cast %480 : vector<4x1xf32> to vector<1x4x1xf32>
    %483 = vector.broadcast %482 : vector<1x4x1xf32> to vector<2x4x324xf32>
    %484 = vector.broadcast %481 : vector<2x1x324xf32> to vector<2x4x324xf32>
    %485 = arith.mulf %483, %484 : vector<2x4x324xf32>
    %486 = arith.addf %478, %485 : vector<2x4x324xf32>
    %487 = vector.extract_strided_slice %2 {offsets = [0, 29], sizes = [4, 1], strides = [1, 1]} : vector<4x36xf32> to vector<4x1xf32>
    %488 = vector.extract_strided_slice %479 {offsets = [0, 1, 0], sizes = [2, 1, 324], strides = [1, 1, 1]} : vector<2x4x324xf32> to vector<2x1x324xf32>
    %489 = vector.shape_cast %487 : vector<4x1xf32> to vector<1x4x1xf32>
    %490 = vector.broadcast %489 : vector<1x4x1xf32> to vector<2x4x324xf32>
    %491 = vector.broadcast %488 : vector<2x1x324xf32> to vector<2x4x324xf32>
    %492 = arith.mulf %490, %491 : vector<2x4x324xf32>
    %493 = arith.addf %486, %492 : vector<2x4x324xf32>
    %494 = vector.extract_strided_slice %2 {offsets = [0, 30], sizes = [4, 1], strides = [1, 1]} : vector<4x36xf32> to vector<4x1xf32>
    %495 = vector.extract_strided_slice %479 {offsets = [0, 2, 0], sizes = [2, 1, 324], strides = [1, 1, 1]} : vector<2x4x324xf32> to vector<2x1x324xf32>
    %496 = vector.shape_cast %494 : vector<4x1xf32> to vector<1x4x1xf32>
    %497 = vector.broadcast %496 : vector<1x4x1xf32> to vector<2x4x324xf32>
    %498 = vector.broadcast %495 : vector<2x1x324xf32> to vector<2x4x324xf32>
    %499 = arith.mulf %497, %498 : vector<2x4x324xf32>
    %500 = arith.addf %493, %499 : vector<2x4x324xf32>
    %501 = vector.extract_strided_slice %2 {offsets = [0, 31], sizes = [4, 1], strides = [1, 1]} : vector<4x36xf32> to vector<4x1xf32>
    %502 = vector.extract_strided_slice %479 {offsets = [0, 3, 0], sizes = [2, 1, 324], strides = [1, 1, 1]} : vector<2x4x324xf32> to vector<2x1x324xf32>
    %503 = vector.shape_cast %501 : vector<4x1xf32> to vector<1x4x1xf32>
    %504 = vector.broadcast %503 : vector<1x4x1xf32> to vector<2x4x324xf32>
    %505 = vector.broadcast %502 : vector<2x1x324xf32> to vector<2x4x324xf32>
    %506 = arith.mulf %504, %505 : vector<2x4x324xf32>
    %507 = arith.addf %500, %506 : vector<2x4x324xf32>
    %508 = vector.extract_strided_slice %274 {offsets = [0, 0, 55], sizes = [2, 4, 324], strides = [1, 1, 1]} : vector<2x4x396xf32> to vector<2x4x324xf32>
    %509 = vector.extract_strided_slice %2 {offsets = [0, 32], sizes = [4, 1], strides = [1, 1]} : vector<4x36xf32> to vector<4x1xf32>
    %510 = vector.extract_strided_slice %508 {offsets = [0, 0, 0], sizes = [2, 1, 324], strides = [1, 1, 1]} : vector<2x4x324xf32> to vector<2x1x324xf32>
    %511 = vector.shape_cast %509 : vector<4x1xf32> to vector<1x4x1xf32>
    %512 = vector.broadcast %511 : vector<1x4x1xf32> to vector<2x4x324xf32>
    %513 = vector.broadcast %510 : vector<2x1x324xf32> to vector<2x4x324xf32>
    %514 = arith.mulf %512, %513 : vector<2x4x324xf32>
    %515 = arith.addf %507, %514 : vector<2x4x324xf32>
    %516 = vector.extract_strided_slice %2 {offsets = [0, 33], sizes = [4, 1], strides = [1, 1]} : vector<4x36xf32> to vector<4x1xf32>
    %517 = vector.extract_strided_slice %508 {offsets = [0, 1, 0], sizes = [2, 1, 324], strides = [1, 1, 1]} : vector<2x4x324xf32> to vector<2x1x324xf32>
    %518 = vector.shape_cast %516 : vector<4x1xf32> to vector<1x4x1xf32>
    %519 = vector.broadcast %518 : vector<1x4x1xf32> to vector<2x4x324xf32>
    %520 = vector.broadcast %517 : vector<2x1x324xf32> to vector<2x4x324xf32>
    %521 = arith.mulf %519, %520 : vector<2x4x324xf32>
    %522 = arith.addf %515, %521 : vector<2x4x324xf32>
    %523 = vector.extract_strided_slice %2 {offsets = [0, 34], sizes = [4, 1], strides = [1, 1]} : vector<4x36xf32> to vector<4x1xf32>
    %524 = vector.extract_strided_slice %508 {offsets = [0, 2, 0], sizes = [2, 1, 324], strides = [1, 1, 1]} : vector<2x4x324xf32> to vector<2x1x324xf32>
    %525 = vector.shape_cast %523 : vector<4x1xf32> to vector<1x4x1xf32>
    %526 = vector.broadcast %525 : vector<1x4x1xf32> to vector<2x4x324xf32>
    %527 = vector.broadcast %524 : vector<2x1x324xf32> to vector<2x4x324xf32>
    %528 = arith.mulf %526, %527 : vector<2x4x324xf32>
    %529 = arith.addf %522, %528 : vector<2x4x324xf32>
    %530 = vector.extract_strided_slice %2 {offsets = [0, 35], sizes = [4, 1], strides = [1, 1]} : vector<4x36xf32> to vector<4x1xf32>
    %531 = vector.extract_strided_slice %508 {offsets = [0, 3, 0], sizes = [2, 1, 324], strides = [1, 1, 1]} : vector<2x4x324xf32> to vector<2x1x324xf32>
    %532 = vector.shape_cast %530 : vector<4x1xf32> to vector<1x4x1xf32>
    %533 = vector.broadcast %532 : vector<1x4x1xf32> to vector<2x4x324xf32>
    %534 = vector.broadcast %531 : vector<2x1x324xf32> to vector<2x4x324xf32>
    %535 = arith.mulf %533, %534 : vector<2x4x324xf32>
    %536 = arith.addf %529, %535 : vector<2x4x324xf32>
    %c0_12 = arith.constant 0 : index
    %c0_13 = arith.constant 0 : index
    %537 = vector.load %arg5[%c0_12, %c0_13] : memref<4x1xf32, #tpu.memory_space<vmem>>, vector<4x1xf32>
    %538 = vector.shape_cast %537 : vector<4x1xf32> to vector<1x4x1xf32>
    %539 = vector.broadcast %538 : vector<1x4x1xf32> to vector<2x4x324xf32>
    %540 = arith.addf %536, %539 : vector<2x4x324xf32>
    %541 = vector.extract_strided_slice %0 {offsets = [0, 0, 72], sizes = [2, 4, 324], strides = [1, 1, 1]} : vector<2x4x468xf32> to vector<2x4x324xf32>
    %542 = arith.addf %540, %541 : vector<2x4x324xf32>
    %cst_14 = arith.constant 0.000000e+00 : f32
    %543 = vector.broadcast %cst_14 : f32 to vector<2x4x324xf32>
    %544 = arith.maximumf %542, %543 : vector<2x4x324xf32>
    %c0_15 = arith.constant 0 : index
    %c0_16 = arith.constant 0 : index
    %c0_17 = arith.constant 0 : index
    %545 = vector.load %arg7[%c0_15, %c0_16, %c0_17] : memref<2x4x324xf32, #tpu.memory_space<vmem>>, vector<2x4x324xf32>
    tpu.vector_store %arg7[%c0_15, %c0_16, %c0_17], %544 {strides = array<i32>} : memref<2x4x324xf32, #tpu.memory_space<vmem>>, vector<2x4x324xf32>,
    return
  }
  func.func @transform_0(%arg0: i32) -> (i32, i32, i32) {
    %c0_i32 = arith.constant 0 : i32
    %c0_i32_0 = arith.constant 0 : i32
    %c0_i32_1 = arith.constant 0 : i32
    return %arg0, %c0_i32, %c0_i32_0 : i32, i32, i32
  }
  func.func @transform_1(%arg0: i32) -> (i32, i32) {
    %c0_i32 = arith.constant 0 : i32
    %c0_i32_0 = arith.constant 0 : i32
    %c0_i32_1 = arith.constant 0 : i32
    return %c0_i32, %c0_i32_0 : i32, i32
  }
  func.func @transform_2(%arg0: i32) -> (i32, i32) {
    %c0_i32 = arith.constant 0 : i32
    %c0_i32_0 = arith.constant 0 : i32
    %c0_i32_1 = arith.constant 0 : i32
    return %c0_i32, %c0_i32_0 : i32, i32
  }
  func.func @transform_3(%arg0: i32) -> (i32, i32) {
    %c0_i32 = arith.constant 0 : i32
    %c0_i32_0 = arith.constant 0 : i32
    %c0_i32_1 = arith.constant 0 : i32
    return %c0_i32, %c0_i32_0 : i32, i32
  }
  func.func @transform_4(%arg0: i32) -> (i32, i32) {
    %c0_i32 = arith.constant 0 : i32
    %c0_i32_0 = arith.constant 0 : i32
    %c0_i32_1 = arith.constant 0 : i32
    return %c0_i32, %c0_i32_0 : i32, i32
  }
  func.func @transform_5(%arg0: i32) -> (i32, i32) {
    %c0_i32 = arith.constant 0 : i32
    %c0_i32_0 = arith.constant 0 : i32
    %c0_i32_1 = arith.constant 0 : i32
    return %c0_i32, %c0_i32_0 : i32, i32
  }
  func.func @transform_6(%arg0: i32) -> (i32, i32, i32) {
    %c0_i32 = arith.constant 0 : i32
    %c0_i32_0 = arith.constant 0 : i32
    %c0_i32_1 = arith.constant 0 : i32
    return %arg0, %c0_i32, %c0_i32_0 : i32, i32, i32
  }
}

</mosaic_0001>

<llo_original>
// kernel: tpu_custom_call.1
$region0: #{tpu_custom_call.1}
  #allocation0 [shape = 'u32[]', space=smem, size = 0x4, offset = 0x4, fixed_abs, tag = 'smem constant byte address 0x4 - core index']
  #allocation1 [shape = 'u32[144,128]{1,0:T(1,128)}', space=vmem, size = 0x12000, scoped, tag = 'internal scratch']
  %s0 = inlined_call_operand.hbm [shape: f32[4,4,468], index: 0, kind: input, shape index: {}]
  %s1 = inlined_call_operand.vmem [shape: f32[4,36], index: 1, kind: input, shape index: {}]
  %s2 = inlined_call_operand.vmem [shape: f32[4,36], index: 2, kind: input, shape index: {}]
  %s3 = inlined_call_operand.vmem [shape: f32[4,1], index: 3, kind: input, shape index: {}]
  %s4 = inlined_call_operand.vmem [shape: f32[4,1], index: 4, kind: input, shape index: {}]
  %s5 = inlined_call_operand.vmem [shape: f32[1,396], index: 5, kind: input, shape index: {}]
  %s6 = inlined_call_operand.hbm [shape: f32[4,4,324], index: 6, kind: output, shape index: {}]
  %s7 = sld [smem:[#allocation0]]
  $region61: #{tpu_custom_call.1} parent=0
    _
  %s9 = ssub.s32 1, %s7
  %s10 = scalar_select 0, %s9, %s7
  $region1: #{tpu_custom_call.1} parent=0
    #allocation2 [shape = 'u8[32768]{0}', space=vmem, size = 0x8000, scoped, tag = 'input window, operand 0']
    #allocation3 [shape = 's32[2]{0}', space=sflag, size = 0x8, scoped, tag = 'scoped memory for tpu_custom_call.1']
    #allocation4 [shape = 's32[2]{0}', space=sflag, size = 0x8, scoped, tag = 'scoped memory for tpu_custom_call.1']
    #allocation5 [shape = 'u8[24576]{0}', space=vmem, size = 0x6000, scoped, tag = 'output window, operand 0']
    %11 = vsyncpa [#allocation3], 0
    %s12 = scalar_lea.sflag [#allocation3], 1
    %13 = vsyncpa %s12, 0
    %14 = vsyncpa [#allocation4], 0
    %s15 = scalar_lea.sflag [#allocation4], 1
    %16 = vsyncpa %s15, 0
    loop: start=0, step=1, limit=4
    $region2: #{tpu_custom_call.1} parent=1 // loop_pre_header
      _
    $region3: #{tpu_custom_call.1} parent=1 // loop_header
      %s18 = sphi 0, %s22
      %p19 = scmp.ge.s32.totalorder %s18, 4
      %s28 = sphi 0, %s30
      %s31 = sphi 0, %s28
      %s32 = sphi 0, %s31
      %s48 = sphi 0, %s32
      %s52 = sphi 0, %s52
      %s54 = sphi 0, %s52
      %s55 = sphi 0, %s54
      %s69 = sphi 0, %s55
      %s73 = sphi 0, %s73
      %s75 = sphi 0, %s73
      %s76 = sphi 0, %s75
      %s90 = sphi 0, %s76
      %s94 = sphi 0, %s94
      %s96 = sphi 0, %s94
      %s97 = sphi 0, %s96
      %s111 = sphi 0, %s97
      %s115 = sphi 0, %s115
      %s117 = sphi 0, %s115
      %s118 = sphi 0, %s117
      %s132 = sphi 0, %s118
      %s136 = sphi 0, %s136
      %s138 = sphi 0, %s136
      %s139 = sphi 0, %s138
      %s153 = sphi 0, %s139
      %s159 = sphi 0, %s161
      %s162 = sphi 0, %s159
      %s163 = sphi 0, %s162
      %s179 = sphi 0, %s163
    $region4: #{tpu_custom_call.1} parent=1 // loop_header_branch
      %21 = sbr.rel (%p19) target = $region8
    $region5: #{tpu_custom_call.1} parent=1 // loop_body
      %s23 = ssub.s32 %s18, 1
      %s24 = ssub.s32 %s18, 2
      %s25 = sadd.s32 %s18, 1
      %s26 = ssub.s32 %s18, %s25
      %p27 = scmp.eq.s32.totalorder %s26, 0
      %s29 = sadd.s32 %s28, 1
      %s30 = scalar_select %p27, %s28, %s29
      %p33 = pneg %p27
      %p34 = scmp.eq.s32.totalorder %s18, 1
      %p35 = por %p33, %p34
      %p36 = scmp.ne.s32.totalorder %s28, %s31
      %p37 = scmp.eq.s32.totalorder %s18, 0
      %p38 = por %p36, %p37
      %p39 = scmp.ne.s32.totalorder %s28, %s31
      %p40 = scmp.eq.s32.totalorder %s23, 1
      %p41 = por %p39, %p40
      %p42 = scmp.ne.s32.totalorder %s31, %s32
      %p43 = scmp.eq.s32.totalorder %s23, 0
      %p44 = por %p42, %p43
      %p45 = scmp.ne.s32.totalorder %s31, %s32
      %p46 = scmp.eq.s32.totalorder %s24, 1
      %p47 = por %p45, %p46
      %p49 = scmp.ne.s32.totalorder %s32, %s48
      %p50 = scmp.eq.s32.totalorder %s24, 0
      %p51 = por %p49, %p50
      %s53 = sadd.s32 %s52, 1
      %p56 = scmp.eq.s32.totalorder %s18, 1
      %p57 = scmp.ne.s32.totalorder %s52, %s54
      %p58 = scmp.eq.s32.totalorder %s18, 0
      %p59 = por %p57, %p58
      %p60 = scmp.ne.s32.totalorder %s52, %s54
      %p61 = scmp.eq.s32.totalorder %s23, 1
      %p62 = por %p60, %p61
      %p63 = scmp.ne.s32.totalorder %s54, %s55
      %p64 = scmp.eq.s32.totalorder %s23, 0
      %p65 = por %p63, %p64
      %p66 = scmp.ne.s32.totalorder %s54, %s55
      %p67 = scmp.eq.s32.totalorder %s24, 1
      %p68 = por %p66, %p67
      %p70 = scmp.ne.s32.totalorder %s55, %s69
      %p71 = scmp.eq.s32.totalorder %s24, 0
      %p72 = por %p70, %p71
      %s74 = sadd.s32 %s73, 1
      %p77 = scmp.eq.s32.totalorder %s18, 1
      %p78 = scmp.ne.s32.totalorder %s73, %s75
      %p79 = scmp.eq.s32.totalorder %s18, 0
      %p80 = por %p78, %p79
      %p81 = scmp.ne.s32.totalorder %s73, %s75
      %p82 = scmp.eq.s32.totalorder %s23, 1
      %p83 = por %p81, %p82
      %p84 = scmp.ne.s32.totalorder %s75, %s76
      %p85 = scmp.eq.s32.totalorder %s23, 0
      %p86 = por %p84, %p85
      %p87 = scmp.ne.s32.totalorder %s75, %s76
      %p88 = scmp.eq.s32.totalorder %s24, 1
      %p89 = por %p87, %p88
      %p91 = scmp.ne.s32.totalorder %s76, %s90
      %p92 = scmp.eq.s32.totalorder %s24, 0
      %p93 = por %p91, %p92
      %s95 = sadd.s32 %s94, 1
      %p98 = scmp.eq.s32.totalorder %s18, 1
      %p99 = scmp.ne.s32.totalorder %s94, %s96
      %p100 = scmp.eq.s32.totalorder %s18, 0
      %p101 = por %p99, %p100
      %p102 = scmp.ne.s32.totalorder %s94, %s96
      %p103 = scmp.eq.s32.totalorder %s23, 1
      %p104 = por %p102, %p103
      %p105 = scmp.ne.s32.totalorder %s96, %s97
      %p106 = scmp.eq.s32.totalorder %s23, 0
      %p107 = por %p105, %p106
      %p108 = scmp.ne.s32.totalorder %s96, %s97
      %p109 = scmp.eq.s32.totalorder %s24, 1
      %p110 = por %p108, %p109
      %p112 = scmp.ne.s32.totalorder %s97, %s111
      %p113 = scmp.eq.s32.totalorder %s24, 0
      %p114 = por %p112, %p113
      %s116 = sadd.s32 %s115, 1
      %p119 = scmp.eq.s32.totalorder %s18, 1
      %p120 = scmp.ne.s32.totalorder %s115, %s117
      %p121 = scmp.eq.s32.totalorder %s18, 0
      %p122 = por %p120, %p121
      %p123 = scmp.ne.s32.totalorder %s115, %s117
      %p124 = scmp.eq.s32.totalorder %s23, 1
      %p125 = por %p123, %p124
      %p126 = scmp.ne.s32.totalorder %s117, %s118
      %p127 = scmp.eq.s32.totalorder %s23, 0
      %p128 = por %p126, %p127
      %p129 = scmp.ne.s32.totalorder %s117, %s118
      %p130 = scmp.eq.s32.totalorder %s24, 1
      %p131 = por %p129, %p130
      %p133 = scmp.ne.s32.totalorder %s118, %s132
      %p134 = scmp.eq.s32.totalorder %s24, 0
      %p135 = por %p133, %p134
      %s137 = sadd.s32 %s136, 1
      %p140 = scmp.eq.s32.totalorder %s18, 1
      %p141 = scmp.ne.s32.totalorder %s136, %s138
      %p142 = scmp.eq.s32.totalorder %s18, 0
      %p143 = por %p141, %p142
      %p144 = scmp.ne.s32.totalorder %s136, %s138
      %p145 = scmp.eq.s32.totalorder %s23, 1
      %p146 = por %p144, %p145
      %p147 = scmp.ne.s32.totalorder %s138, %s139
      %p148 = scmp.eq.s32.totalorder %s23, 0
      %p149 = por %p147, %p148
      %p150 = scmp.ne.s32.totalorder %s138, %s139
      %p151 = scmp.eq.s32.totalorder %s24, 1
      %p152 = por %p150, %p151
      %p154 = scmp.ne.s32.totalorder %s139, %s153
      %p155 = scmp.eq.s32.totalorder %s24, 0
      %p156 = por %p154, %p155
      %s157 = ssub.s32 %s18, %s25
      %p158 = scmp.eq.s32.totalorder %s157, 0
      %s160 = sadd.s32 %s159, 1
      %s161 = scalar_select %p158, %s159, %s160
      %p164 = pneg %p158
      %p165 = scmp.eq.s32.totalorder %s18, 1
      %p166 = por %p164, %p165
      %p167 = scmp.ne.s32.totalorder %s159, %s162
      %p168 = scmp.eq.s32.totalorder %s18, 0
      %p169 = por %p167, %p168
      %p170 = scmp.ne.s32.totalorder %s159, %s162
      %p171 = scmp.eq.s32.totalorder %s23, 1
      %p172 = por %p170, %p171
      %p173 = scmp.ne.s32.totalorder %s162, %s163
      %p174 = scmp.eq.s32.totalorder %s23, 0
      %p175 = por %p173, %p174
      %p176 = scmp.ne.s32.totalorder %s162, %s163
      %p177 = scmp.eq.s32.totalorder %s24, 1
      %p178 = por %p176, %p177
      %p180 = scmp.ne.s32.totalorder %s163, %s179
      %p181 = scmp.eq.s32.totalorder %s24, 0
      %p182 = por %p180, %p181
      %p183 = scmp.le.s32.totalorder 1, %s18
      %p184 = scmp.lt.s32.totalorder %s18, 3
      %p185 = pnand %p183, %p184
      %p186 = pneg %p185
      // Predicated region
      $region9: #{tpu_custom_call.1} parent=5 // pred_check
        _
      $region10: #{tpu_custom_call.1} parent=5 // pred_check_branch
        %188 = sbr.rel (%p185) target = $region12
      $region11: #{tpu_custom_call.1} parent=5 // pred_region
        %s189 = ssub.s32 %s18, 1
        // Predicated region
        $region13: #{tpu_custom_call.1} parent=11 // pred_check
          %p190 = pneg %p65
        $region14: #{tpu_custom_call.1} parent=11 // pred_check_branch
          %192 = sbr.rel (%p190) target = $region16
        $region15: #{tpu_custom_call.1} parent=11 // pred_region
          _
        $region16: #{tpu_custom_call.1} parent=11 // pred_fallthru
          _
        // Predicated region
        $region17: #{tpu_custom_call.1} parent=11 // pred_check
          %p193 = pneg %p86
        $region18: #{tpu_custom_call.1} parent=11 // pred_check_branch
          %195 = sbr.rel (%p193) target = $region20
        $region19: #{tpu_custom_call.1} parent=11 // pred_region
          _
        $region20: #{tpu_custom_call.1} parent=11 // pred_fallthru
          _
        // Predicated region
        $region21: #{tpu_custom_call.1} parent=11 // pred_check
          %p196 = pneg %p107
        $region22: #{tpu_custom_call.1} parent=11 // pred_check_branch
          %198 = sbr.rel (%p196) target = $region24
        $region23: #{tpu_custom_call.1} parent=11 // pred_region
          _
        $region24: #{tpu_custom_call.1} parent=11 // pred_fallthru
          _
        // Predicated region
        $region25: #{tpu_custom_call.1} parent=11 // pred_check
          %p199 = pneg %p128
        $region26: #{tpu_custom_call.1} parent=11 // pred_check_branch
          %201 = sbr.rel (%p199) target = $region28
        $region27: #{tpu_custom_call.1} parent=11 // pred_region
          _
        $region28: #{tpu_custom_call.1} parent=11 // pred_fallthru
          _
        // Predicated region
        $region29: #{tpu_custom_call.1} parent=11 // pred_check
          %p202 = pneg %p149
        $region30: #{tpu_custom_call.1} parent=11 // pred_check_branch
          %204 = sbr.rel (%p202) target = $region32
        $region31: #{tpu_custom_call.1} parent=11 // pred_region
          _
        $region32: #{tpu_custom_call.1} parent=11 // pred_fallthru
          _
      $region12: #{tpu_custom_call.1} parent=5 // pred_fallthru
        _
      %p205 = scmp.lt.s32.totalorder %s18, 2
      // Predicated region
      $region33: #{tpu_custom_call.1} parent=5 // pred_check
        %p206 = pneg %p205
      $region34: #{tpu_custom_call.1} parent=5 // pred_check_branch
        %208 = sbr.rel (%p206) target = $region36
      $region35: #{tpu_custom_call.1} parent=5 // pred_region
        // Predicated region
        $region37: #{tpu_custom_call.1} parent=35 // pred_check
          %p209 = pneg %p38
        $region38: #{tpu_custom_call.1} parent=35 // pred_check_branch
          %211 = sbr.rel (%p209) target = $region40
        $region39: #{tpu_custom_call.1} parent=35 // pred_region
          %s212 = sand.u32 %s28, 1
          %s213 = scalar_lea.sflag [#allocation3], %s212
          %s214 = sand.u32 %s28, 1
          %s215 = smul.addr %s214, 32
          %s216 = scalar_lea.vmem [#allocation2], %s215
          %s217 = smul.u32 2, %s18
          %s219 = ssub.s32 512, 512
          %220 = vsyncadd %s213, %s219
          %s221 = smul.addr %s217, 4
          %s222 = smul.addr %s221, 64
          %s223 = scalar_lea.hbm %s0, %s222
          %s224 = sshll.u32 %s216, 4
          %s225 = int_to_ptr.vmem [resolvable:$true] %s224
          %230 = dma.hbm_to_vmem [thread:$0]  %s223, 512, %s225, %s213, 256, 256, 16
        $region40: #{tpu_custom_call.1} parent=35 // pred_fallthru
          _
      $region36: #{tpu_custom_call.1} parent=5 // pred_fallthru
        _
      %p231 = scmp.le.s32.totalorder 1, %s18
      %p232 = scmp.lt.s32.totalorder %s18, 3
      %p233 = pnand %p231, %p232
      %p234 = pneg %p233
      // Predicated region
      $region41: #{tpu_custom_call.1} parent=5 // pred_check
        _
      $region42: #{tpu_custom_call.1} parent=5 // pred_check_branch
        %236 = sbr.rel (%p233) target = $region44
      $region43: #{tpu_custom_call.1} parent=5 // pred_region
        %s237 = ssub.s32 %s18, 1
        %s238 = sand.u32 %s31, 1
        %s239 = scalar_lea.sflag [#allocation3], %s238
        %s240 = sand.u32 %s31, 1
        %s241 = smul.addr %s240, 32
        %s242 = scalar_lea.vmem [#allocation2], %s241
        // Predicated region
        $region45: #{tpu_custom_call.1} parent=43 // pred_check
          %p243 = pneg %p44
        $region46: #{tpu_custom_call.1} parent=43 // pred_check_branch
          %245 = sbr.rel (%p243) target = $region48
        $region47: #{tpu_custom_call.1} parent=43 // pred_region
          %246 = dma.done %s239, 512
        $region48: #{tpu_custom_call.1} parent=43 // pred_fallthru
          _
        %s247 = sand.u32 %s31, 1
        %s248 = scalar_lea.sflag [#allocation3], %s247
        %s249 = sand.u32 %s31, 1
        %s250 = smul.addr %s249, 32
        %s251 = scalar_lea.vmem [#allocation2], %s250
        %p252 = pneg %p44
        %p253 = pneg %p41
        %p254 = pneg %p65
        %p255 = pneg %p62
        %p256 = pneg %p86
        %p257 = pneg %p83
        %p258 = pneg %p107
        %p259 = pneg %p104
        %p260 = pneg %p128
        %p261 = pneg %p125
        %p262 = pneg %p149
        %p263 = pneg %p146
        %p264 = pneg %p175
        %p265 = pneg %p172
        %s266 = sand.u32 %s162, 1
        %s267 = scalar_lea.sflag [#allocation4], %s266
        %s268 = sand.u32 %s162, 1
        %s269 = smul.addr %s268, 24
        %s270 = scalar_lea.vmem [#allocation5], %s269
        %s271 = smul.u32 2, %s23
        %s272 = smul.u32 2, %s23
        %v273 = vld [vmem:[%s242] sm:$0xff]
        %v274 = vld [vmem:[%s242 + $0x8] sm:$0xff]
        %v275 = vld [vmem:[%s242 + $0x10] sm:$0xff]
        %v276 = vld [vmem:[%s242 + $0x18] sm:$0xff]
        %v277 = vld [vmem:[%s1] sm:$0xf]
        %v278 = vld [vmem:[%s2] sm:$0xf]
        %280 = vset.pattern.permute.xlu0 0
        %281 = vperm.xlu0 %280, %v277
        %v282 = vpop.permute.xlu0 %281
        %v288 = vlaneseq
        %v289 = vshrl.u32 %v288, 7
        %v290 = vsub.s32 0, %v289
        %v291 = vrot.slane %v273, %v290
        %v292 = vlaneseq
        %v293 = vshrl.u32 %v292, 7
        %v294 = vsub.s32 4, %v293
        %v295 = vrot.slane %v273, %v294
        %v296 = vlaneseq
        %v297 = vshrl.u32 %v296, 7
        %v298 = vsub.s32 0, %v297
        %v299 = vrot.slane %v274, %v298
        %v300 = vlaneseq
        %v301 = vshrl.u32 %v300, 7
        %v302 = vsub.s32 4, %v301
        %v303 = vrot.slane %v274, %v302
        %v304 = vlaneseq
        %v305 = vshrl.u32 %v304, 7
        %v306 = vsub.s32 0, %v305
        %v307 = vrot.slane %v275, %v306
        %v308 = vlaneseq
        %v309 = vshrl.u32 %v308, 7
        %v310 = vsub.s32 4, %v309
        %v311 = vrot.slane %v275, %v310
        %v312 = vlaneseq
        %v313 = vshrl.u32 %v312, 7
        %v314 = vsub.s32 0, %v313
        %v315 = vrot.slane %v276, %v314
        %v316 = vlaneseq
        %v317 = vshrl.u32 %v316, 7
        %v318 = vsub.s32 4, %v317
        %v319 = vrot.slane %v276, %v318
        %v328 = vlaneseq
        %v329 = vshrl.u32 %v328, 7
        %v330 = vsub.s32 0, %v329
        %v331 = vrot.slane %v291, %v330
        %v332 = vlaneseq
        %v333 = vshrl.u32 %v332, 7
        %v334 = vsub.s32 0, %v333
        %v335 = vrot.slane %v295, %v334
        %v336 = vlaneseq
        %v337 = vshrl.u32 %v336, 7
        %v338 = vsub.s32 0, %v337
        %v339 = vrot.slane %v299, %v338
        %v340 = vlaneseq
        %v341 = vshrl.u32 %v340, 7
        %v342 = vsub.s32 0, %v341
        %v343 = vrot.slane %v303, %v342
        %v344 = vlaneseq
        %v345 = vshrl.u32 %v344, 7
        %v346 = vsub.s32 0, %v345
        %v347 = vrot.slane %v307, %v346
        %v348 = vlaneseq
        %v349 = vshrl.u32 %v348, 7
        %v350 = vsub.s32 0, %v349
        %v351 = vrot.slane %v311, %v350
        %v352 = vlaneseq
        %v353 = vshrl.u32 %v352, 7
        %v354 = vsub.s32 0, %v353
        %v355 = vrot.slane %v315, %v354
        %v356 = vlaneseq
        %v357 = vshrl.u32 %v356, 7
        %v358 = vsub.s32 0, %v357
        %v359 = vrot.slane %v319, %v358
        %v360 = vmul.f32 %v282, %v331
        %v361 = vmul.f32 %v282, %v335
        %v362 = vmul.f32 %v282, %v339
        %v363 = vmul.f32 %v282, %v343
        %v364 = vmul.f32 %v282, %v347
        %v365 = vmul.f32 %v282, %v351
        %v366 = vmul.f32 %v282, %v355
        %v367 = vmul.f32 %v282, %v359
        %v368 = vadd.f32 %v360, 0.0
        %v369 = vadd.f32 %v361, 0.0
        %v370 = vadd.f32 %v362, 0.0
        %v371 = vadd.f32 %v363, 0.0
        %v372 = vadd.f32 %v364, 0.0
        %v373 = vadd.f32 %v365, 0.0
        %v374 = vadd.f32 %v366, 0.0
        %v375 = vadd.f32 %v367, 0.0
        %376 = vset.pattern.permute.xlu0 1
        %377 = vperm.xlu0 %376, %v277
        %v378 = vpop.permute.xlu0 %377
        %v380 = vlaneseq
        %v381 = vshrl.u32 %v380, 7
        %v382 = vsub.s32 1, %v381
        %v383 = vrot.slane %v273, %v382
        %v384 = vlaneseq
        %v385 = vshrl.u32 %v384, 7
        %v386 = vsub.s32 5, %v385
        %v387 = vrot.slane %v273, %v386
        %v388 = vlaneseq
        %v389 = vshrl.u32 %v388, 7
        %v390 = vsub.s32 1, %v389
        %v391 = vrot.slane %v274, %v390
        %v392 = vlaneseq
        %v393 = vshrl.u32 %v392, 7
        %v394 = vsub.s32 5, %v393
        %v395 = vrot.slane %v274, %v394
        %v396 = vlaneseq
        %v397 = vshrl.u32 %v396, 7
        %v398 = vsub.s32 1, %v397
        %v399 = vrot.slane %v275, %v398
        %v400 = vlaneseq
        %v401 = vshrl.u32 %v400, 7
        %v402 = vsub.s32 5, %v401
        %v403 = vrot.slane %v275, %v402
        %v404 = vlaneseq
        %v405 = vshrl.u32 %v404, 7
        %v406 = vsub.s32 1, %v405
        %v407 = vrot.slane %v276, %v406
        %v408 = vlaneseq
        %v409 = vshrl.u32 %v408, 7
        %v410 = vsub.s32 5, %v409
        %v411 = vrot.slane %v276, %v410
        %v420 = vlaneseq
        %v421 = vshrl.u32 %v420, 7
        %v422 = vsub.s32 1, %v421
        %v423 = vrot.slane %v383, %v422
        %v424 = vlaneseq
        %v425 = vshrl.u32 %v424, 7
        %v426 = vsub.s32 1, %v425
        %v427 = vrot.slane %v387, %v426
        %v428 = vlaneseq
        %v429 = vshrl.u32 %v428, 7
        %v430 = vsub.s32 1, %v429
        %v431 = vrot.slane %v391, %v430
        %v432 = vlaneseq
        %v433 = vshrl.u32 %v432, 7
        %v434 = vsub.s32 1, %v433
        %v435 = vrot.slane %v395, %v434
        %v436 = vlaneseq
        %v437 = vshrl.u32 %v436, 7
        %v438 = vsub.s32 1, %v437
        %v439 = vrot.slane %v399, %v438
        %v440 = vlaneseq
        %v441 = vshrl.u32 %v440, 7
        %v442 = vsub.s32 1, %v441
        %v443 = vrot.slane %v403, %v442
        %v444 = vlaneseq
        %v445 = vshrl.u32 %v444, 7
        %v446 = vsub.s32 1, %v445
        %v447 = vrot.slane %v407, %v446
        %v448 = vlaneseq
        %v449 = vshrl.u32 %v448, 7
        %v450 = vsub.s32 1, %v449
        %v451 = vrot.slane %v411, %v450
        %v452 = vmul.f32 %v378, %v423
        %v453 = vmul.f32 %v378, %v427
        %v454 = vmul.f32 %v378, %v431
        %v455 = vmul.f32 %v378, %v435
        %v456 = vmul.f32 %v378, %v439
        %v457 = vmul.f32 %v378, %v443
        %v458 = vmul.f32 %v378, %v447
        %v459 = vmul.f32 %v378, %v451
        %v460 = vadd.f32 %v368, %v452
        %v461 = vadd.f32 %v369, %v453
        %v462 = vadd.f32 %v370, %v454
        %v463 = vadd.f32 %v371, %v455
        %v464 = vadd.f32 %v372, %v456
        %v465 = vadd.f32 %v373, %v457
        %v466 = vadd.f32 %v374, %v458
        %v467 = vadd.f32 %v375, %v459
        %468 = vset.pattern.permute.xlu0 2
        %469 = vperm.xlu0 %468, %v277
        %v470 = vpop.permute.xlu0 %469
        %v472 = vlaneseq
        %v473 = vshrl.u32 %v472, 7
        %v474 = vsub.s32 2, %v473
        %v475 = vrot.slane %v273, %v474
        %v476 = vlaneseq
        %v477 = vshrl.u32 %v476, 7
        %v478 = vsub.s32 6, %v477
        %v479 = vrot.slane %v273, %v478
        %v480 = vlaneseq
        %v481 = vshrl.u32 %v480, 7
        %v482 = vsub.s32 2, %v481
        %v483 = vrot.slane %v274, %v482
        %v484 = vlaneseq
        %v485 = vshrl.u32 %v484, 7
        %v486 = vsub.s32 6, %v485
        %v487 = vrot.slane %v274, %v486
        %v488 = vlaneseq
        %v489 = vshrl.u32 %v488, 7
        %v490 = vsub.s32 2, %v489
        %v491 = vrot.slane %v275, %v490
        %v492 = vlaneseq
        %v493 = vshrl.u32 %v492, 7
        %v494 = vsub.s32 6, %v493
        %v495 = vrot.slane %v275, %v494
        %v496 = vlaneseq
        %v497 = vshrl.u32 %v496, 7
        %v498 = vsub.s32 2, %v497
        %v499 = vrot.slane %v276, %v498
        %v500 = vlaneseq
        %v501 = vshrl.u32 %v500, 7
        %v502 = vsub.s32 6, %v501
        %v503 = vrot.slane %v276, %v502
        %v512 = vlaneseq
        %v513 = vshrl.u32 %v512, 7
        %v514 = vsub.s32 2, %v513
        %v515 = vrot.slane %v475, %v514
        %v516 = vlaneseq
        %v517 = vshrl.u32 %v516, 7
        %v518 = vsub.s32 2, %v517
        %v519 = vrot.slane %v479, %v518
        %v520 = vlaneseq
        %v521 = vshrl.u32 %v520, 7
        %v522 = vsub.s32 2, %v521
        %v523 = vrot.slane %v483, %v522
        %v524 = vlaneseq
        %v525 = vshrl.u32 %v524, 7
        %v526 = vsub.s32 2, %v525
        %v527 = vrot.slane %v487, %v526
        %v528 = vlaneseq
        %v529 = vshrl.u32 %v528, 7
        %v530 = vsub.s32 2, %v529
        %v531 = vrot.slane %v491, %v530
        %v532 = vlaneseq
        %v533 = vshrl.u32 %v532, 7
        %v534 = vsub.s32 2, %v533
        %v535 = vrot.slane %v495, %v534
        %v536 = vlaneseq
        %v537 = vshrl.u32 %v536, 7
        %v538 = vsub.s32 2, %v537
        %v539 = vrot.slane %v499, %v538
        %v540 = vlaneseq
        %v541 = vshrl.u32 %v540, 7
        %v542 = vsub.s32 2, %v541
        %v543 = vrot.slane %v503, %v542
        %v544 = vmul.f32 %v470, %v515
        %v545 = vmul.f32 %v470, %v519
        %v546 = vmul.f32 %v470, %v523
        %v547 = vmul.f32 %v470, %v527
        %v548 = vmul.f32 %v470, %v531
        %v549 = vmul.f32 %v470, %v535
        %v550 = vmul.f32 %v470, %v539
        %v551 = vmul.f32 %v470, %v543
        %v552 = vadd.f32 %v460, %v544
        %v553 = vadd.f32 %v461, %v545
        %v554 = vadd.f32 %v462, %v546
        %v555 = vadd.f32 %v463, %v547
        %v556 = vadd.f32 %v464, %v548
        %v557 = vadd.f32 %v465, %v549
        %v558 = vadd.f32 %v466, %v550
        %v559 = vadd.f32 %v467, %v551
        %560 = vset.pattern.permute.xlu0 3
        %561 = vperm.xlu0 %560, %v277
        %v562 = vpop.permute.xlu0 %561
        %v564 = vlaneseq
        %v565 = vshrl.u32 %v564, 7
        %v566 = vsub.s32 3, %v565
        %v567 = vrot.slane %v273, %v566
        %v568 = vlaneseq
        %v569 = vshrl.u32 %v568, 7
        %v570 = vsub.s32 7, %v569
        %v571 = vrot.slane %v273, %v570
        %v572 = vlaneseq
        %v573 = vshrl.u32 %v572, 7
        %v574 = vsub.s32 3, %v573
        %v575 = vrot.slane %v274, %v574
        %v576 = vlaneseq
        %v577 = vshrl.u32 %v576, 7
        %v578 = vsub.s32 7, %v577
        %v579 = vrot.slane %v274, %v578
        %v580 = vlaneseq
        %v581 = vshrl.u32 %v580, 7
        %v582 = vsub.s32 3, %v581
        %v583 = vrot.slane %v275, %v582
        %v584 = vlaneseq
        %v585 = vshrl.u32 %v584, 7
        %v586 = vsub.s32 7, %v585
        %v587 = vrot.slane %v275, %v586
        %v588 = vlaneseq
        %v589 = vshrl.u32 %v588, 7
        %v590 = vsub.s32 3, %v589
        %v591 = vrot.slane %v276, %v590
        %v592 = vlaneseq
        %v593 = vshrl.u32 %v592, 7
        %v594 = vsub.s32 7, %v593
        %v595 = vrot.slane %v276, %v594
        %v604 = vlaneseq
        %v605 = vshrl.u32 %v604, 7
        %v606 = vsub.s32 3, %v605
        %v607 = vrot.slane %v567, %v606
        %v608 = vlaneseq
        %v609 = vshrl.u32 %v608, 7
        %v610 = vsub.s32 3, %v609
        %v611 = vrot.slane %v571, %v610
        %v612 = vlaneseq
        %v613 = vshrl.u32 %v612, 7
        %v614 = vsub.s32 3, %v613
        %v615 = vrot.slane %v575, %v614
        %v616 = vlaneseq
        %v617 = vshrl.u32 %v616, 7
        %v618 = vsub.s32 3, %v617
        %v619 = vrot.slane %v579, %v618
        %v620 = vlaneseq
        %v621 = vshrl.u32 %v620, 7
        %v622 = vsub.s32 3, %v621
        %v623 = vrot.slane %v583, %v622
        %v624 = vlaneseq
        %v625 = vshrl.u32 %v624, 7
        %v626 = vsub.s32 3, %v625
        %v627 = vrot.slane %v587, %v626
        %v628 = vlaneseq
        %v629 = vshrl.u32 %v628, 7
        %v630 = vsub.s32 3, %v629
        %v631 = vrot.slane %v591, %v630
        %v632 = vlaneseq
        %v633 = vshrl.u32 %v632, 7
        %v634 = vsub.s32 3, %v633
        %v635 = vrot.slane %v595, %v634
        %v636 = vmul.f32 %v562, %v607
        %v637 = vmul.f32 %v562, %v611
        %v638 = vmul.f32 %v562, %v615
        %v639 = vmul.f32 %v562, %v619
        %v640 = vmul.f32 %v562, %v623
        %v641 = vmul.f32 %v562, %v627
        %v642 = vmul.f32 %v562, %v631
        %v643 = vmul.f32 %v562, %v635
        %v644 = vadd.f32 %v552, %v636
        %v645 = vadd.f32 %v553, %v637
        %v646 = vadd.f32 %v554, %v638
        %v647 = vadd.f32 %v555, %v639
        %v648 = vadd.f32 %v556, %v640
        %v649 = vadd.f32 %v557, %v641
        %v650 = vadd.f32 %v558, %v642
        %v651 = vadd.f32 %v559, %v643
        %652 = vset.pattern.permute.xlu0 4
        %653 = vperm.xlu0 %652, %v277
        %v654 = vpop.permute.xlu0 %653
        %v656 = vmul.f32 %v654, %v331
        %v657 = vmul.f32 %v654, %v335
        %v658 = vmul.f32 %v654, %v339
        %v659 = vmul.f32 %v654, %v343
        %v660 = vmul.f32 %v654, %v347
        %v661 = vmul.f32 %v654, %v351
        %v662 = vmul.f32 %v654, %v355
        %v663 = vmul.f32 %v654, %v359
        %672 = vrot.lane.b32.xlu0 %v656, 127
        %v673 = vpop.permute.xlu0 %672
        %674 = vrot.lane.b32.xlu0 %v657, 127
        %v675 = vpop.permute.xlu0 %674
        %676 = vrot.lane.b32.xlu0 %v658, 127
        %v677 = vpop.permute.xlu0 %676
        %678 = vrot.lane.b32.xlu0 %v659, 127
        %v679 = vpop.permute.xlu0 %678
        %680 = vrot.lane.b32.xlu0 %v660, 127
        %v681 = vpop.permute.xlu0 %680
        %682 = vrot.lane.b32.xlu0 %v661, 127
        %v683 = vpop.permute.xlu0 %682
        %684 = vrot.lane.b32.xlu0 %v662, 127
        %v685 = vpop.permute.xlu0 %684
        %686 = vrot.lane.b32.xlu0 %v663, 127
        %v687 = vpop.permute.xlu0 %686
        %vm688 = vcmask 1039360
        %v689 = vsel %vm688, %v673, %v675
        %v690 = vsel %vm688, %v675, %v677
        %v691 = vsel %vm688, %v677, %v679
        %v692 = vsel %vm688, %v681, %v683
        %v693 = vsel %vm688, %v683, %v685
        %v694 = vsel %vm688, %v685, %v687
        %v703 = vadd.f32 %v644, %v689
        %v704 = vadd.f32 %v645, %v690
        %v705 = vadd.f32 %v646, %v691
        %v706 = vadd.f32 %v647, %v679
        %v707 = vadd.f32 %v648, %v692
        %v708 = vadd.f32 %v649, %v693
        %v709 = vadd.f32 %v650, %v694
        %v710 = vadd.f32 %v651, %v687
        %711 = vset.pattern.permute.xlu0 5
        %712 = vperm.xlu0 %711, %v277
        %v713 = vpop.permute.xlu0 %712
        %v715 = vmul.f32 %v713, %v423
        %v716 = vmul.f32 %v713, %v427
        %v717 = vmul.f32 %v713, %v431
        %v718 = vmul.f32 %v713, %v435
        %v719 = vmul.f32 %v713, %v439
        %v720 = vmul.f32 %v713, %v443
        %v721 = vmul.f32 %v713, %v447
        %v722 = vmul.f32 %v713, %v451
        %731 = vrot.lane.b32.xlu0 %v715, 127
        %v732 = vpop.permute.xlu0 %731
        %733 = vrot.lane.b32.xlu0 %v716, 127
        %v734 = vpop.permute.xlu0 %733
        %735 = vrot.lane.b32.xlu0 %v717, 127
        %v736 = vpop.permute.xlu0 %735
        %737 = vrot.lane.b32.xlu0 %v718, 127
        %v738 = vpop.permute.xlu0 %737
        %739 = vrot.lane.b32.xlu0 %v719, 127
        %v740 = vpop.permute.xlu0 %739
        %741 = vrot.lane.b32.xlu0 %v720, 127
        %v742 = vpop.permute.xlu0 %741
        %743 = vrot.lane.b32.xlu0 %v721, 127
        %v744 = vpop.permute.xlu0 %743
        %745 = vrot.lane.b32.xlu0 %v722, 127
        %v746 = vpop.permute.xlu0 %745
        %v747 = vsel %vm688, %v732, %v734
        %v748 = vsel %vm688, %v734, %v736
        %v749 = vsel %vm688, %v736, %v738
        %v750 = vsel %vm688, %v740, %v742
        %v751 = vsel %vm688, %v742, %v744
        %v752 = vsel %vm688, %v744, %v746
        %v761 = vadd.f32 %v703, %v747
        %v762 = vadd.f32 %v704, %v748
        %v763 = vadd.f32 %v705, %v749
        %v764 = vadd.f32 %v706, %v738
        %v765 = vadd.f32 %v707, %v750
        %v766 = vadd.f32 %v708, %v751
        %v767 = vadd.f32 %v709, %v752
        %v768 = vadd.f32 %v710, %v746
        %769 = vset.pattern.permute.xlu0 6
        %770 = vperm.xlu0 %769, %v277
        %v771 = vpop.permute.xlu0 %770
        %v773 = vmul.f32 %v771, %v515
        %v774 = vmul.f32 %v771, %v519
        %v775 = vmul.f32 %v771, %v523
        %v776 = vmul.f32 %v771, %v527
        %v777 = vmul.f32 %v771, %v531
        %v778 = vmul.f32 %v771, %v535
        %v779 = vmul.f32 %v771, %v539
        %v780 = vmul.f32 %v771, %v543
        %789 = vrot.lane.b32.xlu0 %v773, 127
        %v790 = vpop.permute.xlu0 %789
        %791 = vrot.lane.b32.xlu0 %v774, 127
        %v792 = vpop.permute.xlu0 %791
        %793 = vrot.lane.b32.xlu0 %v775, 127
        %v794 = vpop.permute.xlu0 %793
        %795 = vrot.lane.b32.xlu0 %v776, 127
        %v796 = vpop.permute.xlu0 %795
        %797 = vrot.lane.b32.xlu0 %v777, 127
        %v798 = vpop.permute.xlu0 %797
        %799 = vrot.lane.b32.xlu0 %v778, 127
        %v800 = vpop.permute.xlu0 %799
        %801 = vrot.lane.b32.xlu0 %v779, 127
        %v802 = vpop.permute.xlu0 %801
        %803 = vrot.lane.b32.xlu0 %v780, 127
        %v804 = vpop.permute.xlu0 %803
        %v805 = vsel %vm688, %v790, %v792
        %v806 = vsel %vm688, %v792, %v794
        %v807 = vsel %vm688, %v794, %v796
        %v808 = vsel %vm688, %v798, %v800
        %v809 = vsel %vm688, %v800, %v802
        %v810 = vsel %vm688, %v802, %v804
        %v819 = vadd.f32 %v761, %v805
        %v820 = vadd.f32 %v762, %v806
        %v821 = vadd.f32 %v763, %v807
        %v822 = vadd.f32 %v764, %v796
        %v823 = vadd.f32 %v765, %v808
        %v824 = vadd.f32 %v766, %v809
        %v825 = vadd.f32 %v767, %v810
        %v826 = vadd.f32 %v768, %v804
        %827 = vset.pattern.permute.xlu0 7
        %828 = vperm.xlu0 %827, %v277
        %v829 = vpop.permute.xlu0 %828
        %v831 = vmul.f32 %v829, %v607
        %v832 = vmul.f32 %v829, %v611
        %v833 = vmul.f32 %v829, %v615
        %v834 = vmul.f32 %v829, %v619
        %v835 = vmul.f32 %v829, %v623
        %v836 = vmul.f32 %v829, %v627
        %v837 = vmul.f32 %v829, %v631
        %v838 = vmul.f32 %v829, %v635
        %847 = vrot.lane.b32.xlu0 %v831, 127
        %v848 = vpop.permute.xlu0 %847
        %849 = vrot.lane.b32.xlu0 %v832, 127
        %v850 = vpop.permute.xlu0 %849
        %851 = vrot.lane.b32.xlu0 %v833, 127
        %v852 = vpop.permute.xlu0 %851
        %853 = vrot.lane.b32.xlu0 %v834, 127
        %v854 = vpop.permute.xlu0 %853
        %855 = vrot.lane.b32.xlu0 %v835, 127
        %v856 = vpop.permute.xlu0 %855
        %857 = vrot.lane.b32.xlu0 %v836, 127
        %v858 = vpop.permute.xlu0 %857
        %859 = vrot.lane.b32.xlu0 %v837, 127
        %v860 = vpop.permute.xlu0 %859
        %861 = vrot.lane.b32.xlu0 %v838, 127
        %v862 = vpop.permute.xlu0 %861
        %v863 = vsel %vm688, %v848, %v850
        %v864 = vsel %vm688, %v850, %v852
        %v865 = vsel %vm688, %v852, %v854
        %v866 = vsel %vm688, %v856, %v858
        %v867 = vsel %vm688, %v858, %v860
        %v868 = vsel %vm688, %v860, %v862
        %v877 = vadd.f32 %v819, %v863
        %v878 = vadd.f32 %v820, %v864
        %v879 = vadd.f32 %v821, %v865
        %v880 = vadd.f32 %v822, %v854
        %v881 = vadd.f32 %v823, %v866
        %v882 = vadd.f32 %v824, %v867
        %v883 = vadd.f32 %v825, %v868
        %v884 = vadd.f32 %v826, %v862
        %885 = vset.pattern.permute.xlu0 8
        %886 = vperm.xlu0 %885, %v277
        %v887 = vpop.permute.xlu0 %886
        %v889 = vmul.f32 %v887, %v331
        %v890 = vmul.f32 %v887, %v335
        %v891 = vmul.f32 %v887, %v339
        %v892 = vmul.f32 %v887, %v343
        %v893 = vmul.f32 %v887, %v347
        %v894 = vmul.f32 %v887, %v351
        %v895 = vmul.f32 %v887, %v355
        %v896 = vmul.f32 %v887, %v359
        %905 = vrot.lane.b32.xlu0 %v889, 126
        %v906 = vpop.permute.xlu0 %905
        %907 = vrot.lane.b32.xlu0 %v890, 126
        %v908 = vpop.permute.xlu0 %907
        %909 = vrot.lane.b32.xlu0 %v891, 126
        %v910 = vpop.permute.xlu0 %909
        %911 = vrot.lane.b32.xlu0 %v892, 126
        %v912 = vpop.permute.xlu0 %911
        %913 = vrot.lane.b32.xlu0 %v893, 126
        %v914 = vpop.permute.xlu0 %913
        %915 = vrot.lane.b32.xlu0 %v894, 126
        %v916 = vpop.permute.xlu0 %915
        %917 = vrot.lane.b32.xlu0 %v895, 126
        %v918 = vpop.permute.xlu0 %917
        %919 = vrot.lane.b32.xlu0 %v896, 126
        %v920 = vpop.permute.xlu0 %919
        %vm921 = vcmask 1031168
        %v922 = vsel %vm921, %v906, %v908
        %v923 = vsel %vm921, %v908, %v910
        %v924 = vsel %vm921, %v910, %v912
        %v925 = vsel %vm921, %v914, %v916
        %v926 = vsel %vm921, %v916, %v918
        %v927 = vsel %vm921, %v918, %v920
        %v936 = vadd.f32 %v877, %v922
        %v937 = vadd.f32 %v878, %v923
        %v938 = vadd.f32 %v879, %v924
        %v939 = vadd.f32 %v880, %v912
        %v940 = vadd.f32 %v881, %v925
        %v941 = vadd.f32 %v882, %v926
        %v942 = vadd.f32 %v883, %v927
        %v943 = vadd.f32 %v884, %v920
        %944 = vset.pattern.permute.xlu0 9
        %945 = vperm.xlu0 %944, %v277
        %v946 = vpop.permute.xlu0 %945
        %v948 = vmul.f32 %v946, %v423
        %v949 = vmul.f32 %v946, %v427
        %v950 = vmul.f32 %v946, %v431
        %v951 = vmul.f32 %v946, %v435
        %v952 = vmul.f32 %v946, %v439
        %v953 = vmul.f32 %v946, %v443
        %v954 = vmul.f32 %v946, %v447
        %v955 = vmul.f32 %v946, %v451
        %964 = vrot.lane.b32.xlu0 %v948, 126
        %v965 = vpop.permute.xlu0 %964
        %966 = vrot.lane.b32.xlu0 %v949, 126
        %v967 = vpop.permute.xlu0 %966
        %968 = vrot.lane.b32.xlu0 %v950, 126
        %v969 = vpop.permute.xlu0 %968
        %970 = vrot.lane.b32.xlu0 %v951, 126
        %v971 = vpop.permute.xlu0 %970
        %972 = vrot.lane.b32.xlu0 %v952, 126
        %v973 = vpop.permute.xlu0 %972
        %974 = vrot.lane.b32.xlu0 %v953, 126
        %v975 = vpop.permute.xlu0 %974
        %976 = vrot.lane.b32.xlu0 %v954, 126
        %v977 = vpop.permute.xlu0 %976
        %978 = vrot.lane.b32.xlu0 %v955, 126
        %v979 = vpop.permute.xlu0 %978
        %v980 = vsel %vm921, %v965, %v967
        %v981 = vsel %vm921, %v967, %v969
        %v982 = vsel %vm921, %v969, %v971
        %v983 = vsel %vm921, %v973, %v975
        %v984 = vsel %vm921, %v975, %v977
        %v985 = vsel %vm921, %v977, %v979
        %v994 = vadd.f32 %v936, %v980
        %v995 = vadd.f32 %v937, %v981
        %v996 = vadd.f32 %v938, %v982
        %v997 = vadd.f32 %v939, %v971
        %v998 = vadd.f32 %v940, %v983
        %v999 = vadd.f32 %v941, %v984
        %v1000 = vadd.f32 %v942, %v985
        %v1001 = vadd.f32 %v943, %v979
        %1002 = vset.pattern.permute.xlu0 10
        %1003 = vperm.xlu0 %1002, %v277
        %v1004 = vpop.permute.xlu0 %1003
        %v1006 = vmul.f32 %v1004, %v515
        %v1007 = vmul.f32 %v1004, %v519
        %v1008 = vmul.f32 %v1004, %v523
        %v1009 = vmul.f32 %v1004, %v527
        %v1010 = vmul.f32 %v1004, %v531
        %v1011 = vmul.f32 %v1004, %v535
        %v1012 = vmul.f32 %v1004, %v539
        %v1013 = vmul.f32 %v1004, %v543
        %1022 = vrot.lane.b32.xlu0 %v1006, 126
        %v1023 = vpop.permute.xlu0 %1022
        %1024 = vrot.lane.b32.xlu0 %v1007, 126
        %v1025 = vpop.permute.xlu0 %1024
        %1026 = vrot.lane.b32.xlu0 %v1008, 126
        %v1027 = vpop.permute.xlu0 %1026
        %1028 = vrot.lane.b32.xlu0 %v1009, 126
        %v1029 = vpop.permute.xlu0 %1028
        %1030 = vrot.lane.b32.xlu0 %v1010, 126
        %v1031 = vpop.permute.xlu0 %1030
        %1032 = vrot.lane.b32.xlu0 %v1011, 126
        %v1033 = vpop.permute.xlu0 %1032
        %1034 = vrot.lane.b32.xlu0 %v1012, 126
        %v1035 = vpop.permute.xlu0 %1034
        %1036 = vrot.lane.b32.xlu0 %v1013, 126
        %v1037 = vpop.permute.xlu0 %1036
        %v1038 = vsel %vm921, %v1023, %v1025
        %v1039 = vsel %vm921, %v1025, %v1027
        %v1040 = vsel %vm921, %v1027, %v1029
        %v1041 = vsel %vm921, %v1031, %v1033
        %v1042 = vsel %vm921, %v1033, %v1035
        %v1043 = vsel %vm921, %v1035, %v1037
        %v1052 = vadd.f32 %v994, %v1038
        %v1053 = vadd.f32 %v995, %v1039
        %v1054 = vadd.f32 %v996, %v1040
        %v1055 = vadd.f32 %v997, %v1029
        %v1056 = vadd.f32 %v998, %v1041
        %v1057 = vadd.f32 %v999, %v1042
        %v1058 = vadd.f32 %v1000, %v1043
        %v1059 = vadd.f32 %v1001, %v1037
        %1060 = vset.pattern.permute.xlu0 11
        %1061 = vperm.xlu0 %1060, %v277
        %v1062 = vpop.permute.xlu0 %1061
        %v1064 = vmul.f32 %v1062, %v607
        %v1065 = vmul.f32 %v1062, %v611
        %v1066 = vmul.f32 %v1062, %v615
        %v1067 = vmul.f32 %v1062, %v619
        %v1068 = vmul.f32 %v1062, %v623
        %v1069 = vmul.f32 %v1062, %v627
        %v1070 = vmul.f32 %v1062, %v631
        %v1071 = vmul.f32 %v1062, %v635
        %1080 = vrot.lane.b32.xlu0 %v1064, 126
        %v1081 = vpop.permute.xlu0 %1080
        %1082 = vrot.lane.b32.xlu0 %v1065, 126
        %v1083 = vpop.permute.xlu0 %1082
        %1084 = vrot.lane.b32.xlu0 %v1066, 126
        %v1085 = vpop.permute.xlu0 %1084
        %1086 = vrot.lane.b32.xlu0 %v1067, 126
        %v1087 = vpop.permute.xlu0 %1086
        %1088 = vrot.lane.b32.xlu0 %v1068, 126
        %v1089 = vpop.permute.xlu0 %1088
        %1090 = vrot.lane.b32.xlu0 %v1069, 126
        %v1091 = vpop.permute.xlu0 %1090
        %1092 = vrot.lane.b32.xlu0 %v1070, 126
        %v1093 = vpop.permute.xlu0 %1092
        %1094 = vrot.lane.b32.xlu0 %v1071, 126
        %v1095 = vpop.permute.xlu0 %1094
        %v1096 = vsel %vm921, %v1081, %v1083
        %v1097 = vsel %vm921, %v1083, %v1085
        %v1098 = vsel %vm921, %v1085, %v1087
        %v1099 = vsel %vm921, %v1089, %v1091
        %v1100 = vsel %vm921, %v1091, %v1093
        %v1101 = vsel %vm921, %v1093, %v1095
        %v1110 = vadd.f32 %v1052, %v1096
        %v1111 = vadd.f32 %v1053, %v1097
        %v1112 = vadd.f32 %v1054, %v1098
        %v1113 = vadd.f32 %v1055, %v1087
        %v1114 = vadd.f32 %v1056, %v1099
        %v1115 = vadd.f32 %v1057, %v1100
        %v1116 = vadd.f32 %v1058, %v1101
        %v1117 = vadd.f32 %v1059, %v1095
        %1118 = vset.pattern.permute.xlu0 12
        %1119 = vperm.xlu0 %1118, %v277
        %v1120 = vpop.permute.xlu0 %1119
        %v1122 = vmul.f32 %v1120, %v331
        %v1123 = vmul.f32 %v1120, %v335
        %v1124 = vmul.f32 %v1120, %v339
        %v1125 = vmul.f32 %v1120, %v343
        %v1126 = vmul.f32 %v1120, %v347
        %v1127 = vmul.f32 %v1120, %v351
        %v1128 = vmul.f32 %v1120, %v355
        %v1129 = vmul.f32 %v1120, %v359
        %1138 = vrot.lane.b32.xlu0 %v1122, 110
        %v1139 = vpop.permute.xlu0 %1138
        %1140 = vrot.lane.b32.xlu0 %v1123, 110
        %v1141 = vpop.permute.xlu0 %1140
        %1142 = vrot.lane.b32.xlu0 %v1124, 110
        %v1143 = vpop.permute.xlu0 %1142
        %1144 = vrot.lane.b32.xlu0 %v1125, 110
        %v1145 = vpop.permute.xlu0 %1144
        %1146 = vrot.lane.b32.xlu0 %v1126, 110
        %v1147 = vpop.permute.xlu0 %1146
        %1148 = vrot.lane.b32.xlu0 %v1127, 110
        %v1149 = vpop.permute.xlu0 %1148
        %1150 = vrot.lane.b32.xlu0 %v1128, 110
        %v1151 = vpop.permute.xlu0 %1150
        %1152 = vrot.lane.b32.xlu0 %v1129, 110
        %v1153 = vpop.permute.xlu0 %1152
        %vm1154 = vcmask 900096
        %v1155 = vsel %vm1154, %v1139, %v1141
        %v1156 = vsel %vm1154, %v1141, %v1143
        %v1157 = vsel %vm1154, %v1143, %v1145
        %v1158 = vsel %vm1154, %v1147, %v1149
        %v1159 = vsel %vm1154, %v1149, %v1151
        %v1160 = vsel %vm1154, %v1151, %v1153
        %v1169 = vadd.f32 %v1110, %v1155
        %v1170 = vadd.f32 %v1111, %v1156
        %v1171 = vadd.f32 %v1112, %v1157
        %v1172 = vadd.f32 %v1113, %v1145
        %v1173 = vadd.f32 %v1114, %v1158
        %v1174 = vadd.f32 %v1115, %v1159
        %v1175 = vadd.f32 %v1116, %v1160
        %v1176 = vadd.f32 %v1117, %v1153
        %1177 = vset.pattern.permute.xlu0 13
        %1178 = vperm.xlu0 %1177, %v277
        %v1179 = vpop.permute.xlu0 %1178
        %v1181 = vmul.f32 %v1179, %v423
        %v1182 = vmul.f32 %v1179, %v427
        %v1183 = vmul.f32 %v1179, %v431
        %v1184 = vmul.f32 %v1179, %v435
        %v1185 = vmul.f32 %v1179, %v439
        %v1186 = vmul.f32 %v1179, %v443
        %v1187 = vmul.f32 %v1179, %v447
        %v1188 = vmul.f32 %v1179, %v451
        %1197 = vrot.lane.b32.xlu0 %v1181, 110
        %v1198 = vpop.permute.xlu0 %1197
        %1199 = vrot.lane.b32.xlu0 %v1182, 110
        %v1200 = vpop.permute.xlu0 %1199
        %1201 = vrot.lane.b32.xlu0 %v1183, 110
        %v1202 = vpop.permute.xlu0 %1201
        %1203 = vrot.lane.b32.xlu0 %v1184, 110
        %v1204 = vpop.permute.xlu0 %1203
        %1205 = vrot.lane.b32.xlu0 %v1185, 110
        %v1206 = vpop.permute.xlu0 %1205
        %1207 = vrot.lane.b32.xlu0 %v1186, 110
        %v1208 = vpop.permute.xlu0 %1207
        %1209 = vrot.lane.b32.xlu0 %v1187, 110
        %v1210 = vpop.permute.xlu0 %1209
        %1211 = vrot.lane.b32.xlu0 %v1188, 110
        %v1212 = vpop.permute.xlu0 %1211
        %v1213 = vsel %vm1154, %v1198, %v1200
        %v1214 = vsel %vm1154, %v1200, %v1202
        %v1215 = vsel %vm1154, %v1202, %v1204
        %v1216 = vsel %vm1154, %v1206, %v1208
        %v1217 = vsel %vm1154, %v1208, %v1210
        %v1218 = vsel %vm1154, %v1210, %v1212
        %v1227 = vadd.f32 %v1169, %v1213
        %v1228 = vadd.f32 %v1170, %v1214
        %v1229 = vadd.f32 %v1171, %v1215
        %v1230 = vadd.f32 %v1172, %v1204
        %v1231 = vadd.f32 %v1173, %v1216
        %v1232 = vadd.f32 %v1174, %v1217
        %v1233 = vadd.f32 %v1175, %v1218
        %v1234 = vadd.f32 %v1176, %v1212
        %1235 = vset.pattern.permute.xlu0 14
        %1236 = vperm.xlu0 %1235, %v277
        %v1237 = vpop.permute.xlu0 %1236
        %v1239 = vmul.f32 %v1237, %v515
        %v1240 = vmul.f32 %v1237, %v519
        %v1241 = vmul.f32 %v1237, %v523
        %v1242 = vmul.f32 %v1237, %v527
        %v1243 = vmul.f32 %v1237, %v531
        %v1244 = vmul.f32 %v1237, %v535
        %v1245 = vmul.f32 %v1237, %v539
        %v1246 = vmul.f32 %v1237, %v543
        %1255 = vrot.lane.b32.xlu0 %v1239, 110
        %v1256 = vpop.permute.xlu0 %1255
        %1257 = vrot.lane.b32.xlu0 %v1240, 110
        %v1258 = vpop.permute.xlu0 %1257
        %1259 = vrot.lane.b32.xlu0 %v1241, 110
        %v1260 = vpop.permute.xlu0 %1259
        %1261 = vrot.lane.b32.xlu0 %v1242, 110
        %v1262 = vpop.permute.xlu0 %1261
        %1263 = vrot.lane.b32.xlu0 %v1243, 110
        %v1264 = vpop.permute.xlu0 %1263
        %1265 = vrot.lane.b32.xlu0 %v1244, 110
        %v1266 = vpop.permute.xlu0 %1265
        %1267 = vrot.lane.b32.xlu0 %v1245, 110
        %v1268 = vpop.permute.xlu0 %1267
        %1269 = vrot.lane.b32.xlu0 %v1246, 110
        %v1270 = vpop.permute.xlu0 %1269
        %v1271 = vsel %vm1154, %v1256, %v1258
        %v1272 = vsel %vm1154, %v1258, %v1260
        %v1273 = vsel %vm1154, %v1260, %v1262
        %v1274 = vsel %vm1154, %v1264, %v1266
        %v1275 = vsel %vm1154, %v1266, %v1268
        %v1276 = vsel %vm1154, %v1268, %v1270
        %v1285 = vadd.f32 %v1227, %v1271
        %v1286 = vadd.f32 %v1228, %v1272
        %v1287 = vadd.f32 %v1229, %v1273
        %v1288 = vadd.f32 %v1230, %v1262
        %v1289 = vadd.f32 %v1231, %v1274
        %v1290 = vadd.f32 %v1232, %v1275
        %v1291 = vadd.f32 %v1233, %v1276
        %v1292 = vadd.f32 %v1234, %v1270
        %1293 = vset.pattern.permute.xlu0 15
        %1294 = vperm.xlu0 %1293, %v277
        %v1295 = vpop.permute.xlu0 %1294
        %v1297 = vmul.f32 %v1295, %v607
        %v1298 = vmul.f32 %v1295, %v611
        %v1299 = vmul.f32 %v1295, %v615
        %v1300 = vmul.f32 %v1295, %v619
        %v1301 = vmul.f32 %v1295, %v623
        %v1302 = vmul.f32 %v1295, %v627
        %v1303 = vmul.f32 %v1295, %v631
        %v1304 = vmul.f32 %v1295, %v635
        %1313 = vrot.lane.b32.xlu0 %v1297, 110
        %v1314 = vpop.permute.xlu0 %1313
        %1315 = vrot.lane.b32.xlu0 %v1298, 110
        %v1316 = vpop.permute.xlu0 %1315
        %1317 = vrot.lane.b32.xlu0 %v1299, 110
        %v1318 = vpop.permute.xlu0 %1317
        %1319 = vrot.lane.b32.xlu0 %v1300, 110
        %v1320 = vpop.permute.xlu0 %1319
        %1321 = vrot.lane.b32.xlu0 %v1301, 110
        %v1322 = vpop.permute.xlu0 %1321
        %1323 = vrot.lane.b32.xlu0 %v1302, 110
        %v1324 = vpop.permute.xlu0 %1323
        %1325 = vrot.lane.b32.xlu0 %v1303, 110
        %v1326 = vpop.permute.xlu0 %1325
        %1327 = vrot.lane.b32.xlu0 %v1304, 110
        %v1328 = vpop.permute.xlu0 %1327
        %v1329 = vsel %vm1154, %v1314, %v1316
        %v1330 = vsel %vm1154, %v1316, %v1318
        %v1331 = vsel %vm1154, %v1318, %v1320
        %v1332 = vsel %vm1154, %v1322, %v1324
        %v1333 = vsel %vm1154, %v1324, %v1326
        %v1334 = vsel %vm1154, %v1326, %v1328
        %v1343 = vadd.f32 %v1285, %v1329
        %v1344 = vadd.f32 %v1286, %v1330
        %v1345 = vadd.f32 %v1287, %v1331
        %v1346 = vadd.f32 %v1288, %v1320
        %v1347 = vadd.f32 %v1289, %v1332
        %v1348 = vadd.f32 %v1290, %v1333
        %v1349 = vadd.f32 %v1291, %v1334
        %v1350 = vadd.f32 %v1292, %v1328
        %1351 = vset.pattern.permute.xlu0 16
        %1352 = vperm.xlu0 %1351, %v277
        %v1353 = vpop.permute.xlu0 %1352
        %v1355 = vmul.f32 %v1353, %v331
        %v1356 = vmul.f32 %v1353, %v335
        %v1357 = vmul.f32 %v1353, %v339
        %v1358 = vmul.f32 %v1353, %v343
        %v1359 = vmul.f32 %v1353, %v347
        %v1360 = vmul.f32 %v1353, %v351
        %v1361 = vmul.f32 %v1353, %v355
        %v1362 = vmul.f32 %v1353, %v359
        %1371 = vrot.lane.b32.xlu0 %v1355, 109
        %v1372 = vpop.permute.xlu0 %1371
        %1373 = vrot.lane.b32.xlu0 %v1356, 109
        %v1374 = vpop.permute.xlu0 %1373
        %1375 = vrot.lane.b32.xlu0 %v1357, 109
        %v1376 = vpop.permute.xlu0 %1375
        %1377 = vrot.lane.b32.xlu0 %v1358, 109
        %v1378 = vpop.permute.xlu0 %1377
        %1379 = vrot.lane.b32.xlu0 %v1359, 109
        %v1380 = vpop.permute.xlu0 %1379
        %1381 = vrot.lane.b32.xlu0 %v1360, 109
        %v1382 = vpop.permute.xlu0 %1381
        %1383 = vrot.lane.b32.xlu0 %v1361, 109
        %v1384 = vpop.permute.xlu0 %1383
        %1385 = vrot.lane.b32.xlu0 %v1362, 109
        %v1386 = vpop.permute.xlu0 %1385
        %vm1387 = vcmask 891904
        %v1388 = vsel %vm1387, %v1372, %v1374
        %v1389 = vsel %vm1387, %v1374, %v1376
        %v1390 = vsel %vm1387, %v1376, %v1378
        %v1391 = vsel %vm1387, %v1380, %v1382
        %v1392 = vsel %vm1387, %v1382, %v1384
        %v1393 = vsel %vm1387, %v1384, %v1386
        %v1402 = vadd.f32 %v1343, %v1388
        %v1403 = vadd.f32 %v1344, %v1389
        %v1404 = vadd.f32 %v1345, %v1390
        %v1405 = vadd.f32 %v1346, %v1378
        %v1406 = vadd.f32 %v1347, %v1391
        %v1407 = vadd.f32 %v1348, %v1392
        %v1408 = vadd.f32 %v1349, %v1393
        %v1409 = vadd.f32 %v1350, %v1386
        %1410 = vset.pattern.permute.xlu0 17
        %1411 = vperm.xlu0 %1410, %v277
        %v1412 = vpop.permute.xlu0 %1411
        %v1414 = vmul.f32 %v1412, %v423
        %v1415 = vmul.f32 %v1412, %v427
        %v1416 = vmul.f32 %v1412, %v431
        %v1417 = vmul.f32 %v1412, %v435
        %v1418 = vmul.f32 %v1412, %v439
        %v1419 = vmul.f32 %v1412, %v443
        %v1420 = vmul.f32 %v1412, %v447
        %v1421 = vmul.f32 %v1412, %v451
        %1430 = vrot.lane.b32.xlu0 %v1414, 109
        %v1431 = vpop.permute.xlu0 %1430
        %1432 = vrot.lane.b32.xlu0 %v1415, 109
        %v1433 = vpop.permute.xlu0 %1432
        %1434 = vrot.lane.b32.xlu0 %v1416, 109
        %v1435 = vpop.permute.xlu0 %1434
        %1436 = vrot.lane.b32.xlu0 %v1417, 109
        %v1437 = vpop.permute.xlu0 %1436
        %1438 = vrot.lane.b32.xlu0 %v1418, 109
        %v1439 = vpop.permute.xlu0 %1438
        %1440 = vrot.lane.b32.xlu0 %v1419, 109
        %v1441 = vpop.permute.xlu0 %1440
        %1442 = vrot.lane.b32.xlu0 %v1420, 109
        %v1443 = vpop.permute.xlu0 %1442
        %1444 = vrot.lane.b32.xlu0 %v1421, 109
        %v1445 = vpop.permute.xlu0 %1444
        %v1446 = vsel %vm1387, %v1431, %v1433
        %v1447 = vsel %vm1387, %v1433, %v1435
        %v1448 = vsel %vm1387, %v1435, %v1437
        %v1449 = vsel %vm1387, %v1439, %v1441
        %v1450 = vsel %vm1387, %v1441, %v1443
        %v1451 = vsel %vm1387, %v1443, %v1445
        %v1460 = vadd.f32 %v1402, %v1446
        %v1461 = vadd.f32 %v1403, %v1447
        %v1462 = vadd.f32 %v1404, %v1448
        %v1463 = vadd.f32 %v1405, %v1437
        %v1464 = vadd.f32 %v1406, %v1449
        %v1465 = vadd.f32 %v1407, %v1450
        %v1466 = vadd.f32 %v1408, %v1451
        %v1467 = vadd.f32 %v1409, %v1445
        %1468 = vset.pattern.permute.xlu0 18
        %1469 = vperm.xlu0 %1468, %v277
        %v1470 = vpop.permute.xlu0 %1469
        %v1472 = vmul.f32 %v1470, %v515
        %v1473 = vmul.f32 %v1470, %v519
        %v1474 = vmul.f32 %v1470, %v523
        %v1475 = vmul.f32 %v1470, %v527
        %v1476 = vmul.f32 %v1470, %v531
        %v1477 = vmul.f32 %v1470, %v535
        %v1478 = vmul.f32 %v1470, %v539
        %v1479 = vmul.f32 %v1470, %v543
        %1488 = vrot.lane.b32.xlu0 %v1472, 109
        %v1489 = vpop.permute.xlu0 %1488
        %1490 = vrot.lane.b32.xlu0 %v1473, 109
        %v1491 = vpop.permute.xlu0 %1490
        %1492 = vrot.lane.b32.xlu0 %v1474, 109
        %v1493 = vpop.permute.xlu0 %1492
        %1494 = vrot.lane.b32.xlu0 %v1475, 109
        %v1495 = vpop.permute.xlu0 %1494
        %1496 = vrot.lane.b32.xlu0 %v1476, 109
        %v1497 = vpop.permute.xlu0 %1496
        %1498 = vrot.lane.b32.xlu0 %v1477, 109
        %v1499 = vpop.permute.xlu0 %1498
        %1500 = vrot.lane.b32.xlu0 %v1478, 109
        %v1501 = vpop.permute.xlu0 %1500
        %1502 = vrot.lane.b32.xlu0 %v1479, 109
        %v1503 = vpop.permute.xlu0 %1502
        %v1504 = vsel %vm1387, %v1489, %v1491
        %v1505 = vsel %vm1387, %v1491, %v1493
        %v1506 = vsel %vm1387, %v1493, %v1495
        %v1507 = vsel %vm1387, %v1497, %v1499
        %v1508 = vsel %vm1387, %v1499, %v1501
        %v1509 = vsel %vm1387, %v1501, %v1503
        %v1518 = vadd.f32 %v1460, %v1504
        %v1519 = vadd.f32 %v1461, %v1505
        %v1520 = vadd.f32 %v1462, %v1506
        %v1521 = vadd.f32 %v1463, %v1495
        %v1522 = vadd.f32 %v1464, %v1507
        %v1523 = vadd.f32 %v1465, %v1508
        %v1524 = vadd.f32 %v1466, %v1509
        %v1525 = vadd.f32 %v1467, %v1503
        %1526 = vset.pattern.permute.xlu0 19
        %1527 = vperm.xlu0 %1526, %v277
        %v1528 = vpop.permute.xlu0 %1527
        %v1530 = vmul.f32 %v1528, %v607
        %v1531 = vmul.f32 %v1528, %v611
        %v1532 = vmul.f32 %v1528, %v615
        %v1533 = vmul.f32 %v1528, %v619
        %v1534 = vmul.f32 %v1528, %v623
        %v1535 = vmul.f32 %v1528, %v627
        %v1536 = vmul.f32 %v1528, %v631
        %v1537 = vmul.f32 %v1528, %v635
        %1546 = vrot.lane.b32.xlu0 %v1530, 109
        %v1547 = vpop.permute.xlu0 %1546
        %1548 = vrot.lane.b32.xlu0 %v1531, 109
        %v1549 = vpop.permute.xlu0 %1548
        %1550 = vrot.lane.b32.xlu0 %v1532, 109
        %v1551 = vpop.permute.xlu0 %1550
        %1552 = vrot.lane.b32.xlu0 %v1533, 109
        %v1553 = vpop.permute.xlu0 %1552
        %1554 = vrot.lane.b32.xlu0 %v1534, 109
        %v1555 = vpop.permute.xlu0 %1554
        %1556 = vrot.lane.b32.xlu0 %v1535, 109
        %v1557 = vpop.permute.xlu0 %1556
        %1558 = vrot.lane.b32.xlu0 %v1536, 109
        %v1559 = vpop.permute.xlu0 %1558
        %1560 = vrot.lane.b32.xlu0 %v1537, 109
        %v1561 = vpop.permute.xlu0 %1560
        %v1562 = vsel %vm1387, %v1547, %v1549
        %v1563 = vsel %vm1387, %v1549, %v1551
        %v1564 = vsel %vm1387, %v1551, %v1553
        %v1565 = vsel %vm1387, %v1555, %v1557
        %v1566 = vsel %vm1387, %v1557, %v1559
        %v1567 = vsel %vm1387, %v1559, %v1561
        %v1576 = vadd.f32 %v1518, %v1562
        %v1577 = vadd.f32 %v1519, %v1563
        %v1578 = vadd.f32 %v1520, %v1564
        %v1579 = vadd.f32 %v1521, %v1553
        %v1580 = vadd.f32 %v1522, %v1565
        %v1581 = vadd.f32 %v1523, %v1566
        %v1582 = vadd.f32 %v1524, %v1567
        %v1583 = vadd.f32 %v1525, %v1561
        %1584 = vset.pattern.permute.xlu0 20
        %1585 = vperm.xlu0 %1584, %v277
        %v1586 = vpop.permute.xlu0 %1585
        %v1588 = vmul.f32 %v1586, %v331
        %v1589 = vmul.f32 %v1586, %v335
        %v1590 = vmul.f32 %v1586, %v339
        %v1591 = vmul.f32 %v1586, %v343
        %v1592 = vmul.f32 %v1586, %v347
        %v1593 = vmul.f32 %v1586, %v351
        %v1594 = vmul.f32 %v1586, %v355
        %v1595 = vmul.f32 %v1586, %v359
        %1604 = vrot.lane.b32.xlu0 %v1588, 108
        %v1605 = vpop.permute.xlu0 %1604
        %1606 = vrot.lane.b32.xlu0 %v1589, 108
        %v1607 = vpop.permute.xlu0 %1606
        %1608 = vrot.lane.b32.xlu0 %v1590, 108
        %v1609 = vpop.permute.xlu0 %1608
        %1610 = vrot.lane.b32.xlu0 %v1591, 108
        %v1611 = vpop.permute.xlu0 %1610
        %1612 = vrot.lane.b32.xlu0 %v1592, 108
        %v1613 = vpop.permute.xlu0 %1612
        %1614 = vrot.lane.b32.xlu0 %v1593, 108
        %v1615 = vpop.permute.xlu0 %1614
        %1616 = vrot.lane.b32.xlu0 %v1594, 108
        %v1617 = vpop.permute.xlu0 %1616
        %1618 = vrot.lane.b32.xlu0 %v1595, 108
        %v1619 = vpop.permute.xlu0 %1618
        %vm1620 = vcmask 883712
        %v1621 = vsel %vm1620, %v1605, %v1607
        %v1622 = vsel %vm1620, %v1607, %v1609
        %v1623 = vsel %vm1620, %v1609, %v1611
        %v1624 = vsel %vm1620, %v1613, %v1615
        %v1625 = vsel %vm1620, %v1615, %v1617
        %v1626 = vsel %vm1620, %v1617, %v1619
        %v1635 = vadd.f32 %v1576, %v1621
        %v1636 = vadd.f32 %v1577, %v1622
        %v1637 = vadd.f32 %v1578, %v1623
        %v1638 = vadd.f32 %v1579, %v1611
        %v1639 = vadd.f32 %v1580, %v1624
        %v1640 = vadd.f32 %v1581, %v1625
        %v1641 = vadd.f32 %v1582, %v1626
        %v1642 = vadd.f32 %v1583, %v1619
        %1643 = vset.pattern.permute.xlu0 21
        %1644 = vperm.xlu0 %1643, %v277
        %v1645 = vpop.permute.xlu0 %1644
        %v1647 = vmul.f32 %v1645, %v423
        %v1648 = vmul.f32 %v1645, %v427
        %v1649 = vmul.f32 %v1645, %v431
        %v1650 = vmul.f32 %v1645, %v435
        %v1651 = vmul.f32 %v1645, %v439
        %v1652 = vmul.f32 %v1645, %v443
        %v1653 = vmul.f32 %v1645, %v447
        %v1654 = vmul.f32 %v1645, %v451
        %1663 = vrot.lane.b32.xlu0 %v1647, 108
        %v1664 = vpop.permute.xlu0 %1663
        %1665 = vrot.lane.b32.xlu0 %v1648, 108
        %v1666 = vpop.permute.xlu0 %1665
        %1667 = vrot.lane.b32.xlu0 %v1649, 108
        %v1668 = vpop.permute.xlu0 %1667
        %1669 = vrot.lane.b32.xlu0 %v1650, 108
        %v1670 = vpop.permute.xlu0 %1669
        %1671 = vrot.lane.b32.xlu0 %v1651, 108
        %v1672 = vpop.permute.xlu0 %1671
        %1673 = vrot.lane.b32.xlu0 %v1652, 108
        %v1674 = vpop.permute.xlu0 %1673
        %1675 = vrot.lane.b32.xlu0 %v1653, 108
        %v1676 = vpop.permute.xlu0 %1675
        %1677 = vrot.lane.b32.xlu0 %v1654, 108
        %v1678 = vpop.permute.xlu0 %1677
        %v1679 = vsel %vm1620, %v1664, %v1666
        %v1680 = vsel %vm1620, %v1666, %v1668
        %v1681 = vsel %vm1620, %v1668, %v1670
        %v1682 = vsel %vm1620, %v1672, %v1674
        %v1683 = vsel %vm1620, %v1674, %v1676
        %v1684 = vsel %vm1620, %v1676, %v1678
        %v1693 = vadd.f32 %v1635, %v1679
        %v1694 = vadd.f32 %v1636, %v1680
        %v1695 = vadd.f32 %v1637, %v1681
        %v1696 = vadd.f32 %v1638, %v1670
        %v1697 = vadd.f32 %v1639, %v1682
        %v1698 = vadd.f32 %v1640, %v1683
        %v1699 = vadd.f32 %v1641, %v1684
        %v1700 = vadd.f32 %v1642, %v1678
        %1701 = vset.pattern.permute.xlu0 22
        %1702 = vperm.xlu0 %1701, %v277
        %v1703 = vpop.permute.xlu0 %1702
        %v1705 = vmul.f32 %v1703, %v515
        %v1706 = vmul.f32 %v1703, %v519
        %v1707 = vmul.f32 %v1703, %v523
        %v1708 = vmul.f32 %v1703, %v527
        %v1709 = vmul.f32 %v1703, %v531
        %v1710 = vmul.f32 %v1703, %v535
        %v1711 = vmul.f32 %v1703, %v539
        %v1712 = vmul.f32 %v1703, %v543
        %1721 = vrot.lane.b32.xlu0 %v1705, 108
        %v1722 = vpop.permute.xlu0 %1721
        %1723 = vrot.lane.b32.xlu0 %v1706, 108
        %v1724 = vpop.permute.xlu0 %1723
        %1725 = vrot.lane.b32.xlu0 %v1707, 108
        %v1726 = vpop.permute.xlu0 %1725
        %1727 = vrot.lane.b32.xlu0 %v1708, 108
        %v1728 = vpop.permute.xlu0 %1727
        %1729 = vrot.lane.b32.xlu0 %v1709, 108
        %v1730 = vpop.permute.xlu0 %1729
        %1731 = vrot.lane.b32.xlu0 %v1710, 108
        %v1732 = vpop.permute.xlu0 %1731
        %1733 = vrot.lane.b32.xlu0 %v1711, 108
        %v1734 = vpop.permute.xlu0 %1733
        %1735 = vrot.lane.b32.xlu0 %v1712, 108
        %v1736 = vpop.permute.xlu0 %1735
        %v1737 = vsel %vm1620, %v1722, %v1724
        %v1738 = vsel %vm1620, %v1724, %v1726
        %v1739 = vsel %vm1620, %v1726, %v1728
        %v1740 = vsel %vm1620, %v1730, %v1732
        %v1741 = vsel %vm1620, %v1732, %v1734
        %v1742 = vsel %vm1620, %v1734, %v1736
        %v1751 = vadd.f32 %v1693, %v1737
        %v1752 = vadd.f32 %v1694, %v1738
        %v1753 = vadd.f32 %v1695, %v1739
        %v1754 = vadd.f32 %v1696, %v1728
        %v1755 = vadd.f32 %v1697, %v1740
        %v1756 = vadd.f32 %v1698, %v1741
        %v1757 = vadd.f32 %v1699, %v1742
        %v1758 = vadd.f32 %v1700, %v1736
        %1759 = vset.pattern.permute.xlu0 23
        %1760 = vperm.xlu0 %1759, %v277
        %v1761 = vpop.permute.xlu0 %1760
        %v1763 = vmul.f32 %v1761, %v607
        %v1764 = vmul.f32 %v1761, %v611
        %v1765 = vmul.f32 %v1761, %v615
        %v1766 = vmul.f32 %v1761, %v619
        %v1767 = vmul.f32 %v1761, %v623
        %v1768 = vmul.f32 %v1761, %v627
        %v1769 = vmul.f32 %v1761, %v631
        %v1770 = vmul.f32 %v1761, %v635
        %1779 = vrot.lane.b32.xlu0 %v1763, 108
        %v1780 = vpop.permute.xlu0 %1779
        %1781 = vrot.lane.b32.xlu0 %v1764, 108
        %v1782 = vpop.permute.xlu0 %1781
        %1783 = vrot.lane.b32.xlu0 %v1765, 108
        %v1784 = vpop.permute.xlu0 %1783
        %1785 = vrot.lane.b32.xlu0 %v1766, 108
        %v1786 = vpop.permute.xlu0 %1785
        %1787 = vrot.lane.b32.xlu0 %v1767, 108
        %v1788 = vpop.permute.xlu0 %1787
        %1789 = vrot.lane.b32.xlu0 %v1768, 108
        %v1790 = vpop.permute.xlu0 %1789
        %1791 = vrot.lane.b32.xlu0 %v1769, 108
        %v1792 = vpop.permute.xlu0 %1791
        %1793 = vrot.lane.b32.xlu0 %v1770, 108
        %v1794 = vpop.permute.xlu0 %1793
        %v1795 = vsel %vm1620, %v1780, %v1782
        %v1796 = vsel %vm1620, %v1782, %v1784
        %v1797 = vsel %vm1620, %v1784, %v1786
        %v1798 = vsel %vm1620, %v1788, %v1790
        %v1799 = vsel %vm1620, %v1790, %v1792
        %v1800 = vsel %vm1620, %v1792, %v1794
        %v1809 = vadd.f32 %v1751, %v1795
        %v1810 = vadd.f32 %v1752, %v1796
        %v1811 = vadd.f32 %v1753, %v1797
        %v1812 = vadd.f32 %v1754, %v1786
        %v1813 = vadd.f32 %v1755, %v1798
        %v1814 = vadd.f32 %v1756, %v1799
        %v1815 = vadd.f32 %v1757, %v1800
        %v1816 = vadd.f32 %v1758, %v1794
        %1817 = vset.pattern.permute.xlu0 24
        %1818 = vperm.xlu0 %1817, %v277
        %v1819 = vpop.permute.xlu0 %1818
        %v1821 = vmul.f32 %v1819, %v331
        %v1822 = vmul.f32 %v1819, %v335
        %v1823 = vmul.f32 %v1819, %v339
        %v1824 = vmul.f32 %v1819, %v343
        %v1825 = vmul.f32 %v1819, %v347
        %v1826 = vmul.f32 %v1819, %v351
        %v1827 = vmul.f32 %v1819, %v355
        %v1828 = vmul.f32 %v1819, %v359
        %1837 = vrot.lane.b32.xlu0 %v1821, 92
        %v1838 = vpop.permute.xlu0 %1837
        %1839 = vrot.lane.b32.xlu0 %v1822, 92
        %v1840 = vpop.permute.xlu0 %1839
        %1841 = vrot.lane.b32.xlu0 %v1823, 92
        %v1842 = vpop.permute.xlu0 %1841
        %1843 = vrot.lane.b32.xlu0 %v1824, 92
        %v1844 = vpop.permute.xlu0 %1843
        %1845 = vrot.lane.b32.xlu0 %v1825, 92
        %v1846 = vpop.permute.xlu0 %1845
        %1847 = vrot.lane.b32.xlu0 %v1826, 92
        %v1848 = vpop.permute.xlu0 %1847
        %1849 = vrot.lane.b32.xlu0 %v1827, 92
        %v1850 = vpop.permute.xlu0 %1849
        %1851 = vrot.lane.b32.xlu0 %v1828, 92
        %v1852 = vpop.permute.xlu0 %1851
        %vm1853 = vcmask 752640
        %v1854 = vsel %vm1853, %v1838, %v1840
        %v1855 = vsel %vm1853, %v1840, %v1842
        %v1856 = vsel %vm1853, %v1842, %v1844
        %v1857 = vsel %vm1853, %v1846, %v1848
        %v1858 = vsel %vm1853, %v1848, %v1850
        %v1859 = vsel %vm1853, %v1850, %v1852
        %v1868 = vadd.f32 %v1809, %v1854
        %v1869 = vadd.f32 %v1810, %v1855
        %v1870 = vadd.f32 %v1811, %v1856
        %v1871 = vadd.f32 %v1812, %v1844
        %v1872 = vadd.f32 %v1813, %v1857
        %v1873 = vadd.f32 %v1814, %v1858
        %v1874 = vadd.f32 %v1815, %v1859
        %v1875 = vadd.f32 %v1816, %v1852
        %1876 = vset.pattern.permute.xlu0 25
        %1877 = vperm.xlu0 %1876, %v277
        %v1878 = vpop.permute.xlu0 %1877
        %v1880 = vmul.f32 %v1878, %v423
        %v1881 = vmul.f32 %v1878, %v427
        %v1882 = vmul.f32 %v1878, %v431
        %v1883 = vmul.f32 %v1878, %v435
        %v1884 = vmul.f32 %v1878, %v439
        %v1885 = vmul.f32 %v1878, %v443
        %v1886 = vmul.f32 %v1878, %v447
        %v1887 = vmul.f32 %v1878, %v451
        %1896 = vrot.lane.b32.xlu0 %v1880, 92
        %v1897 = vpop.permute.xlu0 %1896
        %1898 = vrot.lane.b32.xlu0 %v1881, 92
        %v1899 = vpop.permute.xlu0 %1898
        %1900 = vrot.lane.b32.xlu0 %v1882, 92
        %v1901 = vpop.permute.xlu0 %1900
        %1902 = vrot.lane.b32.xlu0 %v1883, 92
        %v1903 = vpop.permute.xlu0 %1902
        %1904 = vrot.lane.b32.xlu0 %v1884, 92
        %v1905 = vpop.permute.xlu0 %1904
        %1906 = vrot.lane.b32.xlu0 %v1885, 92
        %v1907 = vpop.permute.xlu0 %1906
        %1908 = vrot.lane.b32.xlu0 %v1886, 92
        %v1909 = vpop.permute.xlu0 %1908
        %1910 = vrot.lane.b32.xlu0 %v1887, 92
        %v1911 = vpop.permute.xlu0 %1910
        %v1912 = vsel %vm1853, %v1897, %v1899
        %v1913 = vsel %vm1853, %v1899, %v1901
        %v1914 = vsel %vm1853, %v1901, %v1903
        %v1915 = vsel %vm1853, %v1905, %v1907
        %v1916 = vsel %vm1853, %v1907, %v1909
        %v1917 = vsel %vm1853, %v1909, %v1911
        %v1926 = vadd.f32 %v1868, %v1912
        %v1927 = vadd.f32 %v1869, %v1913
        %v1928 = vadd.f32 %v1870, %v1914
        %v1929 = vadd.f32 %v1871, %v1903
        %v1930 = vadd.f32 %v1872, %v1915
        %v1931 = vadd.f32 %v1873, %v1916
        %v1932 = vadd.f32 %v1874, %v1917
        %v1933 = vadd.f32 %v1875, %v1911
        %1934 = vset.pattern.permute.xlu0 26
        %1935 = vperm.xlu0 %1934, %v277
        %v1936 = vpop.permute.xlu0 %1935
        %v1938 = vmul.f32 %v1936, %v515
        %v1939 = vmul.f32 %v1936, %v519
        %v1940 = vmul.f32 %v1936, %v523
        %v1941 = vmul.f32 %v1936, %v527
        %v1942 = vmul.f32 %v1936, %v531
        %v1943 = vmul.f32 %v1936, %v535
        %v1944 = vmul.f32 %v1936, %v539
        %v1945 = vmul.f32 %v1936, %v543
        %1954 = vrot.lane.b32.xlu0 %v1938, 92
        %v1955 = vpop.permute.xlu0 %1954
        %1956 = vrot.lane.b32.xlu0 %v1939, 92
        %v1957 = vpop.permute.xlu0 %1956
        %1958 = vrot.lane.b32.xlu0 %v1940, 92
        %v1959 = vpop.permute.xlu0 %1958
        %1960 = vrot.lane.b32.xlu0 %v1941, 92
        %v1961 = vpop.permute.xlu0 %1960
        %1962 = vrot.lane.b32.xlu0 %v1942, 92
        %v1963 = vpop.permute.xlu0 %1962
        %1964 = vrot.lane.b32.xlu0 %v1943, 92
        %v1965 = vpop.permute.xlu0 %1964
        %1966 = vrot.lane.b32.xlu0 %v1944, 92
        %v1967 = vpop.permute.xlu0 %1966
        %1968 = vrot.lane.b32.xlu0 %v1945, 92
        %v1969 = vpop.permute.xlu0 %1968
        %v1970 = vsel %vm1853, %v1955, %v1957
        %v1971 = vsel %vm1853, %v1957, %v1959
        %v1972 = vsel %vm1853, %v1959, %v1961
        %v1973 = vsel %vm1853, %v1963, %v1965
        %v1974 = vsel %vm1853, %v1965, %v1967
        %v1975 = vsel %vm1853, %v1967, %v1969
        %v1984 = vadd.f32 %v1926, %v1970
        %v1985 = vadd.f32 %v1927, %v1971
        %v1986 = vadd.f32 %v1928, %v1972
        %v1987 = vadd.f32 %v1929, %v1961
        %v1988 = vadd.f32 %v1930, %v1973
        %v1989 = vadd.f32 %v1931, %v1974
        %v1990 = vadd.f32 %v1932, %v1975
        %v1991 = vadd.f32 %v1933, %v1969
        %1992 = vset.pattern.permute.xlu0 27
        %1993 = vperm.xlu0 %1992, %v277
        %v1994 = vpop.permute.xlu0 %1993
        %v1996 = vmul.f32 %v1994, %v607
        %v1997 = vmul.f32 %v1994, %v611
        %v1998 = vmul.f32 %v1994, %v615
        %v1999 = vmul.f32 %v1994, %v619
        %v2000 = vmul.f32 %v1994, %v623
        %v2001 = vmul.f32 %v1994, %v627
        %v2002 = vmul.f32 %v1994, %v631
        %v2003 = vmul.f32 %v1994, %v635
        %2012 = vrot.lane.b32.xlu0 %v1996, 92
        %v2013 = vpop.permute.xlu0 %2012
        %2014 = vrot.lane.b32.xlu0 %v1997, 92
        %v2015 = vpop.permute.xlu0 %2014
        %2016 = vrot.lane.b32.xlu0 %v1998, 92
        %v2017 = vpop.permute.xlu0 %2016
        %2018 = vrot.lane.b32.xlu0 %v1999, 92
        %v2019 = vpop.permute.xlu0 %2018
        %2020 = vrot.lane.b32.xlu0 %v2000, 92
        %v2021 = vpop.permute.xlu0 %2020
        %2022 = vrot.lane.b32.xlu0 %v2001, 92
        %v2023 = vpop.permute.xlu0 %2022
        %2024 = vrot.lane.b32.xlu0 %v2002, 92
        %v2025 = vpop.permute.xlu0 %2024
        %2026 = vrot.lane.b32.xlu0 %v2003, 92
        %v2027 = vpop.permute.xlu0 %2026
        %v2028 = vsel %vm1853, %v2013, %v2015
        %v2029 = vsel %vm1853, %v2015, %v2017
        %v2030 = vsel %vm1853, %v2017, %v2019
        %v2031 = vsel %vm1853, %v2021, %v2023
        %v2032 = vsel %vm1853, %v2023, %v2025
        %v2033 = vsel %vm1853, %v2025, %v2027
        %v2042 = vadd.f32 %v1984, %v2028
        %v2043 = vadd.f32 %v1985, %v2029
        %v2044 = vadd.f32 %v1986, %v2030
        %v2045 = vadd.f32 %v1987, %v2019
        %v2046 = vadd.f32 %v1988, %v2031
        %v2047 = vadd.f32 %v1989, %v2032
        %v2048 = vadd.f32 %v1990, %v2033
        %v2049 = vadd.f32 %v1991, %v2027
        %2050 = vset.pattern.permute.xlu0 28
        %2051 = vperm.xlu0 %2050, %v277
        %v2052 = vpop.permute.xlu0 %2051
        %v2054 = vmul.f32 %v2052, %v331
        %v2055 = vmul.f32 %v2052, %v335
        %v2056 = vmul.f32 %v2052, %v339
        %v2057 = vmul.f32 %v2052, %v343
        %v2058 = vmul.f32 %v2052, %v347
        %v2059 = vmul.f32 %v2052, %v351
        %v2060 = vmul.f32 %v2052, %v355
        %v2061 = vmul.f32 %v2052, %v359
        %2070 = vrot.lane.b32.xlu0 %v2054, 91
        %v2071 = vpop.permute.xlu0 %2070
        %2072 = vrot.lane.b32.xlu0 %v2055, 91
        %v2073 = vpop.permute.xlu0 %2072
        %2074 = vrot.lane.b32.xlu0 %v2056, 91
        %v2075 = vpop.permute.xlu0 %2074
        %2076 = vrot.lane.b32.xlu0 %v2057, 91
        %v2077 = vpop.permute.xlu0 %2076
        %2078 = vrot.lane.b32.xlu0 %v2058, 91
        %v2079 = vpop.permute.xlu0 %2078
        %2080 = vrot.lane.b32.xlu0 %v2059, 91
        %v2081 = vpop.permute.xlu0 %2080
        %2082 = vrot.lane.b32.xlu0 %v2060, 91
        %v2083 = vpop.permute.xlu0 %2082
        %2084 = vrot.lane.b32.xlu0 %v2061, 91
        %v2085 = vpop.permute.xlu0 %2084
        %vm2086 = vcmask 744448
        %v2087 = vsel %vm2086, %v2071, %v2073
        %v2088 = vsel %vm2086, %v2073, %v2075
        %v2089 = vsel %vm2086, %v2075, %v2077
        %v2090 = vsel %vm2086, %v2079, %v2081
        %v2091 = vsel %vm2086, %v2081, %v2083
        %v2092 = vsel %vm2086, %v2083, %v2085
        %v2101 = vadd.f32 %v2042, %v2087
        %v2102 = vadd.f32 %v2043, %v2088
        %v2103 = vadd.f32 %v2044, %v2089
        %v2104 = vadd.f32 %v2045, %v2077
        %v2105 = vadd.f32 %v2046, %v2090
        %v2106 = vadd.f32 %v2047, %v2091
        %v2107 = vadd.f32 %v2048, %v2092
        %v2108 = vadd.f32 %v2049, %v2085
        %2109 = vset.pattern.permute.xlu0 29
        %2110 = vperm.xlu0 %2109, %v277
        %v2111 = vpop.permute.xlu0 %2110
        %v2113 = vmul.f32 %v2111, %v423
        %v2114 = vmul.f32 %v2111, %v427
        %v2115 = vmul.f32 %v2111, %v431
        %v2116 = vmul.f32 %v2111, %v435
        %v2117 = vmul.f32 %v2111, %v439
        %v2118 = vmul.f32 %v2111, %v443
        %v2119 = vmul.f32 %v2111, %v447
        %v2120 = vmul.f32 %v2111, %v451
        %2129 = vrot.lane.b32.xlu0 %v2113, 91
        %v2130 = vpop.permute.xlu0 %2129
        %2131 = vrot.lane.b32.xlu0 %v2114, 91
        %v2132 = vpop.permute.xlu0 %2131
        %2133 = vrot.lane.b32.xlu0 %v2115, 91
        %v2134 = vpop.permute.xlu0 %2133
        %2135 = vrot.lane.b32.xlu0 %v2116, 91
        %v2136 = vpop.permute.xlu0 %2135
        %2137 = vrot.lane.b32.xlu0 %v2117, 91
        %v2138 = vpop.permute.xlu0 %2137
        %2139 = vrot.lane.b32.xlu0 %v2118, 91
        %v2140 = vpop.permute.xlu0 %2139
        %2141 = vrot.lane.b32.xlu0 %v2119, 91
        %v2142 = vpop.permute.xlu0 %2141
        %2143 = vrot.lane.b32.xlu0 %v2120, 91
        %v2144 = vpop.permute.xlu0 %2143
        %v2145 = vsel %vm2086, %v2130, %v2132
        %v2146 = vsel %vm2086, %v2132, %v2134
        %v2147 = vsel %vm2086, %v2134, %v2136
        %v2148 = vsel %vm2086, %v2138, %v2140
        %v2149 = vsel %vm2086, %v2140, %v2142
        %v2150 = vsel %vm2086, %v2142, %v2144
        %v2159 = vadd.f32 %v2101, %v2145
        %v2160 = vadd.f32 %v2102, %v2146
        %v2161 = vadd.f32 %v2103, %v2147
        %v2162 = vadd.f32 %v2104, %v2136
        %v2163 = vadd.f32 %v2105, %v2148
        %v2164 = vadd.f32 %v2106, %v2149
        %v2165 = vadd.f32 %v2107, %v2150
        %v2166 = vadd.f32 %v2108, %v2144
        %2167 = vset.pattern.permute.xlu0 30
        %2168 = vperm.xlu0 %2167, %v277
        %v2169 = vpop.permute.xlu0 %2168
        %v2171 = vmul.f32 %v2169, %v515
        %v2172 = vmul.f32 %v2169, %v519
        %v2173 = vmul.f32 %v2169, %v523
        %v2174 = vmul.f32 %v2169, %v527
        %v2175 = vmul.f32 %v2169, %v531
        %v2176 = vmul.f32 %v2169, %v535
        %v2177 = vmul.f32 %v2169, %v539
        %v2178 = vmul.f32 %v2169, %v543
        %2187 = vrot.lane.b32.xlu0 %v2171, 91
        %v2188 = vpop.permute.xlu0 %2187
        %2189 = vrot.lane.b32.xlu0 %v2172, 91
        %v2190 = vpop.permute.xlu0 %2189
        %2191 = vrot.lane.b32.xlu0 %v2173, 91
        %v2192 = vpop.permute.xlu0 %2191
        %2193 = vrot.lane.b32.xlu0 %v2174, 91
        %v2194 = vpop.permute.xlu0 %2193
        %2195 = vrot.lane.b32.xlu0 %v2175, 91
        %v2196 = vpop.permute.xlu0 %2195
        %2197 = vrot.lane.b32.xlu0 %v2176, 91
        %v2198 = vpop.permute.xlu0 %2197
        %2199 = vrot.lane.b32.xlu0 %v2177, 91
        %v2200 = vpop.permute.xlu0 %2199
        %2201 = vrot.lane.b32.xlu0 %v2178, 91
        %v2202 = vpop.permute.xlu0 %2201
        %v2203 = vsel %vm2086, %v2188, %v2190
        %v2204 = vsel %vm2086, %v2190, %v2192
        %v2205 = vsel %vm2086, %v2192, %v2194
        %v2206 = vsel %vm2086, %v2196, %v2198
        %v2207 = vsel %vm2086, %v2198, %v2200
        %v2208 = vsel %vm2086, %v2200, %v2202
        %v2217 = vadd.f32 %v2159, %v2203
        %v2218 = vadd.f32 %v2160, %v2204
        %v2219 = vadd.f32 %v2161, %v2205
        %v2220 = vadd.f32 %v2162, %v2194
        %v2221 = vadd.f32 %v2163, %v2206
        %v2222 = vadd.f32 %v2164, %v2207
        %v2223 = vadd.f32 %v2165, %v2208
        %v2224 = vadd.f32 %v2166, %v2202
        %2225 = vset.pattern.permute.xlu0 31
        %2226 = vperm.xlu0 %2225, %v277
        %v2227 = vpop.permute.xlu0 %2226
        %v2229 = vmul.f32 %v2227, %v607
        %v2230 = vmul.f32 %v2227, %v611
        %v2231 = vmul.f32 %v2227, %v615
        %v2232 = vmul.f32 %v2227, %v619
        %v2233 = vmul.f32 %v2227, %v623
        %v2234 = vmul.f32 %v2227, %v627
        %v2235 = vmul.f32 %v2227, %v631
        %v2236 = vmul.f32 %v2227, %v635
        %2245 = vrot.lane.b32.xlu0 %v2229, 91
        %v2246 = vpop.permute.xlu0 %2245
        %2247 = vrot.lane.b32.xlu0 %v2230, 91
        %v2248 = vpop.permute.xlu0 %2247
        %2249 = vrot.lane.b32.xlu0 %v2231, 91
        %v2250 = vpop.permute.xlu0 %2249
        %2251 = vrot.lane.b32.xlu0 %v2232, 91
        %v2252 = vpop.permute.xlu0 %2251
        %2253 = vrot.lane.b32.xlu0 %v2233, 91
        %v2254 = vpop.permute.xlu0 %2253
        %2255 = vrot.lane.b32.xlu0 %v2234, 91
        %v2256 = vpop.permute.xlu0 %2255
        %2257 = vrot.lane.b32.xlu0 %v2235, 91
        %v2258 = vpop.permute.xlu0 %2257
        %2259 = vrot.lane.b32.xlu0 %v2236, 91
        %v2260 = vpop.permute.xlu0 %2259
        %v2261 = vsel %vm2086, %v2246, %v2248
        %v2262 = vsel %vm2086, %v2248, %v2250
        %v2263 = vsel %vm2086, %v2250, %v2252
        %v2264 = vsel %vm2086, %v2254, %v2256
        %v2265 = vsel %vm2086, %v2256, %v2258
        %v2266 = vsel %vm2086, %v2258, %v2260
        %v2275 = vadd.f32 %v2217, %v2261
        %v2276 = vadd.f32 %v2218, %v2262
        %v2277 = vadd.f32 %v2219, %v2263
        %v2278 = vadd.f32 %v2220, %v2252
        %v2279 = vadd.f32 %v2221, %v2264
        %v2280 = vadd.f32 %v2222, %v2265
        %v2281 = vadd.f32 %v2223, %v2266
        %v2282 = vadd.f32 %v2224, %v2260
        %2283 = vset.pattern.permute.xlu0 32
        %2284 = vperm.xlu0 %2283, %v277
        %v2285 = vpop.permute.xlu0 %2284
        %v2287 = vmul.f32 %v2285, %v331
        %v2288 = vmul.f32 %v2285, %v335
        %v2289 = vmul.f32 %v2285, %v339
        %v2290 = vmul.f32 %v2285, %v343
        %v2291 = vmul.f32 %v2285, %v347
        %v2292 = vmul.f32 %v2285, %v351
        %v2293 = vmul.f32 %v2285, %v355
        %v2294 = vmul.f32 %v2285, %v359
        %2303 = vrot.lane.b32.xlu0 %v2287, 90
        %v2304 = vpop.permute.xlu0 %2303
        %2305 = vrot.lane.b32.xlu0 %v2288, 90
        %v2306 = vpop.permute.xlu0 %2305
        %2307 = vrot.lane.b32.xlu0 %v2289, 90
        %v2308 = vpop.permute.xlu0 %2307
        %2309 = vrot.lane.b32.xlu0 %v2290, 90
        %v2310 = vpop.permute.xlu0 %2309
        %2311 = vrot.lane.b32.xlu0 %v2291, 90
        %v2312 = vpop.permute.xlu0 %2311
        %2313 = vrot.lane.b32.xlu0 %v2292, 90
        %v2314 = vpop.permute.xlu0 %2313
        %2315 = vrot.lane.b32.xlu0 %v2293, 90
        %v2316 = vpop.permute.xlu0 %2315
        %2317 = vrot.lane.b32.xlu0 %v2294, 90
        %v2318 = vpop.permute.xlu0 %2317
        %vm2319 = vcmask 736256
        %v2320 = vsel %vm2319, %v2304, %v2306
        %v2321 = vsel %vm2319, %v2306, %v2308
        %v2322 = vsel %vm2319, %v2308, %v2310
        %v2323 = vsel %vm2319, %v2312, %v2314
        %v2324 = vsel %vm2319, %v2314, %v2316
        %v2325 = vsel %vm2319, %v2316, %v2318
        %v2334 = vadd.f32 %v2275, %v2320
        %v2335 = vadd.f32 %v2276, %v2321
        %v2336 = vadd.f32 %v2277, %v2322
        %v2337 = vadd.f32 %v2278, %v2310
        %v2338 = vadd.f32 %v2279, %v2323
        %v2339 = vadd.f32 %v2280, %v2324
        %v2340 = vadd.f32 %v2281, %v2325
        %v2341 = vadd.f32 %v2282, %v2318
        %2342 = vset.pattern.permute.xlu0 33
        %2343 = vperm.xlu0 %2342, %v277
        %v2344 = vpop.permute.xlu0 %2343
        %v2346 = vmul.f32 %v2344, %v423
        %v2347 = vmul.f32 %v2344, %v427
        %v2348 = vmul.f32 %v2344, %v431
        %v2349 = vmul.f32 %v2344, %v435
        %v2350 = vmul.f32 %v2344, %v439
        %v2351 = vmul.f32 %v2344, %v443
        %v2352 = vmul.f32 %v2344, %v447
        %v2353 = vmul.f32 %v2344, %v451
        %2362 = vrot.lane.b32.xlu0 %v2346, 90
        %v2363 = vpop.permute.xlu0 %2362
        %2364 = vrot.lane.b32.xlu0 %v2347, 90
        %v2365 = vpop.permute.xlu0 %2364
        %2366 = vrot.lane.b32.xlu0 %v2348, 90
        %v2367 = vpop.permute.xlu0 %2366
        %2368 = vrot.lane.b32.xlu0 %v2349, 90
        %v2369 = vpop.permute.xlu0 %2368
        %2370 = vrot.lane.b32.xlu0 %v2350, 90
        %v2371 = vpop.permute.xlu0 %2370
        %2372 = vrot.lane.b32.xlu0 %v2351, 90
        %v2373 = vpop.permute.xlu0 %2372
        %2374 = vrot.lane.b32.xlu0 %v2352, 90
        %v2375 = vpop.permute.xlu0 %2374
        %2376 = vrot.lane.b32.xlu0 %v2353, 90
        %v2377 = vpop.permute.xlu0 %2376
        %v2378 = vsel %vm2319, %v2363, %v2365
        %v2379 = vsel %vm2319, %v2365, %v2367
        %v2380 = vsel %vm2319, %v2367, %v2369
        %v2381 = vsel %vm2319, %v2371, %v2373
        %v2382 = vsel %vm2319, %v2373, %v2375
        %v2383 = vsel %vm2319, %v2375, %v2377
        %v2392 = vadd.f32 %v2334, %v2378
        %v2393 = vadd.f32 %v2335, %v2379
        %v2394 = vadd.f32 %v2336, %v2380
        %v2395 = vadd.f32 %v2337, %v2369
        %v2396 = vadd.f32 %v2338, %v2381
        %v2397 = vadd.f32 %v2339, %v2382
        %v2398 = vadd.f32 %v2340, %v2383
        %v2399 = vadd.f32 %v2341, %v2377
        %2400 = vset.pattern.permute.xlu0 34
        %2401 = vperm.xlu0 %2400, %v277
        %v2402 = vpop.permute.xlu0 %2401
        %v2404 = vmul.f32 %v2402, %v515
        %v2405 = vmul.f32 %v2402, %v519
        %v2406 = vmul.f32 %v2402, %v523
        %v2407 = vmul.f32 %v2402, %v527
        %v2408 = vmul.f32 %v2402, %v531
        %v2409 = vmul.f32 %v2402, %v535
        %v2410 = vmul.f32 %v2402, %v539
        %v2411 = vmul.f32 %v2402, %v543
        %2420 = vrot.lane.b32.xlu0 %v2404, 90
        %v2421 = vpop.permute.xlu0 %2420
        %2422 = vrot.lane.b32.xlu0 %v2405, 90
        %v2423 = vpop.permute.xlu0 %2422
        %2424 = vrot.lane.b32.xlu0 %v2406, 90
        %v2425 = vpop.permute.xlu0 %2424
        %2426 = vrot.lane.b32.xlu0 %v2407, 90
        %v2427 = vpop.permute.xlu0 %2426
        %2428 = vrot.lane.b32.xlu0 %v2408, 90
        %v2429 = vpop.permute.xlu0 %2428
        %2430 = vrot.lane.b32.xlu0 %v2409, 90
        %v2431 = vpop.permute.xlu0 %2430
        %2432 = vrot.lane.b32.xlu0 %v2410, 90
        %v2433 = vpop.permute.xlu0 %2432
        %2434 = vrot.lane.b32.xlu0 %v2411, 90
        %v2435 = vpop.permute.xlu0 %2434
        %v2436 = vsel %vm2319, %v2421, %v2423
        %v2437 = vsel %vm2319, %v2423, %v2425
        %v2438 = vsel %vm2319, %v2425, %v2427
        %v2439 = vsel %vm2319, %v2429, %v2431
        %v2440 = vsel %vm2319, %v2431, %v2433
        %v2441 = vsel %vm2319, %v2433, %v2435
        %v2450 = vadd.f32 %v2392, %v2436
        %v2451 = vadd.f32 %v2393, %v2437
        %v2452 = vadd.f32 %v2394, %v2438
        %v2453 = vadd.f32 %v2395, %v2427
        %v2454 = vadd.f32 %v2396, %v2439
        %v2455 = vadd.f32 %v2397, %v2440
        %v2456 = vadd.f32 %v2398, %v2441
        %v2457 = vadd.f32 %v2399, %v2435
        %2458 = vset.pattern.permute.xlu0 35
        %2459 = vperm.xlu0 %2458, %v277
        %v2460 = vpop.permute.xlu0 %2459
        %v2462 = vmul.f32 %v2460, %v607
        %v2463 = vmul.f32 %v2460, %v611
        %v2464 = vmul.f32 %v2460, %v615
        %v2465 = vmul.f32 %v2460, %v619
        %v2466 = vmul.f32 %v2460, %v623
        %v2467 = vmul.f32 %v2460, %v627
        %v2468 = vmul.f32 %v2460, %v631
        %v2469 = vmul.f32 %v2460, %v635
        %2478 = vrot.lane.b32.xlu0 %v2462, 90
        %v2479 = vpop.permute.xlu0 %2478
        %2480 = vrot.lane.b32.xlu0 %v2463, 90
        %v2481 = vpop.permute.xlu0 %2480
        %2482 = vrot.lane.b32.xlu0 %v2464, 90
        %v2483 = vpop.permute.xlu0 %2482
        %2484 = vrot.lane.b32.xlu0 %v2465, 90
        %v2485 = vpop.permute.xlu0 %2484
        %2486 = vrot.lane.b32.xlu0 %v2466, 90
        %v2487 = vpop.permute.xlu0 %2486
        %2488 = vrot.lane.b32.xlu0 %v2467, 90
        %v2489 = vpop.permute.xlu0 %2488
        %2490 = vrot.lane.b32.xlu0 %v2468, 90
        %v2491 = vpop.permute.xlu0 %2490
        %2492 = vrot.lane.b32.xlu0 %v2469, 90
        %v2493 = vpop.permute.xlu0 %2492
        %v2494 = vsel %vm2319, %v2479, %v2481
        %v2495 = vsel %vm2319, %v2481, %v2483
        %v2496 = vsel %vm2319, %v2483, %v2485
        %v2497 = vsel %vm2319, %v2487, %v2489
        %v2498 = vsel %vm2319, %v2489, %v2491
        %v2499 = vsel %vm2319, %v2491, %v2493
        %v2508 = vadd.f32 %v2450, %v2494
        %v2509 = vadd.f32 %v2451, %v2495
        %v2510 = vadd.f32 %v2452, %v2496
        %v2511 = vadd.f32 %v2453, %v2485
        %v2512 = vadd.f32 %v2454, %v2497
        %v2513 = vadd.f32 %v2455, %v2498
        %v2514 = vadd.f32 %v2456, %v2499
        %v2515 = vadd.f32 %v2457, %v2493
        %v2516 = vld [vmem:[%s3] sm:$0xf]
        %2518 = vset.pattern.permute.xlu0 0
        %2519 = vperm.xlu0 %2518, %v2516
        %v2520 = vpop.permute.xlu0 %2519
        %v2522 = vadd.f32 %v2508, %v2520
        %v2523 = vadd.f32 %v2509, %v2520
        %v2524 = vadd.f32 %v2510, %v2520
        %v2525 = vadd.f32 %v2511, %v2520
        %v2526 = vadd.f32 %v2512, %v2520
        %v2527 = vadd.f32 %v2513, %v2520
        %v2528 = vadd.f32 %v2514, %v2520
        %v2529 = vadd.f32 %v2515, %v2520
        %v2530 = vmax.f32 %v2522, 0.0
        %v2531 = vmax.f32 %v2523, 0.0
        %v2532 = vmax.f32 %v2524, 0.0
        %v2533 = vmax.f32 %v2525, 0.0
        %v2534 = vmax.f32 %v2526, 0.0
        %v2535 = vmax.f32 %v2527, 0.0
        %v2536 = vmax.f32 %v2528, 0.0
        %v2537 = vmax.f32 %v2529, 0.0
        %v2538 = vld [vmem:[%s5] sm:$0xf]
        %v2540 = vlaneseq
        %v2541 = vshrl.u32 %v2540, 7
        %v2542 = vsub.s32 0, %v2541
        %v2543 = vrot.slane %v2538, %v2542
        %v2544 = vlaneseq
        %v2545 = vshrl.u32 %v2544, 7
        %v2546 = vsub.s32 1, %v2545
        %v2547 = vrot.slane %v2538, %v2546
        %v2548 = vlaneseq
        %v2549 = vshrl.u32 %v2548, 7
        %v2550 = vsub.s32 2, %v2549
        %v2551 = vrot.slane %v2538, %v2550
        %v2552 = vlaneseq
        %v2553 = vshrl.u32 %v2552, 7
        %v2554 = vsub.s32 3, %v2553
        %v2555 = vrot.slane %v2538, %v2554
        %2556 = vrot.lane.b32.xlu0 %v2543, 17
        %v2557 = vpop.permute.xlu0 %2556
        %2558 = vrot.lane.b32.xlu0 %v2547, 17
        %v2559 = vpop.permute.xlu0 %2558
        %2560 = vrot.lane.b32.xlu0 %v2551, 17
        %v2561 = vpop.permute.xlu0 %2560
        %2562 = vrot.lane.b32.xlu0 %v2555, 17
        %v2563 = vpop.permute.xlu0 %2562
        %vm2564 = vcmask 138240
        %v2565 = vsel %vm2564, %v2557, %v2559
        %v2566 = vsel %vm2564, %v2559, %v2561
        %v2567 = vsel %vm2564, %v2561, %v2563
        %v2572 = vmul.f32 %v2530, %v2557
        %v2573 = vmul.f32 %v2531, %v2565
        %v2574 = vmul.f32 %v2532, %v2566
        %v2575 = vmul.f32 %v2533, %v2567
        %v2576 = vmul.f32 %v2534, %v2557
        %v2577 = vmul.f32 %v2535, %v2565
        %v2578 = vmul.f32 %v2536, %v2566
        %v2579 = vmul.f32 %v2537, %v2567
        %2581 = vset.pattern.permute.xlu0 0
        %2582 = vperm.xlu0 %2581, %v278
        %v2583 = vpop.permute.xlu0 %2582
        %v2585 = vlaneseq
        %v2586 = vshrl.u32 %v2585, 7
        %v2587 = vsub.s32 0, %v2586
        %v2588 = vrot.slane %v2572, %v2587
        %v2589 = vlaneseq
        %v2590 = vshrl.u32 %v2589, 7
        %v2591 = vsub.s32 0, %v2590
        %v2592 = vrot.slane %v2573, %v2591
        %v2593 = vlaneseq
        %v2594 = vshrl.u32 %v2593, 7
        %v2595 = vsub.s32 0, %v2594
        %v2596 = vrot.slane %v2574, %v2595
        %v2597 = vlaneseq
        %v2598 = vshrl.u32 %v2597, 7
        %v2599 = vsub.s32 0, %v2598
        %v2600 = vrot.slane %v2576, %v2599
        %v2601 = vlaneseq
        %v2602 = vshrl.u32 %v2601, 7
        %v2603 = vsub.s32 0, %v2602
        %v2604 = vrot.slane %v2577, %v2603
        %v2605 = vlaneseq
        %v2606 = vshrl.u32 %v2605, 7
        %v2607 = vsub.s32 0, %v2606
        %v2608 = vrot.slane %v2578, %v2607
        %v2609 = vmul.f32 %v2583, %v2588
        %v2610 = vmul.f32 %v2583, %v2592
        %v2611 = vmul.f32 %v2583, %v2596
        %v2612 = vmul.f32 %v2583, %v2600
        %v2613 = vmul.f32 %v2583, %v2604
        %v2614 = vmul.f32 %v2583, %v2608
        %v2615 = vadd.f32 %v2609, 0.0
        %v2616 = vadd.f32 %v2610, 0.0
        %v2617 = vadd.f32 %v2611, 0.0
        %v2618 = vadd.f32 %v2612, 0.0
        %v2619 = vadd.f32 %v2613, 0.0
        %v2620 = vadd.f32 %v2614, 0.0
        %2621 = vset.pattern.permute.xlu0 1
        %2622 = vperm.xlu0 %2621, %v278
        %v2623 = vpop.permute.xlu0 %2622
        %v2625 = vlaneseq
        %v2626 = vshrl.u32 %v2625, 7
        %v2627 = vsub.s32 1, %v2626
        %v2628 = vrot.slane %v2572, %v2627
        %v2629 = vlaneseq
        %v2630 = vshrl.u32 %v2629, 7
        %v2631 = vsub.s32 1, %v2630
        %v2632 = vrot.slane %v2573, %v2631
        %v2633 = vlaneseq
        %v2634 = vshrl.u32 %v2633, 7
        %v2635 = vsub.s32 1, %v2634
        %v2636 = vrot.slane %v2574, %v2635
        %v2637 = vlaneseq
        %v2638 = vshrl.u32 %v2637, 7
        %v2639 = vsub.s32 1, %v2638
        %v2640 = vrot.slane %v2576, %v2639
        %v2641 = vlaneseq
        %v2642 = vshrl.u32 %v2641, 7
        %v2643 = vsub.s32 1, %v2642
        %v2644 = vrot.slane %v2577, %v2643
        %v2645 = vlaneseq
        %v2646 = vshrl.u32 %v2645, 7
        %v2647 = vsub.s32 1, %v2646
        %v2648 = vrot.slane %v2578, %v2647
        %v2649 = vmul.f32 %v2623, %v2628
        %v2650 = vmul.f32 %v2623, %v2632
        %v2651 = vmul.f32 %v2623, %v2636
        %v2652 = vmul.f32 %v2623, %v2640
        %v2653 = vmul.f32 %v2623, %v2644
        %v2654 = vmul.f32 %v2623, %v2648
        %v2655 = vadd.f32 %v2615, %v2649
        %v2656 = vadd.f32 %v2616, %v2650
        %v2657 = vadd.f32 %v2617, %v2651
        %v2658 = vadd.f32 %v2618, %v2652
        %v2659 = vadd.f32 %v2619, %v2653
        %v2660 = vadd.f32 %v2620, %v2654
        %2661 = vset.pattern.permute.xlu0 2
        %2662 = vperm.xlu0 %2661, %v278
        %v2663 = vpop.permute.xlu0 %2662
        %v2665 = vlaneseq
        %v2666 = vshrl.u32 %v2665, 7
        %v2667 = vsub.s32 2, %v2666
        %v2668 = vrot.slane %v2572, %v2667
        %v2669 = vlaneseq
        %v2670 = vshrl.u32 %v2669, 7
        %v2671 = vsub.s32 2, %v2670
        %v2672 = vrot.slane %v2573, %v2671
        %v2673 = vlaneseq
        %v2674 = vshrl.u32 %v2673, 7
        %v2675 = vsub.s32 2, %v2674
        %v2676 = vrot.slane %v2574, %v2675
        %v2677 = vlaneseq
        %v2678 = vshrl.u32 %v2677, 7
        %v2679 = vsub.s32 2, %v2678
        %v2680 = vrot.slane %v2576, %v2679
        %v2681 = vlaneseq
        %v2682 = vshrl.u32 %v2681, 7
        %v2683 = vsub.s32 2, %v2682
        %v2684 = vrot.slane %v2577, %v2683
        %v2685 = vlaneseq
        %v2686 = vshrl.u32 %v2685, 7
        %v2687 = vsub.s32 2, %v2686
        %v2688 = vrot.slane %v2578, %v2687
        %v2689 = vmul.f32 %v2663, %v2668
        %v2690 = vmul.f32 %v2663, %v2672
        %v2691 = vmul.f32 %v2663, %v2676
        %v2692 = vmul.f32 %v2663, %v2680
        %v2693 = vmul.f32 %v2663, %v2684
        %v2694 = vmul.f32 %v2663, %v2688
        %v2695 = vadd.f32 %v2655, %v2689
        %v2696 = vadd.f32 %v2656, %v2690
        %v2697 = vadd.f32 %v2657, %v2691
        %v2698 = vadd.f32 %v2658, %v2692
        %v2699 = vadd.f32 %v2659, %v2693
        %v2700 = vadd.f32 %v2660, %v2694
        %2701 = vset.pattern.permute.xlu0 3
        %2702 = vperm.xlu0 %2701, %v278
        %v2703 = vpop.permute.xlu0 %2702
        %v2705 = vlaneseq
        %v2706 = vshrl.u32 %v2705, 7
        %v2707 = vsub.s32 3, %v2706
        %v2708 = vrot.slane %v2572, %v2707
        %v2709 = vlaneseq
        %v2710 = vshrl.u32 %v2709, 7
        %v2711 = vsub.s32 3, %v2710
        %v2712 = vrot.slane %v2573, %v2711
        %v2713 = vlaneseq
        %v2714 = vshrl.u32 %v2713, 7
        %v2715 = vsub.s32 3, %v2714
        %v2716 = vrot.slane %v2574, %v2715
        %v2717 = vlaneseq
        %v2718 = vshrl.u32 %v2717, 7
        %v2719 = vsub.s32 3, %v2718
        %v2720 = vrot.slane %v2576, %v2719
        %v2721 = vlaneseq
        %v2722 = vshrl.u32 %v2721, 7
        %v2723 = vsub.s32 3, %v2722
        %v2724 = vrot.slane %v2577, %v2723
        %v2725 = vlaneseq
        %v2726 = vshrl.u32 %v2725, 7
        %v2727 = vsub.s32 3, %v2726
        %v2728 = vrot.slane %v2578, %v2727
        %v2729 = vmul.f32 %v2703, %v2708
        %v2730 = vmul.f32 %v2703, %v2712
        %v2731 = vmul.f32 %v2703, %v2716
        %v2732 = vmul.f32 %v2703, %v2720
        %v2733 = vmul.f32 %v2703, %v2724
        %v2734 = vmul.f32 %v2703, %v2728
        %v2735 = vadd.f32 %v2695, %v2729
        %v2736 = vadd.f32 %v2696, %v2730
        %v2737 = vadd.f32 %v2697, %v2731
        %v2738 = vadd.f32 %v2698, %v2732
        %v2739 = vadd.f32 %v2699, %v2733
        %v2740 = vadd.f32 %v2700, %v2734
        %2741 = vset.pattern.permute.xlu0 4
        %2742 = vperm.xlu0 %2741, %v278
        %v2743 = vpop.permute.xlu0 %2742
        %v2745 = vmul.f32 %v2743, %v2588
        %v2746 = vmul.f32 %v2743, %v2592
        %v2747 = vmul.f32 %v2743, %v2596
        %v2748 = vmul.f32 %v2743, %v2600
        %v2749 = vmul.f32 %v2743, %v2604
        %v2750 = vmul.f32 %v2743, %v2608
        %2757 = vrot.lane.b32.xlu0 %v2745, 127
        %v2758 = vpop.permute.xlu0 %2757
        %2759 = vrot.lane.b32.xlu0 %v2746, 127
        %v2760 = vpop.permute.xlu0 %2759
        %2761 = vrot.lane.b32.xlu0 %v2747, 127
        %v2762 = vpop.permute.xlu0 %2761
        %2763 = vrot.lane.b32.xlu0 %v2748, 127
        %v2764 = vpop.permute.xlu0 %2763
        %2765 = vrot.lane.b32.xlu0 %v2749, 127
        %v2766 = vpop.permute.xlu0 %2765
        %2767 = vrot.lane.b32.xlu0 %v2750, 127
        %v2768 = vpop.permute.xlu0 %2767
        %v2769 = vsel %vm688, %v2758, %v2760
        %v2770 = vsel %vm688, %v2760, %v2762
        %v2771 = vsel %vm688, %v2764, %v2766
        %v2772 = vsel %vm688, %v2766, %v2768
        %v2779 = vadd.f32 %v2735, %v2769
        %v2780 = vadd.f32 %v2736, %v2770
        %v2781 = vadd.f32 %v2737, %v2762
        %v2782 = vadd.f32 %v2738, %v2771
        %v2783 = vadd.f32 %v2739, %v2772
        %v2784 = vadd.f32 %v2740, %v2768
        %2785 = vset.pattern.permute.xlu0 5
        %2786 = vperm.xlu0 %2785, %v278
        %v2787 = vpop.permute.xlu0 %2786
        %v2789 = vmul.f32 %v2787, %v2628
        %v2790 = vmul.f32 %v2787, %v2632
        %v2791 = vmul.f32 %v2787, %v2636
        %v2792 = vmul.f32 %v2787, %v2640
        %v2793 = vmul.f32 %v2787, %v2644
        %v2794 = vmul.f32 %v2787, %v2648
        %2801 = vrot.lane.b32.xlu0 %v2789, 127
        %v2802 = vpop.permute.xlu0 %2801
        %2803 = vrot.lane.b32.xlu0 %v2790, 127
        %v2804 = vpop.permute.xlu0 %2803
        %2805 = vrot.lane.b32.xlu0 %v2791, 127
        %v2806 = vpop.permute.xlu0 %2805
        %2807 = vrot.lane.b32.xlu0 %v2792, 127
        %v2808 = vpop.permute.xlu0 %2807
        %2809 = vrot.lane.b32.xlu0 %v2793, 127
        %v2810 = vpop.permute.xlu0 %2809
        %2811 = vrot.lane.b32.xlu0 %v2794, 127
        %v2812 = vpop.permute.xlu0 %2811
        %v2813 = vsel %vm688, %v2802, %v2804
        %v2814 = vsel %vm688, %v2804, %v2806
        %v2815 = vsel %vm688, %v2808, %v2810
        %v2816 = vsel %vm688, %v2810, %v2812
        %v2823 = vadd.f32 %v2779, %v2813
        %v2824 = vadd.f32 %v2780, %v2814
        %v2825 = vadd.f32 %v2781, %v2806
        %v2826 = vadd.f32 %v2782, %v2815
        %v2827 = vadd.f32 %v2783, %v2816
        %v2828 = vadd.f32 %v2784, %v2812
        %2829 = vset.pattern.permute.xlu0 6
        %2830 = vperm.xlu0 %2829, %v278
        %v2831 = vpop.permute.xlu0 %2830
        %v2833 = vmul.f32 %v2831, %v2668
        %v2834 = vmul.f32 %v2831, %v2672
        %v2835 = vmul.f32 %v2831, %v2676
        %v2836 = vmul.f32 %v2831, %v2680
        %v2837 = vmul.f32 %v2831, %v2684
        %v2838 = vmul.f32 %v2831, %v2688
        %2845 = vrot.lane.b32.xlu0 %v2833, 127
        %v2846 = vpop.permute.xlu0 %2845
        %2847 = vrot.lane.b32.xlu0 %v2834, 127
        %v2848 = vpop.permute.xlu0 %2847
        %2849 = vrot.lane.b32.xlu0 %v2835, 127
        %v2850 = vpop.permute.xlu0 %2849
        %2851 = vrot.lane.b32.xlu0 %v2836, 127
        %v2852 = vpop.permute.xlu0 %2851
        %2853 = vrot.lane.b32.xlu0 %v2837, 127
        %v2854 = vpop.permute.xlu0 %2853
        %2855 = vrot.lane.b32.xlu0 %v2838, 127
        %v2856 = vpop.permute.xlu0 %2855
        %v2857 = vsel %vm688, %v2846, %v2848
        %v2858 = vsel %vm688, %v2848, %v2850
        %v2859 = vsel %vm688, %v2852, %v2854
        %v2860 = vsel %vm688, %v2854, %v2856
        %v2867 = vadd.f32 %v2823, %v2857
        %v2868 = vadd.f32 %v2824, %v2858
        %v2869 = vadd.f32 %v2825, %v2850
        %v2870 = vadd.f32 %v2826, %v2859
        %v2871 = vadd.f32 %v2827, %v2860
        %v2872 = vadd.f32 %v2828, %v2856
        %2873 = vset.pattern.permute.xlu0 7
        %2874 = vperm.xlu0 %2873, %v278
        %v2875 = vpop.permute.xlu0 %2874
        %v2877 = vmul.f32 %v2875, %v2708
        %v2878 = vmul.f32 %v2875, %v2712
        %v2879 = vmul.f32 %v2875, %v2716
        %v2880 = vmul.f32 %v2875, %v2720
        %v2881 = vmul.f32 %v2875, %v2724
        %v2882 = vmul.f32 %v2875, %v2728
        %2889 = vrot.lane.b32.xlu0 %v2877, 127
        %v2890 = vpop.permute.xlu0 %2889
        %2891 = vrot.lane.b32.xlu0 %v2878, 127
        %v2892 = vpop.permute.xlu0 %2891
        %2893 = vrot.lane.b32.xlu0 %v2879, 127
        %v2894 = vpop.permute.xlu0 %2893
        %2895 = vrot.lane.b32.xlu0 %v2880, 127
        %v2896 = vpop.permute.xlu0 %2895
        %2897 = vrot.lane.b32.xlu0 %v2881, 127
        %v2898 = vpop.permute.xlu0 %2897
        %2899 = vrot.lane.b32.xlu0 %v2882, 127
        %v2900 = vpop.permute.xlu0 %2899
        %v2901 = vsel %vm688, %v2890, %v2892
        %v2902 = vsel %vm688, %v2892, %v2894
        %v2903 = vsel %vm688, %v2896, %v2898
        %v2904 = vsel %vm688, %v2898, %v2900
        %v2911 = vadd.f32 %v2867, %v2901
        %v2912 = vadd.f32 %v2868, %v2902
        %v2913 = vadd.f32 %v2869, %v2894
        %v2914 = vadd.f32 %v2870, %v2903
        %v2915 = vadd.f32 %v2871, %v2904
        %v2916 = vadd.f32 %v2872, %v2900
        %2917 = vset.pattern.permute.xlu0 8
        %2918 = vperm.xlu0 %2917, %v278
        %v2919 = vpop.permute.xlu0 %2918
        %v2921 = vmul.f32 %v2919, %v2588
        %v2922 = vmul.f32 %v2919, %v2592
        %v2923 = vmul.f32 %v2919, %v2596
        %v2924 = vmul.f32 %v2919, %v2600
        %v2925 = vmul.f32 %v2919, %v2604
        %v2926 = vmul.f32 %v2919, %v2608
        %2933 = vrot.lane.b32.xlu0 %v2921, 126
        %v2934 = vpop.permute.xlu0 %2933
        %2935 = vrot.lane.b32.xlu0 %v2922, 126
        %v2936 = vpop.permute.xlu0 %2935
        %2937 = vrot.lane.b32.xlu0 %v2923, 126
        %v2938 = vpop.permute.xlu0 %2937
        %2939 = vrot.lane.b32.xlu0 %v2924, 126
        %v2940 = vpop.permute.xlu0 %2939
        %2941 = vrot.lane.b32.xlu0 %v2925, 126
        %v2942 = vpop.permute.xlu0 %2941
        %2943 = vrot.lane.b32.xlu0 %v2926, 126
        %v2944 = vpop.permute.xlu0 %2943
        %v2945 = vsel %vm921, %v2934, %v2936
        %v2946 = vsel %vm921, %v2936, %v2938
        %v2947 = vsel %vm921, %v2940, %v2942
        %v2948 = vsel %vm921, %v2942, %v2944
        %v2955 = vadd.f32 %v2911, %v2945
        %v2956 = vadd.f32 %v2912, %v2946
        %v2957 = vadd.f32 %v2913, %v2938
        %v2958 = vadd.f32 %v2914, %v2947
        %v2959 = vadd.f32 %v2915, %v2948
        %v2960 = vadd.f32 %v2916, %v2944
        %2961 = vset.pattern.permute.xlu0 9
        %2962 = vperm.xlu0 %2961, %v278
        %v2963 = vpop.permute.xlu0 %2962
        %v2965 = vmul.f32 %v2963, %v2628
        %v2966 = vmul.f32 %v2963, %v2632
        %v2967 = vmul.f32 %v2963, %v2636
        %v2968 = vmul.f32 %v2963, %v2640
        %v2969 = vmul.f32 %v2963, %v2644
        %v2970 = vmul.f32 %v2963, %v2648
        %2977 = vrot.lane.b32.xlu0 %v2965, 126
        %v2978 = vpop.permute.xlu0 %2977
        %2979 = vrot.lane.b32.xlu0 %v2966, 126
        %v2980 = vpop.permute.xlu0 %2979
        %2981 = vrot.lane.b32.xlu0 %v2967, 126
        %v2982 = vpop.permute.xlu0 %2981
        %2983 = vrot.lane.b32.xlu0 %v2968, 126
        %v2984 = vpop.permute.xlu0 %2983
        %2985 = vrot.lane.b32.xlu0 %v2969, 126
        %v2986 = vpop.permute.xlu0 %2985
        %2987 = vrot.lane.b32.xlu0 %v2970, 126
        %v2988 = vpop.permute.xlu0 %2987
        %v2989 = vsel %vm921, %v2978, %v2980
        %v2990 = vsel %vm921, %v2980, %v2982
        %v2991 = vsel %vm921, %v2984, %v2986
        %v2992 = vsel %vm921, %v2986, %v2988
        %v2999 = vadd.f32 %v2955, %v2989
        %v3000 = vadd.f32 %v2956, %v2990
        %v3001 = vadd.f32 %v2957, %v2982
        %v3002 = vadd.f32 %v2958, %v2991
        %v3003 = vadd.f32 %v2959, %v2992
        %v3004 = vadd.f32 %v2960, %v2988
        %3005 = vset.pattern.permute.xlu0 10
        %3006 = vperm.xlu0 %3005, %v278
        %v3007 = vpop.permute.xlu0 %3006
        %v3009 = vmul.f32 %v3007, %v2668
        %v3010 = vmul.f32 %v3007, %v2672
        %v3011 = vmul.f32 %v3007, %v2676
        %v3012 = vmul.f32 %v3007, %v2680
        %v3013 = vmul.f32 %v3007, %v2684
        %v3014 = vmul.f32 %v3007, %v2688
        %3021 = vrot.lane.b32.xlu0 %v3009, 126
        %v3022 = vpop.permute.xlu0 %3021
        %3023 = vrot.lane.b32.xlu0 %v3010, 126
        %v3024 = vpop.permute.xlu0 %3023
        %3025 = vrot.lane.b32.xlu0 %v3011, 126
        %v3026 = vpop.permute.xlu0 %3025
        %3027 = vrot.lane.b32.xlu0 %v3012, 126
        %v3028 = vpop.permute.xlu0 %3027
        %3029 = vrot.lane.b32.xlu0 %v3013, 126
        %v3030 = vpop.permute.xlu0 %3029
        %3031 = vrot.lane.b32.xlu0 %v3014, 126
        %v3032 = vpop.permute.xlu0 %3031
        %v3033 = vsel %vm921, %v3022, %v3024
        %v3034 = vsel %vm921, %v3024, %v3026
        %v3035 = vsel %vm921, %v3028, %v3030
        %v3036 = vsel %vm921, %v3030, %v3032
        %v3043 = vadd.f32 %v2999, %v3033
        %v3044 = vadd.f32 %v3000, %v3034
        %v3045 = vadd.f32 %v3001, %v3026
        %v3046 = vadd.f32 %v3002, %v3035
        %v3047 = vadd.f32 %v3003, %v3036
        %v3048 = vadd.f32 %v3004, %v3032
        %3049 = vset.pattern.permute.xlu0 11
        %3050 = vperm.xlu0 %3049, %v278
        %v3051 = vpop.permute.xlu0 %3050
        %v3053 = vmul.f32 %v3051, %v2708
        %v3054 = vmul.f32 %v3051, %v2712
        %v3055 = vmul.f32 %v3051, %v2716
        %v3056 = vmul.f32 %v3051, %v2720
        %v3057 = vmul.f32 %v3051, %v2724
        %v3058 = vmul.f32 %v3051, %v2728
        %3065 = vrot.lane.b32.xlu0 %v3053, 126
        %v3066 = vpop.permute.xlu0 %3065
        %3067 = vrot.lane.b32.xlu0 %v3054, 126
        %v3068 = vpop.permute.xlu0 %3067
        %3069 = vrot.lane.b32.xlu0 %v3055, 126
        %v3070 = vpop.permute.xlu0 %3069
        %3071 = vrot.lane.b32.xlu0 %v3056, 126
        %v3072 = vpop.permute.xlu0 %3071
        %3073 = vrot.lane.b32.xlu0 %v3057, 126
        %v3074 = vpop.permute.xlu0 %3073
        %3075 = vrot.lane.b32.xlu0 %v3058, 126
        %v3076 = vpop.permute.xlu0 %3075
        %v3077 = vsel %vm921, %v3066, %v3068
        %v3078 = vsel %vm921, %v3068, %v3070
        %v3079 = vsel %vm921, %v3072, %v3074
        %v3080 = vsel %vm921, %v3074, %v3076
        %v3087 = vadd.f32 %v3043, %v3077
        %v3088 = vadd.f32 %v3044, %v3078
        %v3089 = vadd.f32 %v3045, %v3070
        %v3090 = vadd.f32 %v3046, %v3079
        %v3091 = vadd.f32 %v3047, %v3080
        %v3092 = vadd.f32 %v3048, %v3076
        %3093 = vset.pattern.permute.xlu0 12
        %3094 = vperm.xlu0 %3093, %v278
        %v3095 = vpop.permute.xlu0 %3094
        %v3097 = vmul.f32 %v3095, %v2588
        %v3098 = vmul.f32 %v3095, %v2592
        %v3099 = vmul.f32 %v3095, %v2596
        %v3100 = vmul.f32 %v3095, %v2600
        %v3101 = vmul.f32 %v3095, %v2604
        %v3102 = vmul.f32 %v3095, %v2608
        %3109 = vrot.lane.b32.xlu0 %v3097, 110
        %v3110 = vpop.permute.xlu0 %3109
        %3111 = vrot.lane.b32.xlu0 %v3098, 110
        %v3112 = vpop.permute.xlu0 %3111
        %3113 = vrot.lane.b32.xlu0 %v3099, 110
        %v3114 = vpop.permute.xlu0 %3113
        %3115 = vrot.lane.b32.xlu0 %v3100, 110
        %v3116 = vpop.permute.xlu0 %3115
        %3117 = vrot.lane.b32.xlu0 %v3101, 110
        %v3118 = vpop.permute.xlu0 %3117
        %3119 = vrot.lane.b32.xlu0 %v3102, 110
        %v3120 = vpop.permute.xlu0 %3119
        %v3121 = vsel %vm1154, %v3110, %v3112
        %v3122 = vsel %vm1154, %v3112, %v3114
        %v3123 = vsel %vm1154, %v3116, %v3118
        %v3124 = vsel %vm1154, %v3118, %v3120
        %v3131 = vadd.f32 %v3087, %v3121
        %v3132 = vadd.f32 %v3088, %v3122
        %v3133 = vadd.f32 %v3089, %v3114
        %v3134 = vadd.f32 %v3090, %v3123
        %v3135 = vadd.f32 %v3091, %v3124
        %v3136 = vadd.f32 %v3092, %v3120
        %3137 = vset.pattern.permute.xlu0 13
        %3138 = vperm.xlu0 %3137, %v278
        %v3139 = vpop.permute.xlu0 %3138
        %v3141 = vmul.f32 %v3139, %v2628
        %v3142 = vmul.f32 %v3139, %v2632
        %v3143 = vmul.f32 %v3139, %v2636
        %v3144 = vmul.f32 %v3139, %v2640
        %v3145 = vmul.f32 %v3139, %v2644
        %v3146 = vmul.f32 %v3139, %v2648
        %3153 = vrot.lane.b32.xlu0 %v3141, 110
        %v3154 = vpop.permute.xlu0 %3153
        %3155 = vrot.lane.b32.xlu0 %v3142, 110
        %v3156 = vpop.permute.xlu0 %3155
        %3157 = vrot.lane.b32.xlu0 %v3143, 110
        %v3158 = vpop.permute.xlu0 %3157
        %3159 = vrot.lane.b32.xlu0 %v3144, 110
        %v3160 = vpop.permute.xlu0 %3159
        %3161 = vrot.lane.b32.xlu0 %v3145, 110
        %v3162 = vpop.permute.xlu0 %3161
        %3163 = vrot.lane.b32.xlu0 %v3146, 110
        %v3164 = vpop.permute.xlu0 %3163
        %v3165 = vsel %vm1154, %v3154, %v3156
        %v3166 = vsel %vm1154, %v3156, %v3158
        %v3167 = vsel %vm1154, %v3160, %v3162
        %v3168 = vsel %vm1154, %v3162, %v3164
        %v3175 = vadd.f32 %v3131, %v3165
        %v3176 = vadd.f32 %v3132, %v3166
        %v3177 = vadd.f32 %v3133, %v3158
        %v3178 = vadd.f32 %v3134, %v3167
        %v3179 = vadd.f32 %v3135, %v3168
        %v3180 = vadd.f32 %v3136, %v3164
        %3181 = vset.pattern.permute.xlu0 14
        %3182 = vperm.xlu0 %3181, %v278
        %v3183 = vpop.permute.xlu0 %3182
        %v3185 = vmul.f32 %v3183, %v2668
        %v3186 = vmul.f32 %v3183, %v2672
        %v3187 = vmul.f32 %v3183, %v2676
        %v3188 = vmul.f32 %v3183, %v2680
        %v3189 = vmul.f32 %v3183, %v2684
        %v3190 = vmul.f32 %v3183, %v2688
        %3197 = vrot.lane.b32.xlu0 %v3185, 110
        %v3198 = vpop.permute.xlu0 %3197
        %3199 = vrot.lane.b32.xlu0 %v3186, 110
        %v3200 = vpop.permute.xlu0 %3199
        %3201 = vrot.lane.b32.xlu0 %v3187, 110
        %v3202 = vpop.permute.xlu0 %3201
        %3203 = vrot.lane.b32.xlu0 %v3188, 110
        %v3204 = vpop.permute.xlu0 %3203
        %3205 = vrot.lane.b32.xlu0 %v3189, 110
        %v3206 = vpop.permute.xlu0 %3205
        %3207 = vrot.lane.b32.xlu0 %v3190, 110
        %v3208 = vpop.permute.xlu0 %3207
        %v3209 = vsel %vm1154, %v3198, %v3200
        %v3210 = vsel %vm1154, %v3200, %v3202
        %v3211 = vsel %vm1154, %v3204, %v3206
        %v3212 = vsel %vm1154, %v3206, %v3208
        %v3219 = vadd.f32 %v3175, %v3209
        %v3220 = vadd.f32 %v3176, %v3210
        %v3221 = vadd.f32 %v3177, %v3202
        %v3222 = vadd.f32 %v3178, %v3211
        %v3223 = vadd.f32 %v3179, %v3212
        %v3224 = vadd.f32 %v3180, %v3208
        %3225 = vset.pattern.permute.xlu0 15
        %3226 = vperm.xlu0 %3225, %v278
        %v3227 = vpop.permute.xlu0 %3226
        %v3229 = vmul.f32 %v3227, %v2708
        %v3230 = vmul.f32 %v3227, %v2712
        %v3231 = vmul.f32 %v3227, %v2716
        %v3232 = vmul.f32 %v3227, %v2720
        %v3233 = vmul.f32 %v3227, %v2724
        %v3234 = vmul.f32 %v3227, %v2728
        %3241 = vrot.lane.b32.xlu0 %v3229, 110
        %v3242 = vpop.permute.xlu0 %3241
        %3243 = vrot.lane.b32.xlu0 %v3230, 110
        %v3244 = vpop.permute.xlu0 %3243
        %3245 = vrot.lane.b32.xlu0 %v3231, 110
        %v3246 = vpop.permute.xlu0 %3245
        %3247 = vrot.lane.b32.xlu0 %v3232, 110
        %v3248 = vpop.permute.xlu0 %3247
        %3249 = vrot.lane.b32.xlu0 %v3233, 110
        %v3250 = vpop.permute.xlu0 %3249
        %3251 = vrot.lane.b32.xlu0 %v3234, 110
        %v3252 = vpop.permute.xlu0 %3251
        %v3253 = vsel %vm1154, %v3242, %v3244
        %v3254 = vsel %vm1154, %v3244, %v3246
        %v3255 = vsel %vm1154, %v3248, %v3250
        %v3256 = vsel %vm1154, %v3250, %v3252
        %v3263 = vadd.f32 %v3219, %v3253
        %v3264 = vadd.f32 %v3220, %v3254
        %v3265 = vadd.f32 %v3221, %v3246
        %v3266 = vadd.f32 %v3222, %v3255
        %v3267 = vadd.f32 %v3223, %v3256
        %v3268 = vadd.f32 %v3224, %v3252
        %3269 = vset.pattern.permute.xlu0 16
        %3270 = vperm.xlu0 %3269, %v278
        %v3271 = vpop.permute.xlu0 %3270
        %v3273 = vmul.f32 %v3271, %v2588
        %v3274 = vmul.f32 %v3271, %v2592
        %v3275 = vmul.f32 %v3271, %v2596
        %v3276 = vmul.f32 %v3271, %v2600
        %v3277 = vmul.f32 %v3271, %v2604
        %v3278 = vmul.f32 %v3271, %v2608
        %3285 = vrot.lane.b32.xlu0 %v3273, 109
        %v3286 = vpop.permute.xlu0 %3285
        %3287 = vrot.lane.b32.xlu0 %v3274, 109
        %v3288 = vpop.permute.xlu0 %3287
        %3289 = vrot.lane.b32.xlu0 %v3275, 109
        %v3290 = vpop.permute.xlu0 %3289
        %3291 = vrot.lane.b32.xlu0 %v3276, 109
        %v3292 = vpop.permute.xlu0 %3291
        %3293 = vrot.lane.b32.xlu0 %v3277, 109
        %v3294 = vpop.permute.xlu0 %3293
        %3295 = vrot.lane.b32.xlu0 %v3278, 109
        %v3296 = vpop.permute.xlu0 %3295
        %v3297 = vsel %vm1387, %v3286, %v3288
        %v3298 = vsel %vm1387, %v3288, %v3290
        %v3299 = vsel %vm1387, %v3292, %v3294
        %v3300 = vsel %vm1387, %v3294, %v3296
        %v3307 = vadd.f32 %v3263, %v3297
        %v3308 = vadd.f32 %v3264, %v3298
        %v3309 = vadd.f32 %v3265, %v3290
        %v3310 = vadd.f32 %v3266, %v3299
        %v3311 = vadd.f32 %v3267, %v3300
        %v3312 = vadd.f32 %v3268, %v3296
        %3313 = vset.pattern.permute.xlu0 17
        %3314 = vperm.xlu0 %3313, %v278
        %v3315 = vpop.permute.xlu0 %3314
        %v3317 = vmul.f32 %v3315, %v2628
        %v3318 = vmul.f32 %v3315, %v2632
        %v3319 = vmul.f32 %v3315, %v2636
        %v3320 = vmul.f32 %v3315, %v2640
        %v3321 = vmul.f32 %v3315, %v2644
        %v3322 = vmul.f32 %v3315, %v2648
        %3329 = vrot.lane.b32.xlu0 %v3317, 109
        %v3330 = vpop.permute.xlu0 %3329
        %3331 = vrot.lane.b32.xlu0 %v3318, 109
        %v3332 = vpop.permute.xlu0 %3331
        %3333 = vrot.lane.b32.xlu0 %v3319, 109
        %v3334 = vpop.permute.xlu0 %3333
        %3335 = vrot.lane.b32.xlu0 %v3320, 109
        %v3336 = vpop.permute.xlu0 %3335
        %3337 = vrot.lane.b32.xlu0 %v3321, 109
        %v3338 = vpop.permute.xlu0 %3337
        %3339 = vrot.lane.b32.xlu0 %v3322, 109
        %v3340 = vpop.permute.xlu0 %3339
        %v3341 = vsel %vm1387, %v3330, %v3332
        %v3342 = vsel %vm1387, %v3332, %v3334
        %v3343 = vsel %vm1387, %v3336, %v3338
        %v3344 = vsel %vm1387, %v3338, %v3340
        %v3351 = vadd.f32 %v3307, %v3341
        %v3352 = vadd.f32 %v3308, %v3342
        %v3353 = vadd.f32 %v3309, %v3334
        %v3354 = vadd.f32 %v3310, %v3343
        %v3355 = vadd.f32 %v3311, %v3344
        %v3356 = vadd.f32 %v3312, %v3340
        %3357 = vset.pattern.permute.xlu0 18
        %3358 = vperm.xlu0 %3357, %v278
        %v3359 = vpop.permute.xlu0 %3358
        %v3361 = vmul.f32 %v3359, %v2668
        %v3362 = vmul.f32 %v3359, %v2672
        %v3363 = vmul.f32 %v3359, %v2676
        %v3364 = vmul.f32 %v3359, %v2680
        %v3365 = vmul.f32 %v3359, %v2684
        %v3366 = vmul.f32 %v3359, %v2688
        %3373 = vrot.lane.b32.xlu0 %v3361, 109
        %v3374 = vpop.permute.xlu0 %3373
        %3375 = vrot.lane.b32.xlu0 %v3362, 109
        %v3376 = vpop.permute.xlu0 %3375
        %3377 = vrot.lane.b32.xlu0 %v3363, 109
        %v3378 = vpop.permute.xlu0 %3377
        %3379 = vrot.lane.b32.xlu0 %v3364, 109
        %v3380 = vpop.permute.xlu0 %3379
        %3381 = vrot.lane.b32.xlu0 %v3365, 109
        %v3382 = vpop.permute.xlu0 %3381
        %3383 = vrot.lane.b32.xlu0 %v3366, 109
        %v3384 = vpop.permute.xlu0 %3383
        %v3385 = vsel %vm1387, %v3374, %v3376
        %v3386 = vsel %vm1387, %v3376, %v3378
        %v3387 = vsel %vm1387, %v3380, %v3382
        %v3388 = vsel %vm1387, %v3382, %v3384
        %v3395 = vadd.f32 %v3351, %v3385
        %v3396 = vadd.f32 %v3352, %v3386
        %v3397 = vadd.f32 %v3353, %v3378
        %v3398 = vadd.f32 %v3354, %v3387
        %v3399 = vadd.f32 %v3355, %v3388
        %v3400 = vadd.f32 %v3356, %v3384
        %3401 = vset.pattern.permute.xlu0 19
        %3402 = vperm.xlu0 %3401, %v278
        %v3403 = vpop.permute.xlu0 %3402
        %v3405 = vmul.f32 %v3403, %v2708
        %v3406 = vmul.f32 %v3403, %v2712
        %v3407 = vmul.f32 %v3403, %v2716
        %v3408 = vmul.f32 %v3403, %v2720
        %v3409 = vmul.f32 %v3403, %v2724
        %v3410 = vmul.f32 %v3403, %v2728
        %3417 = vrot.lane.b32.xlu0 %v3405, 109
        %v3418 = vpop.permute.xlu0 %3417
        %3419 = vrot.lane.b32.xlu0 %v3406, 109
        %v3420 = vpop.permute.xlu0 %3419
        %3421 = vrot.lane.b32.xlu0 %v3407, 109
        %v3422 = vpop.permute.xlu0 %3421
        %3423 = vrot.lane.b32.xlu0 %v3408, 109
        %v3424 = vpop.permute.xlu0 %3423
        %3425 = vrot.lane.b32.xlu0 %v3409, 109
        %v3426 = vpop.permute.xlu0 %3425
        %3427 = vrot.lane.b32.xlu0 %v3410, 109
        %v3428 = vpop.permute.xlu0 %3427
        %v3429 = vsel %vm1387, %v3418, %v3420
        %v3430 = vsel %vm1387, %v3420, %v3422
        %v3431 = vsel %vm1387, %v3424, %v3426
        %v3432 = vsel %vm1387, %v3426, %v3428
        %v3439 = vadd.f32 %v3395, %v3429
        %v3440 = vadd.f32 %v3396, %v3430
        %v3441 = vadd.f32 %v3397, %v3422
        %v3442 = vadd.f32 %v3398, %v3431
        %v3443 = vadd.f32 %v3399, %v3432
        %v3444 = vadd.f32 %v3400, %v3428
        %3445 = vset.pattern.permute.xlu0 20
        %3446 = vperm.xlu0 %3445, %v278
        %v3447 = vpop.permute.xlu0 %3446
        %v3449 = vmul.f32 %v3447, %v2588
        %v3450 = vmul.f32 %v3447, %v2592
        %v3451 = vmul.f32 %v3447, %v2596
        %v3452 = vmul.f32 %v3447, %v2600
        %v3453 = vmul.f32 %v3447, %v2604
        %v3454 = vmul.f32 %v3447, %v2608
        %3461 = vrot.lane.b32.xlu0 %v3449, 108
        %v3462 = vpop.permute.xlu0 %3461
        %3463 = vrot.lane.b32.xlu0 %v3450, 108
        %v3464 = vpop.permute.xlu0 %3463
        %3465 = vrot.lane.b32.xlu0 %v3451, 108
        %v3466 = vpop.permute.xlu0 %3465
        %3467 = vrot.lane.b32.xlu0 %v3452, 108
        %v3468 = vpop.permute.xlu0 %3467
        %3469 = vrot.lane.b32.xlu0 %v3453, 108
        %v3470 = vpop.permute.xlu0 %3469
        %3471 = vrot.lane.b32.xlu0 %v3454, 108
        %v3472 = vpop.permute.xlu0 %3471
        %v3473 = vsel %vm1620, %v3462, %v3464
        %v3474 = vsel %vm1620, %v3464, %v3466
        %v3475 = vsel %vm1620, %v3468, %v3470
        %v3476 = vsel %vm1620, %v3470, %v3472
        %v3483 = vadd.f32 %v3439, %v3473
        %v3484 = vadd.f32 %v3440, %v3474
        %v3485 = vadd.f32 %v3441, %v3466
        %v3486 = vadd.f32 %v3442, %v3475
        %v3487 = vadd.f32 %v3443, %v3476
        %v3488 = vadd.f32 %v3444, %v3472
        %3489 = vset.pattern.permute.xlu0 21
        %3490 = vperm.xlu0 %3489, %v278
        %v3491 = vpop.permute.xlu0 %3490
        %v3493 = vmul.f32 %v3491, %v2628
        %v3494 = vmul.f32 %v3491, %v2632
        %v3495 = vmul.f32 %v3491, %v2636
        %v3496 = vmul.f32 %v3491, %v2640
        %v3497 = vmul.f32 %v3491, %v2644
        %v3498 = vmul.f32 %v3491, %v2648
        %3505 = vrot.lane.b32.xlu0 %v3493, 108
        %v3506 = vpop.permute.xlu0 %3505
        %3507 = vrot.lane.b32.xlu0 %v3494, 108
        %v3508 = vpop.permute.xlu0 %3507
        %3509 = vrot.lane.b32.xlu0 %v3495, 108
        %v3510 = vpop.permute.xlu0 %3509
        %3511 = vrot.lane.b32.xlu0 %v3496, 108
        %v3512 = vpop.permute.xlu0 %3511
        %3513 = vrot.lane.b32.xlu0 %v3497, 108
        %v3514 = vpop.permute.xlu0 %3513
        %3515 = vrot.lane.b32.xlu0 %v3498, 108
        %v3516 = vpop.permute.xlu0 %3515
        %v3517 = vsel %vm1620, %v3506, %v3508
        %v3518 = vsel %vm1620, %v3508, %v3510
        %v3519 = vsel %vm1620, %v3512, %v3514
        %v3520 = vsel %vm1620, %v3514, %v3516
        %v3527 = vadd.f32 %v3483, %v3517
        %v3528 = vadd.f32 %v3484, %v3518
        %v3529 = vadd.f32 %v3485, %v3510
        %v3530 = vadd.f32 %v3486, %v3519
        %v3531 = vadd.f32 %v3487, %v3520
        %v3532 = vadd.f32 %v3488, %v3516
        %3533 = vset.pattern.permute.xlu0 22
        %3534 = vperm.xlu0 %3533, %v278
        %v3535 = vpop.permute.xlu0 %3534
        %v3537 = vmul.f32 %v3535, %v2668
        %v3538 = vmul.f32 %v3535, %v2672
        %v3539 = vmul.f32 %v3535, %v2676
        %v3540 = vmul.f32 %v3535, %v2680
        %v3541 = vmul.f32 %v3535, %v2684
        %v3542 = vmul.f32 %v3535, %v2688
        %3549 = vrot.lane.b32.xlu0 %v3537, 108
        %v3550 = vpop.permute.xlu0 %3549
        %3551 = vrot.lane.b32.xlu0 %v3538, 108
        %v3552 = vpop.permute.xlu0 %3551
        %3553 = vrot.lane.b32.xlu0 %v3539, 108
        %v3554 = vpop.permute.xlu0 %3553
        %3555 = vrot.lane.b32.xlu0 %v3540, 108
        %v3556 = vpop.permute.xlu0 %3555
        %3557 = vrot.lane.b32.xlu0 %v3541, 108
        %v3558 = vpop.permute.xlu0 %3557
        %3559 = vrot.lane.b32.xlu0 %v3542, 108
        %v3560 = vpop.permute.xlu0 %3559
        %v3561 = vsel %vm1620, %v3550, %v3552
        %v3562 = vsel %vm1620, %v3552, %v3554
        %v3563 = vsel %vm1620, %v3556, %v3558
        %v3564 = vsel %vm1620, %v3558, %v3560
        %v3571 = vadd.f32 %v3527, %v3561
        %v3572 = vadd.f32 %v3528, %v3562
        %v3573 = vadd.f32 %v3529, %v3554
        %v3574 = vadd.f32 %v3530, %v3563
        %v3575 = vadd.f32 %v3531, %v3564
        %v3576 = vadd.f32 %v3532, %v3560
        %3577 = vset.pattern.permute.xlu0 23
        %3578 = vperm.xlu0 %3577, %v278
        %v3579 = vpop.permute.xlu0 %3578
        %v3581 = vmul.f32 %v3579, %v2708
        %v3582 = vmul.f32 %v3579, %v2712
        %v3583 = vmul.f32 %v3579, %v2716
        %v3584 = vmul.f32 %v3579, %v2720
        %v3585 = vmul.f32 %v3579, %v2724
        %v3586 = vmul.f32 %v3579, %v2728
        %3593 = vrot.lane.b32.xlu0 %v3581, 108
        %v3594 = vpop.permute.xlu0 %3593
        %3595 = vrot.lane.b32.xlu0 %v3582, 108
        %v3596 = vpop.permute.xlu0 %3595
        %3597 = vrot.lane.b32.xlu0 %v3583, 108
        %v3598 = vpop.permute.xlu0 %3597
        %3599 = vrot.lane.b32.xlu0 %v3584, 108
        %v3600 = vpop.permute.xlu0 %3599
        %3601 = vrot.lane.b32.xlu0 %v3585, 108
        %v3602 = vpop.permute.xlu0 %3601
        %3603 = vrot.lane.b32.xlu0 %v3586, 108
        %v3604 = vpop.permute.xlu0 %3603
        %v3605 = vsel %vm1620, %v3594, %v3596
        %v3606 = vsel %vm1620, %v3596, %v3598
        %v3607 = vsel %vm1620, %v3600, %v3602
        %v3608 = vsel %vm1620, %v3602, %v3604
        %v3615 = vadd.f32 %v3571, %v3605
        %v3616 = vadd.f32 %v3572, %v3606
        %v3617 = vadd.f32 %v3573, %v3598
        %v3618 = vadd.f32 %v3574, %v3607
        %v3619 = vadd.f32 %v3575, %v3608
        %v3620 = vadd.f32 %v3576, %v3604
        %3621 = vset.pattern.permute.xlu0 24
        %3622 = vperm.xlu0 %3621, %v278
        %v3623 = vpop.permute.xlu0 %3622
        %v3625 = vlaneseq
        %v3626 = vshrl.u32 %v3625, 7
        %v3627 = vsub.s32 0, %v3626
        %v3628 = vrot.slane %v2575, %v3627
        %v3629 = vlaneseq
        %v3630 = vshrl.u32 %v3629, 7
        %v3631 = vsub.s32 0, %v3630
        %v3632 = vrot.slane %v2579, %v3631
        %v3633 = vmul.f32 %v3623, %v2588
        %v3634 = vmul.f32 %v3623, %v2592
        %v3635 = vmul.f32 %v3623, %v2596
        %v3636 = vmul.f32 %v3623, %v3628
        %v3637 = vmul.f32 %v3623, %v2600
        %v3638 = vmul.f32 %v3623, %v2604
        %v3639 = vmul.f32 %v3623, %v2608
        %v3640 = vmul.f32 %v3623, %v3632
        %3649 = vrot.lane.b32.xlu0 %v3633, 92
        %v3650 = vpop.permute.xlu0 %3649
        %3651 = vrot.lane.b32.xlu0 %v3634, 92
        %v3652 = vpop.permute.xlu0 %3651
        %3653 = vrot.lane.b32.xlu0 %v3635, 92
        %v3654 = vpop.permute.xlu0 %3653
        %3655 = vrot.lane.b32.xlu0 %v3636, 92
        %v3656 = vpop.permute.xlu0 %3655
        %3657 = vrot.lane.b32.xlu0 %v3637, 92
        %v3658 = vpop.permute.xlu0 %3657
        %3659 = vrot.lane.b32.xlu0 %v3638, 92
        %v3660 = vpop.permute.xlu0 %3659
        %3661 = vrot.lane.b32.xlu0 %v3639, 92
        %v3662 = vpop.permute.xlu0 %3661
        %3663 = vrot.lane.b32.xlu0 %v3640, 92
        %v3664 = vpop.permute.xlu0 %3663
        %v3665 = vsel %vm1853, %v3650, %v3652
        %v3666 = vsel %vm1853, %v3652, %v3654
        %v3667 = vsel %vm1853, %v3654, %v3656
        %v3668 = vsel %vm1853, %v3658, %v3660
        %v3669 = vsel %vm1853, %v3660, %v3662
        %v3670 = vsel %vm1853, %v3662, %v3664
        %v3677 = vadd.f32 %v3615, %v3665
        %v3678 = vadd.f32 %v3616, %v3666
        %v3679 = vadd.f32 %v3617, %v3667
        %v3680 = vadd.f32 %v3618, %v3668
        %v3681 = vadd.f32 %v3619, %v3669
        %v3682 = vadd.f32 %v3620, %v3670
        %3683 = vset.pattern.permute.xlu0 25
        %3684 = vperm.xlu0 %3683, %v278
        %v3685 = vpop.permute.xlu0 %3684
        %v3687 = vlaneseq
        %v3688 = vshrl.u32 %v3687, 7
        %v3689 = vsub.s32 1, %v3688
        %v3690 = vrot.slane %v2575, %v3689
        %v3691 = vlaneseq
        %v3692 = vshrl.u32 %v3691, 7
        %v3693 = vsub.s32 1, %v3692
        %v3694 = vrot.slane %v2579, %v3693
        %v3695 = vmul.f32 %v3685, %v2628
        %v3696 = vmul.f32 %v3685, %v2632
        %v3697 = vmul.f32 %v3685, %v2636
        %v3698 = vmul.f32 %v3685, %v3690
        %v3699 = vmul.f32 %v3685, %v2640
        %v3700 = vmul.f32 %v3685, %v2644
        %v3701 = vmul.f32 %v3685, %v2648
        %v3702 = vmul.f32 %v3685, %v3694
        %3711 = vrot.lane.b32.xlu0 %v3695, 92
        %v3712 = vpop.permute.xlu0 %3711
        %3713 = vrot.lane.b32.xlu0 %v3696, 92
        %v3714 = vpop.permute.xlu0 %3713
        %3715 = vrot.lane.b32.xlu0 %v3697, 92
        %v3716 = vpop.permute.xlu0 %3715
        %3717 = vrot.lane.b32.xlu0 %v3698, 92
        %v3718 = vpop.permute.xlu0 %3717
        %3719 = vrot.lane.b32.xlu0 %v3699, 92
        %v3720 = vpop.permute.xlu0 %3719
        %3721 = vrot.lane.b32.xlu0 %v3700, 92
        %v3722 = vpop.permute.xlu0 %3721
        %3723 = vrot.lane.b32.xlu0 %v3701, 92
        %v3724 = vpop.permute.xlu0 %3723
        %3725 = vrot.lane.b32.xlu0 %v3702, 92
        %v3726 = vpop.permute.xlu0 %3725
        %v3727 = vsel %vm1853, %v3712, %v3714
        %v3728 = vsel %vm1853, %v3714, %v3716
        %v3729 = vsel %vm1853, %v3716, %v3718
        %v3730 = vsel %vm1853, %v3720, %v3722
        %v3731 = vsel %vm1853, %v3722, %v3724
        %v3732 = vsel %vm1853, %v3724, %v3726
        %v3739 = vadd.f32 %v3677, %v3727
        %v3740 = vadd.f32 %v3678, %v3728
        %v3741 = vadd.f32 %v3679, %v3729
        %v3742 = vadd.f32 %v3680, %v3730
        %v3743 = vadd.f32 %v3681, %v3731
        %v3744 = vadd.f32 %v3682, %v3732
        %3745 = vset.pattern.permute.xlu0 26
        %3746 = vperm.xlu0 %3745, %v278
        %v3747 = vpop.permute.xlu0 %3746
        %v3749 = vlaneseq
        %v3750 = vshrl.u32 %v3749, 7
        %v3751 = vsub.s32 2, %v3750
        %v3752 = vrot.slane %v2575, %v3751
        %v3753 = vlaneseq
        %v3754 = vshrl.u32 %v3753, 7
        %v3755 = vsub.s32 2, %v3754
        %v3756 = vrot.slane %v2579, %v3755
        %v3757 = vmul.f32 %v3747, %v2668
        %v3758 = vmul.f32 %v3747, %v2672
        %v3759 = vmul.f32 %v3747, %v2676
        %v3760 = vmul.f32 %v3747, %v3752
        %v3761 = vmul.f32 %v3747, %v2680
        %v3762 = vmul.f32 %v3747, %v2684
        %v3763 = vmul.f32 %v3747, %v2688
        %v3764 = vmul.f32 %v3747, %v3756
        %3773 = vrot.lane.b32.xlu0 %v3757, 92
        %v3774 = vpop.permute.xlu0 %3773
        %3775 = vrot.lane.b32.xlu0 %v3758, 92
        %v3776 = vpop.permute.xlu0 %3775
        %3777 = vrot.lane.b32.xlu0 %v3759, 92
        %v3778 = vpop.permute.xlu0 %3777
        %3779 = vrot.lane.b32.xlu0 %v3760, 92
        %v3780 = vpop.permute.xlu0 %3779
        %3781 = vrot.lane.b32.xlu0 %v3761, 92
        %v3782 = vpop.permute.xlu0 %3781
        %3783 = vrot.lane.b32.xlu0 %v3762, 92
        %v3784 = vpop.permute.xlu0 %3783
        %3785 = vrot.lane.b32.xlu0 %v3763, 92
        %v3786 = vpop.permute.xlu0 %3785
        %3787 = vrot.lane.b32.xlu0 %v3764, 92
        %v3788 = vpop.permute.xlu0 %3787
        %v3789 = vsel %vm1853, %v3774, %v3776
        %v3790 = vsel %vm1853, %v3776, %v3778
        %v3791 = vsel %vm1853, %v3778, %v3780
        %v3792 = vsel %vm1853, %v3782, %v3784
        %v3793 = vsel %vm1853, %v3784, %v3786
        %v3794 = vsel %vm1853, %v3786, %v3788
        %v3801 = vadd.f32 %v3739, %v3789
        %v3802 = vadd.f32 %v3740, %v3790
        %v3803 = vadd.f32 %v3741, %v3791
        %v3804 = vadd.f32 %v3742, %v3792
        %v3805 = vadd.f32 %v3743, %v3793
        %v3806 = vadd.f32 %v3744, %v3794
        %3807 = vset.pattern.permute.xlu0 27
        %3808 = vperm.xlu0 %3807, %v278
        %v3809 = vpop.permute.xlu0 %3808
        %v3811 = vlaneseq
        %v3812 = vshrl.u32 %v3811, 7
        %v3813 = vsub.s32 3, %v3812
        %v3814 = vrot.slane %v2575, %v3813
        %v3815 = vlaneseq
        %v3816 = vshrl.u32 %v3815, 7
        %v3817 = vsub.s32 3, %v3816
        %v3818 = vrot.slane %v2579, %v3817
        %v3819 = vmul.f32 %v3809, %v2708
        %v3820 = vmul.f32 %v3809, %v2712
        %v3821 = vmul.f32 %v3809, %v2716
        %v3822 = vmul.f32 %v3809, %v3814
        %v3823 = vmul.f32 %v3809, %v2720
        %v3824 = vmul.f32 %v3809, %v2724
        %v3825 = vmul.f32 %v3809, %v2728
        %v3826 = vmul.f32 %v3809, %v3818
        %3835 = vrot.lane.b32.xlu0 %v3819, 92
        %v3836 = vpop.permute.xlu0 %3835
        %3837 = vrot.lane.b32.xlu0 %v3820, 92
        %v3838 = vpop.permute.xlu0 %3837
        %3839 = vrot.lane.b32.xlu0 %v3821, 92
        %v3840 = vpop.permute.xlu0 %3839
        %3841 = vrot.lane.b32.xlu0 %v3822, 92
        %v3842 = vpop.permute.xlu0 %3841
        %3843 = vrot.lane.b32.xlu0 %v3823, 92
        %v3844 = vpop.permute.xlu0 %3843
        %3845 = vrot.lane.b32.xlu0 %v3824, 92
        %v3846 = vpop.permute.xlu0 %3845
        %3847 = vrot.lane.b32.xlu0 %v3825, 92
        %v3848 = vpop.permute.xlu0 %3847
        %3849 = vrot.lane.b32.xlu0 %v3826, 92
        %v3850 = vpop.permute.xlu0 %3849
        %v3851 = vsel %vm1853, %v3836, %v3838
        %v3852 = vsel %vm1853, %v3838, %v3840
        %v3853 = vsel %vm1853, %v3840, %v3842
        %v3854 = vsel %vm1853, %v3844, %v3846
        %v3855 = vsel %vm1853, %v3846, %v3848
        %v3856 = vsel %vm1853, %v3848, %v3850
        %v3863 = vadd.f32 %v3801, %v3851
        %v3864 = vadd.f32 %v3802, %v3852
        %v3865 = vadd.f32 %v3803, %v3853
        %v3866 = vadd.f32 %v3804, %v3854
        %v3867 = vadd.f32 %v3805, %v3855
        %v3868 = vadd.f32 %v3806, %v3856
        %3869 = vset.pattern.permute.xlu0 28
        %3870 = vperm.xlu0 %3869, %v278
        %v3871 = vpop.permute.xlu0 %3870
        %v3873 = vmul.f32 %v3871, %v2588
        %v3874 = vmul.f32 %v3871, %v2592
        %v3875 = vmul.f32 %v3871, %v2596
        %v3876 = vmul.f32 %v3871, %v3628
        %v3877 = vmul.f32 %v3871, %v2600
        %v3878 = vmul.f32 %v3871, %v2604
        %v3879 = vmul.f32 %v3871, %v2608
        %v3880 = vmul.f32 %v3871, %v3632
        %3889 = vrot.lane.b32.xlu0 %v3873, 91
        %v3890 = vpop.permute.xlu0 %3889
        %3891 = vrot.lane.b32.xlu0 %v3874, 91
        %v3892 = vpop.permute.xlu0 %3891
        %3893 = vrot.lane.b32.xlu0 %v3875, 91
        %v3894 = vpop.permute.xlu0 %3893
        %3895 = vrot.lane.b32.xlu0 %v3876, 91
        %v3896 = vpop.permute.xlu0 %3895
        %3897 = vrot.lane.b32.xlu0 %v3877, 91
        %v3898 = vpop.permute.xlu0 %3897
        %3899 = vrot.lane.b32.xlu0 %v3878, 91
        %v3900 = vpop.permute.xlu0 %3899
        %3901 = vrot.lane.b32.xlu0 %v3879, 91
        %v3902 = vpop.permute.xlu0 %3901
        %3903 = vrot.lane.b32.xlu0 %v3880, 91
        %v3904 = vpop.permute.xlu0 %3903
        %v3905 = vsel %vm2086, %v3890, %v3892
        %v3906 = vsel %vm2086, %v3892, %v3894
        %v3907 = vsel %vm2086, %v3894, %v3896
        %v3908 = vsel %vm2086, %v3898, %v3900
        %v3909 = vsel %vm2086, %v3900, %v3902
        %v3910 = vsel %vm2086, %v3902, %v3904
        %v3917 = vadd.f32 %v3863, %v3905
        %v3918 = vadd.f32 %v3864, %v3906
        %v3919 = vadd.f32 %v3865, %v3907
        %v3920 = vadd.f32 %v3866, %v3908
        %v3921 = vadd.f32 %v3867, %v3909
        %v3922 = vadd.f32 %v3868, %v3910
        %3923 = vset.pattern.permute.xlu0 29
        %3924 = vperm.xlu0 %3923, %v278
        %v3925 = vpop.permute.xlu0 %3924
        %v3927 = vmul.f32 %v3925, %v2628
        %v3928 = vmul.f32 %v3925, %v2632
        %v3929 = vmul.f32 %v3925, %v2636
        %v3930 = vmul.f32 %v3925, %v3690
        %v3931 = vmul.f32 %v3925, %v2640
        %v3932 = vmul.f32 %v3925, %v2644
        %v3933 = vmul.f32 %v3925, %v2648
        %v3934 = vmul.f32 %v3925, %v3694
        %3943 = vrot.lane.b32.xlu0 %v3927, 91
        %v3944 = vpop.permute.xlu0 %3943
        %3945 = vrot.lane.b32.xlu0 %v3928, 91
        %v3946 = vpop.permute.xlu0 %3945
        %3947 = vrot.lane.b32.xlu0 %v3929, 91
        %v3948 = vpop.permute.xlu0 %3947
        %3949 = vrot.lane.b32.xlu0 %v3930, 91
        %v3950 = vpop.permute.xlu0 %3949
        %3951 = vrot.lane.b32.xlu0 %v3931, 91
        %v3952 = vpop.permute.xlu0 %3951
        %3953 = vrot.lane.b32.xlu0 %v3932, 91
        %v3954 = vpop.permute.xlu0 %3953
        %3955 = vrot.lane.b32.xlu0 %v3933, 91
        %v3956 = vpop.permute.xlu0 %3955
        %3957 = vrot.lane.b32.xlu0 %v3934, 91
        %v3958 = vpop.permute.xlu0 %3957
        %v3959 = vsel %vm2086, %v3944, %v3946
        %v3960 = vsel %vm2086, %v3946, %v3948
        %v3961 = vsel %vm2086, %v3948, %v3950
        %v3962 = vsel %vm2086, %v3952, %v3954
        %v3963 = vsel %vm2086, %v3954, %v3956
        %v3964 = vsel %vm2086, %v3956, %v3958
        %v3971 = vadd.f32 %v3917, %v3959
        %v3972 = vadd.f32 %v3918, %v3960
        %v3973 = vadd.f32 %v3919, %v3961
        %v3974 = vadd.f32 %v3920, %v3962
        %v3975 = vadd.f32 %v3921, %v3963
        %v3976 = vadd.f32 %v3922, %v3964
        %3977 = vset.pattern.permute.xlu0 30
        %3978 = vperm.xlu0 %3977, %v278
        %v3979 = vpop.permute.xlu0 %3978
        %v3981 = vmul.f32 %v3979, %v2668
        %v3982 = vmul.f32 %v3979, %v2672
        %v3983 = vmul.f32 %v3979, %v2676
        %v3984 = vmul.f32 %v3979, %v3752
        %v3985 = vmul.f32 %v3979, %v2680
        %v3986 = vmul.f32 %v3979, %v2684
        %v3987 = vmul.f32 %v3979, %v2688
        %v3988 = vmul.f32 %v3979, %v3756
        %3997 = vrot.lane.b32.xlu0 %v3981, 91
        %v3998 = vpop.permute.xlu0 %3997
        %3999 = vrot.lane.b32.xlu0 %v3982, 91
        %v4000 = vpop.permute.xlu0 %3999
        %4001 = vrot.lane.b32.xlu0 %v3983, 91
        %v4002 = vpop.permute.xlu0 %4001
        %4003 = vrot.lane.b32.xlu0 %v3984, 91
        %v4004 = vpop.permute.xlu0 %4003
        %4005 = vrot.lane.b32.xlu0 %v3985, 91
        %v4006 = vpop.permute.xlu0 %4005
        %4007 = vrot.lane.b32.xlu0 %v3986, 91
        %v4008 = vpop.permute.xlu0 %4007
        %4009 = vrot.lane.b32.xlu0 %v3987, 91
        %v4010 = vpop.permute.xlu0 %4009
        %4011 = vrot.lane.b32.xlu0 %v3988, 91
        %v4012 = vpop.permute.xlu0 %4011
        %v4013 = vsel %vm2086, %v3998, %v4000
        %v4014 = vsel %vm2086, %v4000, %v4002
        %v4015 = vsel %vm2086, %v4002, %v4004
        %v4016 = vsel %vm2086, %v4006, %v4008
        %v4017 = vsel %vm2086, %v4008, %v4010
        %v4018 = vsel %vm2086, %v4010, %v4012
        %v4025 = vadd.f32 %v3971, %v4013
        %v4026 = vadd.f32 %v3972, %v4014
        %v4027 = vadd.f32 %v3973, %v4015
        %v4028 = vadd.f32 %v3974, %v4016
        %v4029 = vadd.f32 %v3975, %v4017
        %v4030 = vadd.f32 %v3976, %v4018
        %4031 = vset.pattern.permute.xlu0 31
        %4032 = vperm.xlu0 %4031, %v278
        %v4033 = vpop.permute.xlu0 %4032
        %v4035 = vmul.f32 %v4033, %v2708
        %v4036 = vmul.f32 %v4033, %v2712
        %v4037 = vmul.f32 %v4033, %v2716
        %v4038 = vmul.f32 %v4033, %v3814
        %v4039 = vmul.f32 %v4033, %v2720
        %v4040 = vmul.f32 %v4033, %v2724
        %v4041 = vmul.f32 %v4033, %v2728
        %v4042 = vmul.f32 %v4033, %v3818
        %4051 = vrot.lane.b32.xlu0 %v4035, 91
        %v4052 = vpop.permute.xlu0 %4051
        %4053 = vrot.lane.b32.xlu0 %v4036, 91
        %v4054 = vpop.permute.xlu0 %4053
        %4055 = vrot.lane.b32.xlu0 %v4037, 91
        %v4056 = vpop.permute.xlu0 %4055
        %4057 = vrot.lane.b32.xlu0 %v4038, 91
        %v4058 = vpop.permute.xlu0 %4057
        %4059 = vrot.lane.b32.xlu0 %v4039, 91
        %v4060 = vpop.permute.xlu0 %4059
        %4061 = vrot.lane.b32.xlu0 %v4040, 91
        %v4062 = vpop.permute.xlu0 %4061
        %4063 = vrot.lane.b32.xlu0 %v4041, 91
        %v4064 = vpop.permute.xlu0 %4063
        %4065 = vrot.lane.b32.xlu0 %v4042, 91
        %v4066 = vpop.permute.xlu0 %4065
        %v4067 = vsel %vm2086, %v4052, %v4054
        %v4068 = vsel %vm2086, %v4054, %v4056
        %v4069 = vsel %vm2086, %v4056, %v4058
        %v4070 = vsel %vm2086, %v4060, %v4062
        %v4071 = vsel %vm2086, %v4062, %v4064
        %v4072 = vsel %vm2086, %v4064, %v4066
        %v4079 = vadd.f32 %v4025, %v4067
        %v4080 = vadd.f32 %v4026, %v4068
        %v4081 = vadd.f32 %v4027, %v4069
        %v4082 = vadd.f32 %v4028, %v4070
        %v4083 = vadd.f32 %v4029, %v4071
        %v4084 = vadd.f32 %v4030, %v4072
        %4085 = vset.pattern.permute.xlu0 32
        %4086 = vperm.xlu0 %4085, %v278
        %v4087 = vpop.permute.xlu0 %4086
        %v4089 = vmul.f32 %v4087, %v2588
        %v4090 = vmul.f32 %v4087, %v2592
        %v4091 = vmul.f32 %v4087, %v2596
        %v4092 = vmul.f32 %v4087, %v3628
        %v4093 = vmul.f32 %v4087, %v2600
        %v4094 = vmul.f32 %v4087, %v2604
        %v4095 = vmul.f32 %v4087, %v2608
        %v4096 = vmul.f32 %v4087, %v3632
        %4105 = vrot.lane.b32.xlu0 %v4089, 90
        %v4106 = vpop.permute.xlu0 %4105
        %4107 = vrot.lane.b32.xlu0 %v4090, 90
        %v4108 = vpop.permute.xlu0 %4107
        %4109 = vrot.lane.b32.xlu0 %v4091, 90
        %v4110 = vpop.permute.xlu0 %4109
        %4111 = vrot.lane.b32.xlu0 %v4092, 90
        %v4112 = vpop.permute.xlu0 %4111
        %4113 = vrot.lane.b32.xlu0 %v4093, 90
        %v4114 = vpop.permute.xlu0 %4113
        %4115 = vrot.lane.b32.xlu0 %v4094, 90
        %v4116 = vpop.permute.xlu0 %4115
        %4117 = vrot.lane.b32.xlu0 %v4095, 90
        %v4118 = vpop.permute.xlu0 %4117
        %4119 = vrot.lane.b32.xlu0 %v4096, 90
        %v4120 = vpop.permute.xlu0 %4119
        %v4121 = vsel %vm2319, %v4106, %v4108
        %v4122 = vsel %vm2319, %v4108, %v4110
        %v4123 = vsel %vm2319, %v4110, %v4112
        %v4124 = vsel %vm2319, %v4114, %v4116
        %v4125 = vsel %vm2319, %v4116, %v4118
        %v4126 = vsel %vm2319, %v4118, %v4120
        %v4133 = vadd.f32 %v4079, %v4121
        %v4134 = vadd.f32 %v4080, %v4122
        %v4135 = vadd.f32 %v4081, %v4123
        %v4136 = vadd.f32 %v4082, %v4124
        %v4137 = vadd.f32 %v4083, %v4125
        %v4138 = vadd.f32 %v4084, %v4126
        %4139 = vset.pattern.permute.xlu0 33
        %4140 = vperm.xlu0 %4139, %v278
        %v4141 = vpop.permute.xlu0 %4140
        %v4143 = vmul.f32 %v4141, %v2628
        %v4144 = vmul.f32 %v4141, %v2632
        %v4145 = vmul.f32 %v4141, %v2636
        %v4146 = vmul.f32 %v4141, %v3690
        %v4147 = vmul.f32 %v4141, %v2640
        %v4148 = vmul.f32 %v4141, %v2644
        %v4149 = vmul.f32 %v4141, %v2648
        %v4150 = vmul.f32 %v4141, %v3694
        %4159 = vrot.lane.b32.xlu0 %v4143, 90
        %v4160 = vpop.permute.xlu0 %4159
        %4161 = vrot.lane.b32.xlu0 %v4144, 90
        %v4162 = vpop.permute.xlu0 %4161
        %4163 = vrot.lane.b32.xlu0 %v4145, 90
        %v4164 = vpop.permute.xlu0 %4163
        %4165 = vrot.lane.b32.xlu0 %v4146, 90
        %v4166 = vpop.permute.xlu0 %4165
        %4167 = vrot.lane.b32.xlu0 %v4147, 90
        %v4168 = vpop.permute.xlu0 %4167
        %4169 = vrot.lane.b32.xlu0 %v4148, 90
        %v4170 = vpop.permute.xlu0 %4169
        %4171 = vrot.lane.b32.xlu0 %v4149, 90
        %v4172 = vpop.permute.xlu0 %4171
        %4173 = vrot.lane.b32.xlu0 %v4150, 90
        %v4174 = vpop.permute.xlu0 %4173
        %v4175 = vsel %vm2319, %v4160, %v4162
        %v4176 = vsel %vm2319, %v4162, %v4164
        %v4177 = vsel %vm2319, %v4164, %v4166
        %v4178 = vsel %vm2319, %v4168, %v4170
        %v4179 = vsel %vm2319, %v4170, %v4172
        %v4180 = vsel %vm2319, %v4172, %v4174
        %v4187 = vadd.f32 %v4133, %v4175
        %v4188 = vadd.f32 %v4134, %v4176
        %v4189 = vadd.f32 %v4135, %v4177
        %v4190 = vadd.f32 %v4136, %v4178
        %v4191 = vadd.f32 %v4137, %v4179
        %v4192 = vadd.f32 %v4138, %v4180
        %4193 = vset.pattern.permute.xlu0 34
        %4194 = vperm.xlu0 %4193, %v278
        %v4195 = vpop.permute.xlu0 %4194
        %v4197 = vmul.f32 %v4195, %v2668
        %v4198 = vmul.f32 %v4195, %v2672
        %v4199 = vmul.f32 %v4195, %v2676
        %v4200 = vmul.f32 %v4195, %v3752
        %v4201 = vmul.f32 %v4195, %v2680
        %v4202 = vmul.f32 %v4195, %v2684
        %v4203 = vmul.f32 %v4195, %v2688
        %v4204 = vmul.f32 %v4195, %v3756
        %4213 = vrot.lane.b32.xlu0 %v4197, 90
        %v4214 = vpop.permute.xlu0 %4213
        %4215 = vrot.lane.b32.xlu0 %v4198, 90
        %v4216 = vpop.permute.xlu0 %4215
        %4217 = vrot.lane.b32.xlu0 %v4199, 90
        %v4218 = vpop.permute.xlu0 %4217
        %4219 = vrot.lane.b32.xlu0 %v4200, 90
        %v4220 = vpop.permute.xlu0 %4219
        %4221 = vrot.lane.b32.xlu0 %v4201, 90
        %v4222 = vpop.permute.xlu0 %4221
        %4223 = vrot.lane.b32.xlu0 %v4202, 90
        %v4224 = vpop.permute.xlu0 %4223
        %4225 = vrot.lane.b32.xlu0 %v4203, 90
        %v4226 = vpop.permute.xlu0 %4225
        %4227 = vrot.lane.b32.xlu0 %v4204, 90
        %v4228 = vpop.permute.xlu0 %4227
        %v4229 = vsel %vm2319, %v4214, %v4216
        %v4230 = vsel %vm2319, %v4216, %v4218
        %v4231 = vsel %vm2319, %v4218, %v4220
        %v4232 = vsel %vm2319, %v4222, %v4224
        %v4233 = vsel %vm2319, %v4224, %v4226
        %v4234 = vsel %vm2319, %v4226, %v4228
        %v4241 = vadd.f32 %v4187, %v4229
        %v4242 = vadd.f32 %v4188, %v4230
        %v4243 = vadd.f32 %v4189, %v4231
        %v4244 = vadd.f32 %v4190, %v4232
        %v4245 = vadd.f32 %v4191, %v4233
        %v4246 = vadd.f32 %v4192, %v4234
        %4247 = vset.pattern.permute.xlu0 35
        %4248 = vperm.xlu0 %4247, %v278
        %v4249 = vpop.permute.xlu0 %4248
        %v4251 = vmul.f32 %v4249, %v2708
        %v4252 = vmul.f32 %v4249, %v2712
        %v4253 = vmul.f32 %v4249, %v2716
        %v4254 = vmul.f32 %v4249, %v3814
        %v4255 = vmul.f32 %v4249, %v2720
        %v4256 = vmul.f32 %v4249, %v2724
        %v4257 = vmul.f32 %v4249, %v2728
        %v4258 = vmul.f32 %v4249, %v3818
        %4267 = vrot.lane.b32.xlu0 %v4251, 90
        %v4268 = vpop.permute.xlu0 %4267
        %4269 = vrot.lane.b32.xlu0 %v4252, 90
        %v4270 = vpop.permute.xlu0 %4269
        %4271 = vrot.lane.b32.xlu0 %v4253, 90
        %v4272 = vpop.permute.xlu0 %4271
        %4273 = vrot.lane.b32.xlu0 %v4254, 90
        %v4274 = vpop.permute.xlu0 %4273
        %4275 = vrot.lane.b32.xlu0 %v4255, 90
        %v4276 = vpop.permute.xlu0 %4275
        %4277 = vrot.lane.b32.xlu0 %v4256, 90
        %v4278 = vpop.permute.xlu0 %4277
        %4279 = vrot.lane.b32.xlu0 %v4257, 90
        %v4280 = vpop.permute.xlu0 %4279
        %4281 = vrot.lane.b32.xlu0 %v4258, 90
        %v4282 = vpop.permute.xlu0 %4281
        %v4283 = vsel %vm2319, %v4268, %v4270
        %v4284 = vsel %vm2319, %v4270, %v4272
        %v4285 = vsel %vm2319, %v4272, %v4274
        %v4286 = vsel %vm2319, %v4276, %v4278
        %v4287 = vsel %vm2319, %v4278, %v4280
        %v4288 = vsel %vm2319, %v4280, %v4282
        %v4295 = vadd.f32 %v4241, %v4283
        %v4296 = vadd.f32 %v4242, %v4284
        %v4297 = vadd.f32 %v4243, %v4285
        %v4298 = vadd.f32 %v4244, %v4286
        %v4299 = vadd.f32 %v4245, %v4287
        %v4300 = vadd.f32 %v4246, %v4288
        %v4301 = vld [vmem:[%s4] sm:$0xf]
        %4303 = vset.pattern.permute.xlu0 0
        %4304 = vperm.xlu0 %4303, %v4301
        %v4305 = vpop.permute.xlu0 %4304
        %v4307 = vadd.f32 %v4295, %v4305
        %v4308 = vadd.f32 %v4296, %v4305
        %v4309 = vadd.f32 %v4297, %v4305
        %v4310 = vadd.f32 %v4298, %v4305
        %v4311 = vadd.f32 %v4299, %v4305
        %v4312 = vadd.f32 %v4300, %v4305
        %v4313 = vcombine.high %v273, %v273
        %v4314 = vcombine.high %v274, %v274
        %v4315 = vcombine.high %v275, %v275
        %v4316 = vcombine.high %v276, %v276
        %4317 = vrot.lane.b32.xlu0 %v273, 90
        %v4318 = vpop.permute.xlu0 %4317
        %4319 = vrot.lane.b32.xlu0 %v4313, 90
        %v4320 = vpop.permute.xlu0 %4319
        %4321 = vrot.lane.b32.xlu0 %v274, 90
        %v4322 = vpop.permute.xlu0 %4321
        %4323 = vrot.lane.b32.xlu0 %v4314, 90
        %v4324 = vpop.permute.xlu0 %4323
        %4325 = vrot.lane.b32.xlu0 %v275, 90
        %v4326 = vpop.permute.xlu0 %4325
        %4327 = vrot.lane.b32.xlu0 %v4315, 90
        %v4328 = vpop.permute.xlu0 %4327
        %4329 = vrot.lane.b32.xlu0 %v276, 90
        %v4330 = vpop.permute.xlu0 %4329
        %4331 = vrot.lane.b32.xlu0 %v4316, 90
        %v4332 = vpop.permute.xlu0 %4331
        %v4333 = vsel %vm2319, %v4318, %v4320
        %v4334 = vsel %vm2319, %v4320, %v4322
        %v4335 = vsel %vm2319, %v4322, %v4324
        %v4336 = vsel %vm2319, %v4326, %v4328
        %v4337 = vsel %vm2319, %v4328, %v4330
        %v4338 = vsel %vm2319, %v4330, %v4332
        %v4345 = vadd.f32 %v4307, %v4333
        %v4346 = vadd.f32 %v4308, %v4334
        %v4347 = vadd.f32 %v4309, %v4335
        %v4348 = vadd.f32 %v4310, %v4336
        %v4349 = vadd.f32 %v4311, %v4337
        %v4350 = vadd.f32 %v4312, %v4338
        %v4351 = vmax.f32 %v4345, 0.0
        %v4352 = vmax.f32 %v4346, 0.0
        %v4353 = vmax.f32 %v4347, 0.0
        %v4354 = vmax.f32 %v4348, 0.0
        %v4355 = vmax.f32 %v4349, 0.0
        %v4356 = vmax.f32 %v4350, 0.0
        %v4363 = vcombine.low %v4351, %v4352
        %v4364 = vcombine.low %v4354, %v4355
        %4365 = vrot.lane.b32.xlu0 %v4363, 94
        %v4366 = vpop.permute.xlu0 %4365
        %4367 = vrot.lane.b32.xlu0 %v4353, 94
        %v4368 = vpop.permute.xlu0 %4367
        %4369 = vrot.lane.b32.xlu0 %v4364, 94
        %v4370 = vpop.permute.xlu0 %4369
        %4371 = vrot.lane.b32.xlu0 %v4356, 94
        %v4372 = vpop.permute.xlu0 %4371
        %v4373 = vrot.slane %v4366, 4
        %v4374 = vrot.slane %v4368, 4
        %v4375 = vrot.slane %v4370, 4
        %v4376 = vrot.slane %v4372, 4
        %vm4377 = vcmask 1043456
        %v4378 = vsel %vm4377, %v4373, %v4374
        %vm4379 = vcmask 769024
        %v4380 = vsel %vm4379, %v4366, %v4378
        %v4381 = vsel %vm4377, %v4375, %v4376
        %v4382 = vsel %vm4379, %v4370, %v4381
        %4387 = vst [vmem:[%s270] sm:$0xff] %v4380
        %vm4388 = vcmask 551936
        %4389 = vst.msk [vmem:[%s270 + $0x8] sm:$0xf] %vm4388, %v4368
        %4390 = vst [vmem:[%s270 + $0xc] sm:$0xff] %v4382
        %4391 = vst.msk [vmem:[%s270 + $0x14] sm:$0xf] %vm4388, %v4372
        %s4392 = sand.u32 %s162, 1
        %s4393 = scalar_lea.sflag [#allocation4], %s4392
        %s4394 = sand.u32 %s162, 1
        %s4395 = smul.addr %s4394, 24
        %s4396 = scalar_lea.vmem [#allocation5], %s4395
        // Predicated region
        $region49: #{tpu_custom_call.1} parent=43 // pred_check
          %p4397 = pneg %p172
        $region50: #{tpu_custom_call.1} parent=43 // pred_check_branch
          %4399 = sbr.rel (%p4397) target = $region52
        $region51: #{tpu_custom_call.1} parent=43 // pred_region
          %s4400 = smul.u32 2, %s23
          %s4402 = ssub.s32 384, 384
          %4403 = vsyncadd %s4393, %s4402
          %s4404 = smul.addr %s4400, 3
          %s4405 = smul.addr %s4404, 64
          %s4406 = scalar_lea.hbm %s6, %s4405
          %s4407 = sshll.u32 %s4396, 4
          %s4408 = int_to_ptr.vmem [resolvable:$true] %s4407
          %4413 = dma.vmem_to_hbm [thread:$0]  %s4408, 384, %s4406, %s4393, 192, 192, 12
        $region52: #{tpu_custom_call.1} parent=43 // pred_fallthru
          _
      $region44: #{tpu_custom_call.1} parent=5 // pred_fallthru
        _
      %p4414 = scmp.le.s32.totalorder 2, %s18
      // Predicated region
      $region53: #{tpu_custom_call.1} parent=5 // pred_check
        %p4415 = pneg %p4414
      $region54: #{tpu_custom_call.1} parent=5 // pred_check_branch
        %4417 = sbr.rel (%p4415) target = $region56
      $region55: #{tpu_custom_call.1} parent=5 // pred_region
        %s4418 = ssub.s32 %s18, 2
        // Predicated region
        $region57: #{tpu_custom_call.1} parent=55 // pred_check
          %p4419 = pneg %p178
        $region58: #{tpu_custom_call.1} parent=55 // pred_check_branch
          %4421 = sbr.rel (%p4419) target = $region60
        $region59: #{tpu_custom_call.1} parent=55 // pred_region
          %s4422 = sand.u32 %s163, 1
          %s4423 = scalar_lea.sflag [#allocation4], %s4422
          %s4424 = sand.u32 %s163, 1
          %s4425 = smul.addr %s4424, 24
          %s4426 = scalar_lea.vmem [#allocation5], %s4425
          %4427 = dma.done %s4423, 384
        $region60: #{tpu_custom_call.1} parent=55 // pred_fallthru
          _
      $region56: #{tpu_custom_call.1} parent=5 // pred_fallthru
        _
    $region6: #{tpu_custom_call.1} parent=1 // loop_footer
      %s22 = sadd.s32 1, %s18
    $region7: #{tpu_custom_call.1} parent=1 // loop_footer_branch
      %17 = sbr.rel target = $region3
    $region8: #{tpu_custom_call.1} parent=1 // loop_exit
      _
    %4428 = vsyncpa [#allocation3], 1
    %s4429 = scalar_lea.sflag [#allocation3], 1
    %4430 = vsyncpa %s4429, 1
    %4431 = vsyncpa [#allocation4], 1
    %s4432 = scalar_lea.sflag [#allocation4], 1
    %4433 = vsyncpa %s4432, 1

</llo_original>
